<compile_context>
chip_gen: v7x
topology: tpu7x:2x2x1
jax: 0.10.0
libtpu: 0.0.40
codegen_flags: <defaults>
</compile_context>

<pallas_src>
import jax
import jax.numpy as jnp
from jax import lax
from jax.experimental import pallas as pl
from jax.experimental.pallas import tpu as pltpu


# ------------------------------ fused kernel ---------------------------------
def _tte_lstm_kernel(x_ref, lm1_ref,
                     wih0_ref, whh0_ref, b0_ref,
                     wih1_ref, whh1_ref, b1_ref,
                     wd1_ref, bd1_ref, wd2_ref, bd2_ref, wd3_ref, bd3_ref,
                     o_ref,
                     xp_ref, h0a_ref):
    T, Bt, D = x_ref.shape
    H = whh0_ref.shape[0]                 # whh is (H, 4H)
    mm_dtype = wih0_ref.dtype             # bf16 in production; f32 for strict check

    # ---- layer-0 input projection hoisted out of the recurrence --------------
    # One fat (T*Bt, D) @ (D, 4H) matmul; bias folded in once (no per-step add).
    x_flat = x_ref[...].reshape(T * Bt, D).astype(mm_dtype)
    xp0 = jnp.dot(x_flat, wih0_ref[...], preferred_element_type=jnp.float32)
    xp_ref[...] = (xp0 + b0_ref[...]).reshape(T, Bt, 4 * H)

    whh0 = whh0_ref[...]
    whh1 = whh1_ref[...]
    lm1 = lm1_ref[...]                    # (Bt, 1) int32 == lengths - 1

    def gates_to_hc(g, c):
        # Gate column order (host-permuted): [i | f | o | g]
        s = jax.nn.sigmoid(g[:, :3 * H])  # one contiguous EUP slab (f32)
        gg = jnp.tanh(g[:, 3 * H:])
        c_new = s[:, H:2 * H] * c + s[:, :H] * gg
        h_new = s[:, 2 * H:3 * H] * jnp.tanh(c_new)
        return h_new, c_new

    z = jnp.zeros((Bt, H), jnp.float32)

    # ---- layer 0 recurrence: per-step work is only h @ W_hh + gate math ------
    def body0(t, carry):
        h, c = carry
        g = xp_ref[t] + jnp.dot(h.astype(mm_dtype), whh0,
                                preferred_element_type=jnp.float32)
        h, c = gates_to_hc(g, c)
        h0a_ref[t] = h                    # stash layer-0 output for layer-1 proj
        return h, c

    lax.fori_loop(0, T, body0, (z, z), unroll=True)

    # ---- layer-1 input projection hoisted (reuses the xp scratch) ------------
    h0_flat = h0a_ref[...].reshape(T * Bt, H).astype(mm_dtype)
    xp1 = jnp.dot(h0_flat, wih1_ref[...], preferred_element_type=jnp.float32)
    xp_ref[...] = (xp1 + b1_ref[...]).reshape(T, Bt, 4 * H)

    # ---- layer 1 recurrence + in-loop selection of h at t == lengths-1 -------
    def body1(t, carry):
        h, c, last = carry
        g = xp_ref[t] + jnp.dot(h.astype(mm_dtype), whh1,
                                preferred_element_type=jnp.float32)
        h, c = gates_to_hc(g, c)
        last = jnp.where(lm1 == t, h, last)
        return h, c, last

    _, _, last = lax.fori_loop(0, T, body1, (z, z, z), unroll=True)

    # ---- decoder MLP: Linear -> ReLU -> Linear -> ReLU -> Linear(H,1) --------
    a1 = jnp.maximum(
        jnp.dot(last.astype(mm_dtype), wd1_ref[...],
                preferred_element_type=jnp.float32) + bd1_ref[...], 0.0)
    a2 = jnp.maximum(
        jnp.dot(a1.astype(mm_dtype), wd2_ref[...],
                preferred_element_type=jnp.float32) + bd2_ref[...], 0.0)
    # degenerate (H -> 1) matmul as VPU multiply + lane reduce
    y = jnp.sum(a2 * wd3_ref[...], axis=-1, keepdims=True) + bd3_ref[...]
    o_ref[...] = y.astype(o_ref.dtype)


# ------------------------------- host wrapper ---------------------------------
def tte_lstm_forward(params, x_btd, lengths, *, matmul_dtype=jnp.bfloat16,
                     batch_tile=None):
    """x_btd: (B, T, D) batch-first (as in the PyTorch module).
    lengths: (B,) int32, sorted descending (pack_padded_sequence contract), >= 1."""
    B, T, D = x_btd.shape
    w_ih0, w_hh0, b_ih0, b_hh0 = params["lstm0"]
    w_ih1, w_hh1, b_ih1, b_hh1 = params["lstm1"]
    H = w_hh0.shape[1]

    if batch_tile is None:
        batch_tile = B if B <= 8 else 8   # v7x: keep per-program tile modest (64MiB VMEM)
    assert B % batch_tile == 0 and (batch_tile == B or batch_tile % 8 == 0)

    # PyTorch gate order [i, f, g, o] -> kernel order [i, f, o, g]
    perm = jnp.concatenate([jnp.arange(0, 2 * H),
                            jnp.arange(3 * H, 4 * H),
                            jnp.arange(2 * H, 3 * H)])

    def prep(w_ih, w_hh, b_ih, b_hh):
        wi = w_ih.T[:, perm].astype(matmul_dtype)            # (in, 4H)
        wh = w_hh.T[:, perm].astype(matmul_dtype)            # (H, 4H)
        b = (b_ih + b_hh)[perm].reshape(1, 4 * H).astype(jnp.float32)
        return wi, wh, b

    wi0, wh0, b0 = prep(w_ih0, w_hh0, b_ih0, b_hh0)
    wi1, wh1, b1 = prep(w_ih1, w_hh1, b_ih1, b_hh1)

    wd1, bd1, wd2, bd2, wd3, bd3 = params["decoder"]         # PyTorch (out, in)
    wd1 = wd1.T.astype(matmul_dtype)
    wd2 = wd2.T.astype(matmul_dtype)
    bd1 = bd1.reshape(1, -1).astype(jnp.float32)
    bd2 = bd2.reshape(1, -1).astype(jnp.float32)
    wd3 = wd3.reshape(1, -1).astype(jnp.float32)              # used as VPU multiplier
    bd3 = bd3.reshape(1, 1).astype(jnp.float32)

    x_tbd = jnp.transpose(x_btd, (1, 0, 2))                   # time-major for the kernel
    lm1 = (lengths.astype(jnp.int32) - 1).reshape(B, 1)       # lengths must be >= 1

    full = lambda shape: pl.BlockSpec(shape, lambda b: (0,) * len(shape))
    in_specs = [
        pl.BlockSpec((T, batch_tile, D), lambda b: (0, b, 0)),   # x (time-major)
        pl.BlockSpec((batch_tile, 1), lambda b: (b, 0)),         # lengths-1
        full(wi0.shape), full(wh0.shape), full(b0.shape),
        full(wi1.shape), full(wh1.shape), full(b1.shape),
        full(wd1.shape), full(bd1.shape), full(wd2.shape), full(bd2.shape),
        full(wd3.shape), full(bd3.shape),
    ]

    return pl.pallas_call(
        _tte_lstm_kernel,
        out_shape=jax.ShapeDtypeStruct((B, 1), x_btd.dtype),
        grid_spec=pltpu.PrefetchScalarGridSpec(
            num_scalar_prefetch=0,
            grid=(B // batch_tile,),
            in_specs=in_specs,
            out_specs=pl.BlockSpec((batch_tile, 1), lambda b: (b, 0)),
            scratch_shapes=[
                pltpu.VMEM((T, batch_tile, 4 * H), jnp.float32),  # hoisted x-projections
                pltpu.VMEM((T, batch_tile, H), jnp.float32),      # layer-0 outputs
            ]),
        compiler_params=pltpu.CompilerParams(
            dimension_semantics=("parallel",)),
    )(x_tbd, lm1, wi0, wh0, b0, wi1, wh1, b1,
      wd1, bd1, wd2, bd2, wd3, bd3)


# ------------------------------ param init -----------------------------------
def init_params(key, emb_dim, hidden):
    ks = jax.random.split(key, 14)
    scale = 1.0 / jnp.sqrt(hidden)

    def u(k, shape):
        return jax.random.uniform(k, shape, jnp.float32, -scale, scale)

    lstm0 = (u(ks[0], (4 * hidden, emb_dim)), u(ks[1], (4 * hidden, hidden)),
             u(ks[2], (4 * hidden,)), u(ks[3], (4 * hidden,)))
    lstm1 = (u(ks[4], (4 * hidden, hidden)), u(ks[5], (4 * hidden, hidden)),
             u(ks[6], (4 * hidden,)), u(ks[7], (4 * hidden,)))
    dec = (u(ks[8], (2 * hidden, hidden)), u(ks[9], (2 * hidden,)),
           u(ks[10], (hidden, 2 * hidden)), u(ks[11], (hidden,)),
           u(ks[12], (1, hidden)), u(ks[13], (1,)))
    return {"lstm0": lstm0, "lstm1": lstm1, "decoder": dec}


# ------------------------- pure-JAX reference (check) -------------------------
_HP = jax.lax.Precision.HIGHEST


def _lstm_layer_ref(x_tbd, w_ih, w_hh, b_ih, b_hh):
    H = w_hh.shape[1]
    B = x_tbd.shape[1]

    def step(carry, x_t):
        h, c = carry
        gates = (jnp.dot(x_t, w_ih.T, precision=_HP)
                 + jnp.dot(h, w_hh.T, precision=_HP) + b_ih + b_hh)
        i = jax.nn.sigmoid(gates[:, :H])
        f = jax.nn.sigmoid(gates[:, H:2 * H])
        g = jnp.tanh(gates[:, 2 * H:3 * H])
        o = jax.nn.sigmoid(gates[:, 3 * H:])
        c = f * c + i * g
        h = o * jnp.tanh(c)
        return (h, c), h

    init = (jnp.zeros((B, H), jnp.float32), jnp.zeros((B, H), jnp.float32))
    _, hs = jax.lax.scan(step, init, x_tbd)
    return hs


def _forward_ref(params, x_btd, lengths):
    x_tbd = jnp.transpose(x_btd, (1, 0, 2))
    h1 = _lstm_layer_ref(x_tbd, *params["lstm0"])
    h2 = _lstm_layer_ref(h1, *params["lstm1"])
    B = x_btd.shape[0]
    last = h2[lengths - 1, jnp.arange(B), :]
    w1, b1, w2, b2, w3, b3 = params["decoder"]
    a = jnp.maximum(jnp.dot(last, w1.T, precision=_HP) + b1, 0.0)
    a = jnp.maximum(jnp.dot(a, w2.T, precision=_HP) + b2, 0.0)
    return jnp.dot(a, w3.T, precision=_HP) + b3


# ---------------------------------- main --------------------------------------
if __name__ == "__main__":
    B, T, D, H = 8, 8, 32, 32
    key = jax.random.PRNGKey(0)
    kp, kx = jax.random.split(key)
    params = init_params(kp, D, H)
    x = jax.random.normal(kx, (B, T, D), jnp.float32)
    # lengths sorted descending (pack_padded_sequence enforce_sorted contract), >= 1
    lengths = jnp.array([8, 8, 7, 6, 5, 4, 3, 2], dtype=jnp.int32)

    y_ref = jax.block_until_ready(_forward_ref(params, x, lengths))

    # Strict check: f32 matmul operands — tight tolerance catches any gate
    # permutation / bias / selection bug (those show O(1e-1) errors); small slack
    # left for MXU f32 multi-pass rounding vs HIGHEST-precision XLA reference.
    y32 = jax.block_until_ready(
        tte_lstm_forward(params, x, lengths, matmul_dtype=jnp.float32))
    assert y32.shape == (B, 1), y32.shape
    assert jnp.allclose(y32, y_ref, rtol=1e-3, atol=1e-4), (y32, y_ref)

    # Production path: bf16 matmul operands, f32 accumulation & gate math.
    ybf = jax.block_until_ready(tte_lstm_forward(params, x, lengths))
    assert ybf.shape == (B, 1), ybf.shape
    assert jnp.allclose(ybf, y_ref, rtol=2e-2, atol=2e-2), (ybf, y_ref)

    print("KERNEL_OK")
</pallas_src>

<mosaic_0001>
module attributes {stable_mosaic.version = 11 : i64} {
  func.func @_tte_lstm_kernel(%arg0: i32, %arg1: memref<8x8x32xf32, #tpu.memory_space<vmem>>, %arg2: memref<8x1xi32, #tpu.memory_space<vmem>>, %arg3: memref<32x128xf32, #tpu.memory_space<vmem>>, %arg4: memref<32x128xf32, #tpu.memory_space<vmem>>, %arg5: memref<1x128xf32, #tpu.memory_space<vmem>>, %arg6: memref<32x128xf32, #tpu.memory_space<vmem>>, %arg7: memref<32x128xf32, #tpu.memory_space<vmem>>, %arg8: memref<1x128xf32, #tpu.memory_space<vmem>>, %arg9: memref<32x64xf32, #tpu.memory_space<vmem>>, %arg10: memref<1x64xf32, #tpu.memory_space<vmem>>, %arg11: memref<64x32xf32, #tpu.memory_space<vmem>>, %arg12: memref<1x32xf32, #tpu.memory_space<vmem>>, %arg13: memref<1x32xf32, #tpu.memory_space<vmem>>, %arg14: memref<1x1xf32, #tpu.memory_space<vmem>>, %arg15: memref<8x1xf32, #tpu.memory_space<vmem>>, %arg16: memref<8x8x128xf32, #tpu.memory_space<vmem>>, %arg17: memref<8x8x32xf32, #tpu.memory_space<vmem>>) attributes {dimension_semantics = [#tpu.dimension_semantics<parallel>], iteration_bounds = array<i64: 1>, scalar_prefetch = 0 : i64, scratch_operands = 2 : i64, tpu.core_type = #tpu.core_type<tc>, window_params = [{transform_indices = @transform_0, window_bounds = array<i64: 8, 8, 32>}, {transform_indices = @transform_1, window_bounds = array<i64: 8, 1>}, {pipeline_mode = #tpu.pipeline_mode<synchronous>, transform_indices = @transform_2, window_bounds = array<i64: 32, 128>}, {pipeline_mode = #tpu.pipeline_mode<synchronous>, transform_indices = @transform_3, window_bounds = array<i64: 32, 128>}, {pipeline_mode = #tpu.pipeline_mode<synchronous>, transform_indices = @transform_4, window_bounds = array<i64: 1, 128>}, {pipeline_mode = #tpu.pipeline_mode<synchronous>, transform_indices = @transform_5, window_bounds = array<i64: 32, 128>}, {pipeline_mode = #tpu.pipeline_mode<synchronous>, transform_indices = @transform_6, window_bounds = array<i64: 32, 128>}, {pipeline_mode = #tpu.pipeline_mode<synchronous>, transform_indices = @transform_7, window_bounds = array<i64: 1, 128>}, {pipeline_mode = #tpu.pipeline_mode<synchronous>, transform_indices = @transform_8, window_bounds = array<i64: 32, 64>}, {pipeline_mode = #tpu.pipeline_mode<synchronous>, transform_indices = @transform_9, window_bounds = array<i64: 1, 64>}, {pipeline_mode = #tpu.pipeline_mode<synchronous>, transform_indices = @transform_10, window_bounds = array<i64: 64, 32>}, {pipeline_mode = #tpu.pipeline_mode<synchronous>, transform_indices = @transform_11, window_bounds = array<i64: 1, 32>}, {pipeline_mode = #tpu.pipeline_mode<synchronous>, transform_indices = @transform_12, window_bounds = array<i64: 1, 32>}, {pipeline_mode = #tpu.pipeline_mode<synchronous>, transform_indices = @transform_13, window_bounds = array<i64: 1, 1>}, {transform_indices = @transform_14, window_bounds = array<i64: 8, 1>}]} {
    %c0 = arith.constant 0 : index
    %c0_0 = arith.constant 0 : index
    %c0_1 = arith.constant 0 : index
    %0 = vector.load %arg1[%c0, %c0_0, %c0_1] : memref<8x8x32xf32, #tpu.memory_space<vmem>>, vector<8x8x32xf32>
    %1 = vector.shape_cast %0 : vector<8x8x32xf32> to vector<64x32xf32>
    %c0_2 = arith.constant 0 : index
    %c0_3 = arith.constant 0 : index
    %2 = vector.load %arg3[%c0_2, %c0_3] : memref<32x128xf32, #tpu.memory_space<vmem>>, vector<32x128xf32>
    %cst = arith.constant dense<0.000000e+00> : vector<64x128xf32>
    %3 = tpu.matmul %1, %2, %cst {dimension_numbers = #tpu.dot_dimension_numbers<[1], [0], [0], [1], [0, 0, 1, 1], [], []>} : vector<64x32xf32>, vector<32x128xf32>, vector<64x128xf32> -> vector<64x128xf32>
    %c0_4 = arith.constant 0 : index
    %c0_5 = arith.constant 0 : index
    %4 = vector.load %arg5[%c0_4, %c0_5] : memref<1x128xf32, #tpu.memory_space<vmem>>, vector<1x128xf32>
    %5 = vector.broadcast %4 : vector<1x128xf32> to vector<64x128xf32>
    %6 = arith.addf %3, %5 : vector<64x128xf32>
    %7 = vector.shape_cast %6 : vector<64x128xf32> to vector<8x8x128xf32>
    %c0_6 = arith.constant 0 : index
    %c0_7 = arith.constant 0 : index
    %c0_8 = arith.constant 0 : index
    %8 = vector.load %arg16[%c0_6, %c0_7, %c0_8] : memref<8x8x128xf32, #tpu.memory_space<vmem>>, vector<8x8x128xf32>
    tpu.vector_store %arg16[%c0_6, %c0_7, %c0_8], %7 {strides = array<i32>} : memref<8x8x128xf32, #tpu.memory_space<vmem>>, vector<8x8x128xf32>,
    %c0_9 = arith.constant 0 : index
    %c0_10 = arith.constant 0 : index
    %9 = vector.load %arg4[%c0_9, %c0_10] : memref<32x128xf32, #tpu.memory_space<vmem>>, vector<32x128xf32>
    %c0_11 = arith.constant 0 : index
    %c0_12 = arith.constant 0 : index
    %10 = vector.load %arg7[%c0_11, %c0_12] : memref<32x128xf32, #tpu.memory_space<vmem>>, vector<32x128xf32>
    %c0_13 = arith.constant 0 : index
    %c0_14 = arith.constant 0 : index
    %11 = vector.load %arg2[%c0_13, %c0_14] : memref<8x1xi32, #tpu.memory_space<vmem>>, vector<8x1xi32>
    %cst_15 = arith.constant 0.000000e+00 : f32
    %12 = vector.broadcast %cst_15 : f32 to vector<8x32xf32>
    %c0_i32 = arith.constant 0 : i32
    %13 = arith.index_cast %c0_i32 : i32 to index
    %c0_16 = arith.constant 0 : index
    %c0_17 = arith.constant 0 : index
    %14 = vector.load %arg16[%13, %c0_16, %c0_17] : memref<8x8x128xf32, #tpu.memory_space<vmem>>, vector<1x8x128xf32>
    %15 = vector.shape_cast %14 : vector<1x8x128xf32> to vector<8x128xf32>
    %cst_18 = arith.constant dense<0.000000e+00> : vector<8x128xf32>
    %16 = tpu.matmul %12, %9, %cst_18 {dimension_numbers = #tpu.dot_dimension_numbers<[1], [0], [0], [1], [0, 0, 1, 1], [], []>} : vector<8x32xf32>, vector<32x128xf32>, vector<8x128xf32> -> vector<8x128xf32>
    %17 = arith.addf %15, %16 : vector<8x128xf32>
    %18 = vector.extract_strided_slice %17 {offsets = [0, 0], sizes = [8, 96], strides = [1, 1]} : vector<8x128xf32> to vector<8x96xf32>
    %19 = arith.negf %18 : vector<8x96xf32>
    %20 = math.exp %19 : vector<8x96xf32>
    %cst_19 = arith.constant 1.000000e+00 : f32
    %21 = vector.broadcast %cst_19 : f32 to vector<8x96xf32>
    %22 = arith.addf %21, %20 : vector<8x96xf32>
    %23 = arith.divf %21, %22 : vector<8x96xf32>
    %24 = vector.extract_strided_slice %17 {offsets = [0, 96], sizes = [8, 32], strides = [1, 1]} : vector<8x128xf32> to vector<8x32xf32>
    %25 = math.tanh %24 : vector<8x32xf32>
    %26 = vector.extract_strided_slice %23 {offsets = [0, 32], sizes = [8, 32], strides = [1, 1]} : vector<8x96xf32> to vector<8x32xf32>
    %27 = arith.mulf %26, %12 : vector<8x32xf32>
    %28 = vector.extract_strided_slice %23 {offsets = [0, 0], sizes = [8, 32], strides = [1, 1]} : vector<8x96xf32> to vector<8x32xf32>
    %29 = arith.mulf %28, %25 : vector<8x32xf32>
    %30 = arith.addf %27, %29 : vector<8x32xf32>
    %31 = vector.extract_strided_slice %23 {offsets = [0, 64], sizes = [8, 32], strides = [1, 1]} : vector<8x96xf32> to vector<8x32xf32>
    %32 = math.tanh %30 : vector<8x32xf32>
    %33 = arith.mulf %31, %32 : vector<8x32xf32>
    %34 = arith.index_cast %c0_i32 : i32 to index
    %c0_20 = arith.constant 0 : index
    %c0_21 = arith.constant 0 : index
    %35 = vector.load %arg17[%34, %c0_20, %c0_21] : memref<8x8x32xf32, #tpu.memory_space<vmem>>, vector<1x8x32xf32>
    %36 = vector.shape_cast %35 : vector<1x8x32xf32> to vector<8x32xf32>
    %37 = vector.shape_cast %33 : vector<8x32xf32> to vector<1x8x32xf32>
    tpu.vector_store %arg17[%34, %c0_20, %c0_21], %37 {strides = array<i32>} : memref<8x8x32xf32, #tpu.memory_space<vmem>>, vector<1x8x32xf32>,
    %c1_i32 = arith.constant 1 : i32
    %38 = arith.index_cast %c1_i32 : i32 to index
    %c0_22 = arith.constant 0 : index
    %c0_23 = arith.constant 0 : index
    %39 = vector.load %arg16[%38, %c0_22, %c0_23] : memref<8x8x128xf32, #tpu.memory_space<vmem>>, vector<1x8x128xf32>
    %40 = vector.shape_cast %39 : vector<1x8x128xf32> to vector<8x128xf32>
    %cst_24 = arith.constant dense<0.000000e+00> : vector<8x128xf32>
    %41 = tpu.matmul %33, %9, %cst_24 {dimension_numbers = #tpu.dot_dimension_numbers<[1], [0], [0], [1], [0, 0, 1, 1], [], []>} : vector<8x32xf32>, vector<32x128xf32>, vector<8x128xf32> -> vector<8x128xf32>
    %42 = arith.addf %40, %41 : vector<8x128xf32>
    %43 = vector.extract_strided_slice %42 {offsets = [0, 0], sizes = [8, 96], strides = [1, 1]} : vector<8x128xf32> to vector<8x96xf32>
    %44 = arith.negf %43 : vector<8x96xf32>
    %45 = math.exp %44 : vector<8x96xf32>
    %cst_25 = arith.constant 1.000000e+00 : f32
    %46 = vector.broadcast %cst_25 : f32 to vector<8x96xf32>
    %47 = arith.addf %46, %45 : vector<8x96xf32>
    %48 = arith.divf %46, %47 : vector<8x96xf32>
    %49 = vector.extract_strided_slice %42 {offsets = [0, 96], sizes = [8, 32], strides = [1, 1]} : vector<8x128xf32> to vector<8x32xf32>
    %50 = math.tanh %49 : vector<8x32xf32>
    %51 = vector.extract_strided_slice %48 {offsets = [0, 32], sizes = [8, 32], strides = [1, 1]} : vector<8x96xf32> to vector<8x32xf32>
    %52 = arith.mulf %51, %30 : vector<8x32xf32>
    %53 = vector.extract_strided_slice %48 {offsets = [0, 0], sizes = [8, 32], strides = [1, 1]} : vector<8x96xf32> to vector<8x32xf32>
    %54 = arith.mulf %53, %50 : vector<8x32xf32>
    %55 = arith.addf %52, %54 : vector<8x32xf32>
    %56 = vector.extract_strided_slice %48 {offsets = [0, 64], sizes = [8, 32], strides = [1, 1]} : vector<8x96xf32> to vector<8x32xf32>
    %57 = math.tanh %55 : vector<8x32xf32>
    %58 = arith.mulf %56, %57 : vector<8x32xf32>
    %59 = arith.index_cast %c1_i32 : i32 to index
    %c0_26 = arith.constant 0 : index
    %c0_27 = arith.constant 0 : index
    %60 = vector.load %arg17[%59, %c0_26, %c0_27] : memref<8x8x32xf32, #tpu.memory_space<vmem>>, vector<1x8x32xf32>
    %61 = vector.shape_cast %60 : vector<1x8x32xf32> to vector<8x32xf32>
    %62 = vector.shape_cast %58 : vector<8x32xf32> to vector<1x8x32xf32>
    tpu.vector_store %arg17[%59, %c0_26, %c0_27], %62 {strides = array<i32>} : memref<8x8x32xf32, #tpu.memory_space<vmem>>, vector<1x8x32xf32>,
    %c2_i32 = arith.constant 2 : i32
    %63 = arith.index_cast %c2_i32 : i32 to index
    %c0_28 = arith.constant 0 : index
    %c0_29 = arith.constant 0 : index
    %64 = vector.load %arg16[%63, %c0_28, %c0_29] : memref<8x8x128xf32, #tpu.memory_space<vmem>>, vector<1x8x128xf32>
    %65 = vector.shape_cast %64 : vector<1x8x128xf32> to vector<8x128xf32>
    %cst_30 = arith.constant dense<0.000000e+00> : vector<8x128xf32>
    %66 = tpu.matmul %58, %9, %cst_30 {dimension_numbers = #tpu.dot_dimension_numbers<[1], [0], [0], [1], [0, 0, 1, 1], [], []>} : vector<8x32xf32>, vector<32x128xf32>, vector<8x128xf32> -> vector<8x128xf32>
    %67 = arith.addf %65, %66 : vector<8x128xf32>
    %68 = vector.extract_strided_slice %67 {offsets = [0, 0], sizes = [8, 96], strides = [1, 1]} : vector<8x128xf32> to vector<8x96xf32>
    %69 = arith.negf %68 : vector<8x96xf32>
    %70 = math.exp %69 : vector<8x96xf32>
    %cst_31 = arith.constant 1.000000e+00 : f32
    %71 = vector.broadcast %cst_31 : f32 to vector<8x96xf32>
    %72 = arith.addf %71, %70 : vector<8x96xf32>
    %73 = arith.divf %71, %72 : vector<8x96xf32>
    %74 = vector.extract_strided_slice %67 {offsets = [0, 96], sizes = [8, 32], strides = [1, 1]} : vector<8x128xf32> to vector<8x32xf32>
    %75 = math.tanh %74 : vector<8x32xf32>
    %76 = vector.extract_strided_slice %73 {offsets = [0, 32], sizes = [8, 32], strides = [1, 1]} : vector<8x96xf32> to vector<8x32xf32>
    %77 = arith.mulf %76, %55 : vector<8x32xf32>
    %78 = vector.extract_strided_slice %73 {offsets = [0, 0], sizes = [8, 32], strides = [1, 1]} : vector<8x96xf32> to vector<8x32xf32>
    %79 = arith.mulf %78, %75 : vector<8x32xf32>
    %80 = arith.addf %77, %79 : vector<8x32xf32>
    %81 = vector.extract_strided_slice %73 {offsets = [0, 64], sizes = [8, 32], strides = [1, 1]} : vector<8x96xf32> to vector<8x32xf32>
    %82 = math.tanh %80 : vector<8x32xf32>
    %83 = arith.mulf %81, %82 : vector<8x32xf32>
    %84 = arith.index_cast %c2_i32 : i32 to index
    %c0_32 = arith.constant 0 : index
    %c0_33 = arith.constant 0 : index
    %85 = vector.load %arg17[%84, %c0_32, %c0_33] : memref<8x8x32xf32, #tpu.memory_space<vmem>>, vector<1x8x32xf32>
    %86 = vector.shape_cast %85 : vector<1x8x32xf32> to vector<8x32xf32>
    %87 = vector.shape_cast %83 : vector<8x32xf32> to vector<1x8x32xf32>
    tpu.vector_store %arg17[%84, %c0_32, %c0_33], %87 {strides = array<i32>} : memref<8x8x32xf32, #tpu.memory_space<vmem>>, vector<1x8x32xf32>,
    %c3_i32 = arith.constant 3 : i32
    %88 = arith.index_cast %c3_i32 : i32 to index
    %c0_34 = arith.constant 0 : index
    %c0_35 = arith.constant 0 : index
    %89 = vector.load %arg16[%88, %c0_34, %c0_35] : memref<8x8x128xf32, #tpu.memory_space<vmem>>, vector<1x8x128xf32>
    %90 = vector.shape_cast %89 : vector<1x8x128xf32> to vector<8x128xf32>
    %cst_36 = arith.constant dense<0.000000e+00> : vector<8x128xf32>
    %91 = tpu.matmul %83, %9, %cst_36 {dimension_numbers = #tpu.dot_dimension_numbers<[1], [0], [0], [1], [0, 0, 1, 1], [], []>} : vector<8x32xf32>, vector<32x128xf32>, vector<8x128xf32> -> vector<8x128xf32>
    %92 = arith.addf %90, %91 : vector<8x128xf32>
    %93 = vector.extract_strided_slice %92 {offsets = [0, 0], sizes = [8, 96], strides = [1, 1]} : vector<8x128xf32> to vector<8x96xf32>
    %94 = arith.negf %93 : vector<8x96xf32>
    %95 = math.exp %94 : vector<8x96xf32>
    %cst_37 = arith.constant 1.000000e+00 : f32
    %96 = vector.broadcast %cst_37 : f32 to vector<8x96xf32>
    %97 = arith.addf %96, %95 : vector<8x96xf32>
    %98 = arith.divf %96, %97 : vector<8x96xf32>
    %99 = vector.extract_strided_slice %92 {offsets = [0, 96], sizes = [8, 32], strides = [1, 1]} : vector<8x128xf32> to vector<8x32xf32>
    %100 = math.tanh %99 : vector<8x32xf32>
    %101 = vector.extract_strided_slice %98 {offsets = [0, 32], sizes = [8, 32], strides = [1, 1]} : vector<8x96xf32> to vector<8x32xf32>
    %102 = arith.mulf %101, %80 : vector<8x32xf32>
    %103 = vector.extract_strided_slice %98 {offsets = [0, 0], sizes = [8, 32], strides = [1, 1]} : vector<8x96xf32> to vector<8x32xf32>
    %104 = arith.mulf %103, %100 : vector<8x32xf32>
    %105 = arith.addf %102, %104 : vector<8x32xf32>
    %106 = vector.extract_strided_slice %98 {offsets = [0, 64], sizes = [8, 32], strides = [1, 1]} : vector<8x96xf32> to vector<8x32xf32>
    %107 = math.tanh %105 : vector<8x32xf32>
    %108 = arith.mulf %106, %107 : vector<8x32xf32>
    %109 = arith.index_cast %c3_i32 : i32 to index
    %c0_38 = arith.constant 0 : index
    %c0_39 = arith.constant 0 : index
    %110 = vector.load %arg17[%109, %c0_38, %c0_39] : memref<8x8x32xf32, #tpu.memory_space<vmem>>, vector<1x8x32xf32>
    %111 = vector.shape_cast %110 : vector<1x8x32xf32> to vector<8x32xf32>
    %112 = vector.shape_cast %108 : vector<8x32xf32> to vector<1x8x32xf32>
    tpu.vector_store %arg17[%109, %c0_38, %c0_39], %112 {strides = array<i32>} : memref<8x8x32xf32, #tpu.memory_space<vmem>>, vector<1x8x32xf32>,
    %c4_i32 = arith.constant 4 : i32
    %113 = arith.index_cast %c4_i32 : i32 to index
    %c0_40 = arith.constant 0 : index
    %c0_41 = arith.constant 0 : index
    %114 = vector.load %arg16[%113, %c0_40, %c0_41] : memref<8x8x128xf32, #tpu.memory_space<vmem>>, vector<1x8x128xf32>
    %115 = vector.shape_cast %114 : vector<1x8x128xf32> to vector<8x128xf32>
    %cst_42 = arith.constant dense<0.000000e+00> : vector<8x128xf32>
    %116 = tpu.matmul %108, %9, %cst_42 {dimension_numbers = #tpu.dot_dimension_numbers<[1], [0], [0], [1], [0, 0, 1, 1], [], []>} : vector<8x32xf32>, vector<32x128xf32>, vector<8x128xf32> -> vector<8x128xf32>
    %117 = arith.addf %115, %116 : vector<8x128xf32>
    %118 = vector.extract_strided_slice %117 {offsets = [0, 0], sizes = [8, 96], strides = [1, 1]} : vector<8x128xf32> to vector<8x96xf32>
    %119 = arith.negf %118 : vector<8x96xf32>
    %120 = math.exp %119 : vector<8x96xf32>
    %cst_43 = arith.constant 1.000000e+00 : f32
    %121 = vector.broadcast %cst_43 : f32 to vector<8x96xf32>
    %122 = arith.addf %121, %120 : vector<8x96xf32>
    %123 = arith.divf %121, %122 : vector<8x96xf32>
    %124 = vector.extract_strided_slice %117 {offsets = [0, 96], sizes = [8, 32], strides = [1, 1]} : vector<8x128xf32> to vector<8x32xf32>
    %125 = math.tanh %124 : vector<8x32xf32>
    %126 = vector.extract_strided_slice %123 {offsets = [0, 32], sizes = [8, 32], strides = [1, 1]} : vector<8x96xf32> to vector<8x32xf32>
    %127 = arith.mulf %126, %105 : vector<8x32xf32>
    %128 = vector.extract_strided_slice %123 {offsets = [0, 0], sizes = [8, 32], strides = [1, 1]} : vector<8x96xf32> to vector<8x32xf32>
    %129 = arith.mulf %128, %125 : vector<8x32xf32>
    %130 = arith.addf %127, %129 : vector<8x32xf32>
    %131 = vector.extract_strided_slice %123 {offsets = [0, 64], sizes = [8, 32], strides = [1, 1]} : vector<8x96xf32> to vector<8x32xf32>
    %132 = math.tanh %130 : vector<8x32xf32>
    %133 = arith.mulf %131, %132 : vector<8x32xf32>
    %134 = arith.index_cast %c4_i32 : i32 to index
    %c0_44 = arith.constant 0 : index
    %c0_45 = arith.constant 0 : index
    %135 = vector.load %arg17[%134, %c0_44, %c0_45] : memref<8x8x32xf32, #tpu.memory_space<vmem>>, vector<1x8x32xf32>
    %136 = vector.shape_cast %135 : vector<1x8x32xf32> to vector<8x32xf32>
    %137 = vector.shape_cast %133 : vector<8x32xf32> to vector<1x8x32xf32>
    tpu.vector_store %arg17[%134, %c0_44, %c0_45], %137 {strides = array<i32>} : memref<8x8x32xf32, #tpu.memory_space<vmem>>, vector<1x8x32xf32>,
    %c5_i32 = arith.constant 5 : i32
    %138 = arith.index_cast %c5_i32 : i32 to index
    %c0_46 = arith.constant 0 : index
    %c0_47 = arith.constant 0 : index
    %139 = vector.load %arg16[%138, %c0_46, %c0_47] : memref<8x8x128xf32, #tpu.memory_space<vmem>>, vector<1x8x128xf32>
    %140 = vector.shape_cast %139 : vector<1x8x128xf32> to vector<8x128xf32>
    %cst_48 = arith.constant dense<0.000000e+00> : vector<8x128xf32>
    %141 = tpu.matmul %133, %9, %cst_48 {dimension_numbers = #tpu.dot_dimension_numbers<[1], [0], [0], [1], [0, 0, 1, 1], [], []>} : vector<8x32xf32>, vector<32x128xf32>, vector<8x128xf32> -> vector<8x128xf32>
    %142 = arith.addf %140, %141 : vector<8x128xf32>
    %143 = vector.extract_strided_slice %142 {offsets = [0, 0], sizes = [8, 96], strides = [1, 1]} : vector<8x128xf32> to vector<8x96xf32>
    %144 = arith.negf %143 : vector<8x96xf32>
    %145 = math.exp %144 : vector<8x96xf32>
    %cst_49 = arith.constant 1.000000e+00 : f32
    %146 = vector.broadcast %cst_49 : f32 to vector<8x96xf32>
    %147 = arith.addf %146, %145 : vector<8x96xf32>
    %148 = arith.divf %146, %147 : vector<8x96xf32>
    %149 = vector.extract_strided_slice %142 {offsets = [0, 96], sizes = [8, 32], strides = [1, 1]} : vector<8x128xf32> to vector<8x32xf32>
    %150 = math.tanh %149 : vector<8x32xf32>
    %151 = vector.extract_strided_slice %148 {offsets = [0, 32], sizes = [8, 32], strides = [1, 1]} : vector<8x96xf32> to vector<8x32xf32>
    %152 = arith.mulf %151, %130 : vector<8x32xf32>
    %153 = vector.extract_strided_slice %148 {offsets = [0, 0], sizes = [8, 32], strides = [1, 1]} : vector<8x96xf32> to vector<8x32xf32>
    %154 = arith.mulf %153, %150 : vector<8x32xf32>
    %155 = arith.addf %152, %154 : vector<8x32xf32>
    %156 = vector.extract_strided_slice %148 {offsets = [0, 64], sizes = [8, 32], strides = [1, 1]} : vector<8x96xf32> to vector<8x32xf32>
    %157 = math.tanh %155 : vector<8x32xf32>
    %158 = arith.mulf %156, %157 : vector<8x32xf32>
    %159 = arith.index_cast %c5_i32 : i32 to index
    %c0_50 = arith.constant 0 : index
    %c0_51 = arith.constant 0 : index
    %160 = vector.load %arg17[%159, %c0_50, %c0_51] : memref<8x8x32xf32, #tpu.memory_space<vmem>>, vector<1x8x32xf32>
    %161 = vector.shape_cast %160 : vector<1x8x32xf32> to vector<8x32xf32>
    %162 = vector.shape_cast %158 : vector<8x32xf32> to vector<1x8x32xf32>
    tpu.vector_store %arg17[%159, %c0_50, %c0_51], %162 {strides = array<i32>} : memref<8x8x32xf32, #tpu.memory_space<vmem>>, vector<1x8x32xf32>,
    %c6_i32 = arith.constant 6 : i32
    %163 = arith.index_cast %c6_i32 : i32 to index
    %c0_52 = arith.constant 0 : index
    %c0_53 = arith.constant 0 : index
    %164 = vector.load %arg16[%163, %c0_52, %c0_53] : memref<8x8x128xf32, #tpu.memory_space<vmem>>, vector<1x8x128xf32>
    %165 = vector.shape_cast %164 : vector<1x8x128xf32> to vector<8x128xf32>
    %cst_54 = arith.constant dense<0.000000e+00> : vector<8x128xf32>
    %166 = tpu.matmul %158, %9, %cst_54 {dimension_numbers = #tpu.dot_dimension_numbers<[1], [0], [0], [1], [0, 0, 1, 1], [], []>} : vector<8x32xf32>, vector<32x128xf32>, vector<8x128xf32> -> vector<8x128xf32>
    %167 = arith.addf %165, %166 : vector<8x128xf32>
    %168 = vector.extract_strided_slice %167 {offsets = [0, 0], sizes = [8, 96], strides = [1, 1]} : vector<8x128xf32> to vector<8x96xf32>
    %169 = arith.negf %168 : vector<8x96xf32>
    %170 = math.exp %169 : vector<8x96xf32>
    %cst_55 = arith.constant 1.000000e+00 : f32
    %171 = vector.broadcast %cst_55 : f32 to vector<8x96xf32>
    %172 = arith.addf %171, %170 : vector<8x96xf32>
    %173 = arith.divf %171, %172 : vector<8x96xf32>
    %174 = vector.extract_strided_slice %167 {offsets = [0, 96], sizes = [8, 32], strides = [1, 1]} : vector<8x128xf32> to vector<8x32xf32>
    %175 = math.tanh %174 : vector<8x32xf32>
    %176 = vector.extract_strided_slice %173 {offsets = [0, 32], sizes = [8, 32], strides = [1, 1]} : vector<8x96xf32> to vector<8x32xf32>
    %177 = arith.mulf %176, %155 : vector<8x32xf32>
    %178 = vector.extract_strided_slice %173 {offsets = [0, 0], sizes = [8, 32], strides = [1, 1]} : vector<8x96xf32> to vector<8x32xf32>
    %179 = arith.mulf %178, %175 : vector<8x32xf32>
    %180 = arith.addf %177, %179 : vector<8x32xf32>
    %181 = vector.extract_strided_slice %173 {offsets = [0, 64], sizes = [8, 32], strides = [1, 1]} : vector<8x96xf32> to vector<8x32xf32>
    %182 = math.tanh %180 : vector<8x32xf32>
    %183 = arith.mulf %181, %182 : vector<8x32xf32>
    %184 = arith.index_cast %c6_i32 : i32 to index
    %c0_56 = arith.constant 0 : index
    %c0_57 = arith.constant 0 : index
    %185 = vector.load %arg17[%184, %c0_56, %c0_57] : memref<8x8x32xf32, #tpu.memory_space<vmem>>, vector<1x8x32xf32>
    %186 = vector.shape_cast %185 : vector<1x8x32xf32> to vector<8x32xf32>
    %187 = vector.shape_cast %183 : vector<8x32xf32> to vector<1x8x32xf32>
    tpu.vector_store %arg17[%184, %c0_56, %c0_57], %187 {strides = array<i32>} : memref<8x8x32xf32, #tpu.memory_space<vmem>>, vector<1x8x32xf32>,
    %c7_i32 = arith.constant 7 : i32
    %188 = arith.index_cast %c7_i32 : i32 to index
    %c0_58 = arith.constant 0 : index
    %c0_59 = arith.constant 0 : index
    %189 = vector.load %arg16[%188, %c0_58, %c0_59] : memref<8x8x128xf32, #tpu.memory_space<vmem>>, vector<1x8x128xf32>
    %190 = vector.shape_cast %189 : vector<1x8x128xf32> to vector<8x128xf32>
    %cst_60 = arith.constant dense<0.000000e+00> : vector<8x128xf32>
    %191 = tpu.matmul %183, %9, %cst_60 {dimension_numbers = #tpu.dot_dimension_numbers<[1], [0], [0], [1], [0, 0, 1, 1], [], []>} : vector<8x32xf32>, vector<32x128xf32>, vector<8x128xf32> -> vector<8x128xf32>
    %192 = arith.addf %190, %191 : vector<8x128xf32>
    %193 = vector.extract_strided_slice %192 {offsets = [0, 0], sizes = [8, 96], strides = [1, 1]} : vector<8x128xf32> to vector<8x96xf32>
    %194 = arith.negf %193 : vector<8x96xf32>
    %195 = math.exp %194 : vector<8x96xf32>
    %cst_61 = arith.constant 1.000000e+00 : f32
    %196 = vector.broadcast %cst_61 : f32 to vector<8x96xf32>
    %197 = arith.addf %196, %195 : vector<8x96xf32>
    %198 = arith.divf %196, %197 : vector<8x96xf32>
    %199 = vector.extract_strided_slice %192 {offsets = [0, 96], sizes = [8, 32], strides = [1, 1]} : vector<8x128xf32> to vector<8x32xf32>
    %200 = math.tanh %199 : vector<8x32xf32>
    %201 = vector.extract_strided_slice %198 {offsets = [0, 32], sizes = [8, 32], strides = [1, 1]} : vector<8x96xf32> to vector<8x32xf32>
    %202 = arith.mulf %201, %180 : vector<8x32xf32>
    %203 = vector.extract_strided_slice %198 {offsets = [0, 0], sizes = [8, 32], strides = [1, 1]} : vector<8x96xf32> to vector<8x32xf32>
    %204 = arith.mulf %203, %200 : vector<8x32xf32>
    %205 = arith.addf %202, %204 : vector<8x32xf32>
    %206 = vector.extract_strided_slice %198 {offsets = [0, 64], sizes = [8, 32], strides = [1, 1]} : vector<8x96xf32> to vector<8x32xf32>
    %207 = math.tanh %205 : vector<8x32xf32>
    %208 = arith.mulf %206, %207 : vector<8x32xf32>
    %209 = arith.index_cast %c7_i32 : i32 to index
    %c0_62 = arith.constant 0 : index
    %c0_63 = arith.constant 0 : index
    %210 = vector.load %arg17[%209, %c0_62, %c0_63] : memref<8x8x32xf32, #tpu.memory_space<vmem>>, vector<1x8x32xf32>
    %211 = vector.shape_cast %210 : vector<1x8x32xf32> to vector<8x32xf32>
    %212 = vector.shape_cast %208 : vector<8x32xf32> to vector<1x8x32xf32>
    tpu.vector_store %arg17[%209, %c0_62, %c0_63], %212 {strides = array<i32>} : memref<8x8x32xf32, #tpu.memory_space<vmem>>, vector<1x8x32xf32>,
    %c8_i32 = arith.constant 8 : i32
    %c0_64 = arith.constant 0 : index
    %c0_65 = arith.constant 0 : index
    %c0_66 = arith.constant 0 : index
    %213 = vector.load %arg17[%c0_64, %c0_65, %c0_66] : memref<8x8x32xf32, #tpu.memory_space<vmem>>, vector<8x8x32xf32>
    %214 = vector.shape_cast %213 : vector<8x8x32xf32> to vector<64x32xf32>
    %c0_67 = arith.constant 0 : index
    %c0_68 = arith.constant 0 : index
    %215 = vector.load %arg6[%c0_67, %c0_68] : memref<32x128xf32, #tpu.memory_space<vmem>>, vector<32x128xf32>
    %cst_69 = arith.constant dense<0.000000e+00> : vector<64x128xf32>
    %216 = tpu.matmul %214, %215, %cst_69 {dimension_numbers = #tpu.dot_dimension_numbers<[1], [0], [0], [1], [0, 0, 1, 1], [], []>} : vector<64x32xf32>, vector<32x128xf32>, vector<64x128xf32> -> vector<64x128xf32>
    %c0_70 = arith.constant 0 : index
    %c0_71 = arith.constant 0 : index
    %217 = vector.load %arg8[%c0_70, %c0_71] : memref<1x128xf32, #tpu.memory_space<vmem>>, vector<1x128xf32>
    %218 = vector.broadcast %217 : vector<1x128xf32> to vector<64x128xf32>
    %219 = arith.addf %216, %218 : vector<64x128xf32>
    %220 = vector.shape_cast %219 : vector<64x128xf32> to vector<8x8x128xf32>
    %c0_72 = arith.constant 0 : index
    %c0_73 = arith.constant 0 : index
    %c0_74 = arith.constant 0 : index
    %221 = vector.load %arg16[%c0_72, %c0_73, %c0_74] : memref<8x8x128xf32, #tpu.memory_space<vmem>>, vector<8x8x128xf32>
    tpu.vector_store %arg16[%c0_72, %c0_73, %c0_74], %220 {strides = array<i32>} : memref<8x8x128xf32, #tpu.memory_space<vmem>>, vector<8x8x128xf32>,
    %c0_i32_75 = arith.constant 0 : i32
    %222 = arith.index_cast %c0_i32_75 : i32 to index
    %c0_76 = arith.constant 0 : index
    %c0_77 = arith.constant 0 : index
    %223 = vector.load %arg16[%222, %c0_76, %c0_77] : memref<8x8x128xf32, #tpu.memory_space<vmem>>, vector<1x8x128xf32>
    %224 = vector.shape_cast %223 : vector<1x8x128xf32> to vector<8x128xf32>
    %cst_78 = arith.constant dense<0.000000e+00> : vector<8x128xf32>
    %225 = tpu.matmul %12, %10, %cst_78 {dimension_numbers = #tpu.dot_dimension_numbers<[1], [0], [0], [1], [0, 0, 1, 1], [], []>} : vector<8x32xf32>, vector<32x128xf32>, vector<8x128xf32> -> vector<8x128xf32>
    %226 = arith.addf %224, %225 : vector<8x128xf32>
    %227 = vector.extract_strided_slice %226 {offsets = [0, 0], sizes = [8, 96], strides = [1, 1]} : vector<8x128xf32> to vector<8x96xf32>
    %228 = arith.negf %227 : vector<8x96xf32>
    %229 = math.exp %228 : vector<8x96xf32>
    %cst_79 = arith.constant 1.000000e+00 : f32
    %230 = vector.broadcast %cst_79 : f32 to vector<8x96xf32>
    %231 = arith.addf %230, %229 : vector<8x96xf32>
    %232 = arith.divf %230, %231 : vector<8x96xf32>
    %233 = vector.extract_strided_slice %226 {offsets = [0, 96], sizes = [8, 32], strides = [1, 1]} : vector<8x128xf32> to vector<8x32xf32>
    %234 = math.tanh %233 : vector<8x32xf32>
    %235 = vector.extract_strided_slice %232 {offsets = [0, 32], sizes = [8, 32], strides = [1, 1]} : vector<8x96xf32> to vector<8x32xf32>
    %236 = arith.mulf %235, %12 : vector<8x32xf32>
    %237 = vector.extract_strided_slice %232 {offsets = [0, 0], sizes = [8, 32], strides = [1, 1]} : vector<8x96xf32> to vector<8x32xf32>
    %238 = arith.mulf %237, %234 : vector<8x32xf32>
    %239 = arith.addf %236, %238 : vector<8x32xf32>
    %240 = vector.extract_strided_slice %232 {offsets = [0, 64], sizes = [8, 32], strides = [1, 1]} : vector<8x96xf32> to vector<8x32xf32>
    %241 = math.tanh %239 : vector<8x32xf32>
    %242 = arith.mulf %240, %241 : vector<8x32xf32>
    %243 = vector.broadcast %c0_i32_75 : i32 to vector<8x1xi32>
    %244 = arith.cmpi eq, %11, %243 : vector<8x1xi32>
    %245 = vector.shape_cast %244 : vector<8x1xi1> to vector<8x1xi1>
    %246 = vector.broadcast %245 : vector<8x1xi1> to vector<8x32xi1>
    %247 = arith.select %246, %242, %12 : vector<8x32xi1>, vector<8x32xf32>
    %c1_i32_80 = arith.constant 1 : i32
    %248 = arith.index_cast %c1_i32_80 : i32 to index
    %c0_81 = arith.constant 0 : index
    %c0_82 = arith.constant 0 : index
    %249 = vector.load %arg16[%248, %c0_81, %c0_82] : memref<8x8x128xf32, #tpu.memory_space<vmem>>, vector<1x8x128xf32>
    %250 = vector.shape_cast %249 : vector<1x8x128xf32> to vector<8x128xf32>
    %cst_83 = arith.constant dense<0.000000e+00> : vector<8x128xf32>
    %251 = tpu.matmul %242, %10, %cst_83 {dimension_numbers = #tpu.dot_dimension_numbers<[1], [0], [0], [1], [0, 0, 1, 1], [], []>} : vector<8x32xf32>, vector<32x128xf32>, vector<8x128xf32> -> vector<8x128xf32>
    %252 = arith.addf %250, %251 : vector<8x128xf32>
    %253 = vector.extract_strided_slice %252 {offsets = [0, 0], sizes = [8, 96], strides = [1, 1]} : vector<8x128xf32> to vector<8x96xf32>
    %254 = arith.negf %253 : vector<8x96xf32>
    %255 = math.exp %254 : vector<8x96xf32>
    %cst_84 = arith.constant 1.000000e+00 : f32
    %256 = vector.broadcast %cst_84 : f32 to vector<8x96xf32>
    %257 = arith.addf %256, %255 : vector<8x96xf32>
    %258 = arith.divf %256, %257 : vector<8x96xf32>
    %259 = vector.extract_strided_slice %252 {offsets = [0, 96], sizes = [8, 32], strides = [1, 1]} : vector<8x128xf32> to vector<8x32xf32>
    %260 = math.tanh %259 : vector<8x32xf32>
    %261 = vector.extract_strided_slice %258 {offsets = [0, 32], sizes = [8, 32], strides = [1, 1]} : vector<8x96xf32> to vector<8x32xf32>
    %262 = arith.mulf %261, %239 : vector<8x32xf32>
    %263 = vector.extract_strided_slice %258 {offsets = [0, 0], sizes = [8, 32], strides = [1, 1]} : vector<8x96xf32> to vector<8x32xf32>
    %264 = arith.mulf %263, %260 : vector<8x32xf32>
    %265 = arith.addf %262, %264 : vector<8x32xf32>
    %266 = vector.extract_strided_slice %258 {offsets = [0, 64], sizes = [8, 32], strides = [1, 1]} : vector<8x96xf32> to vector<8x32xf32>
    %267 = math.tanh %265 : vector<8x32xf32>
    %268 = arith.mulf %266, %267 : vector<8x32xf32>
    %269 = vector.broadcast %c1_i32_80 : i32 to vector<8x1xi32>
    %270 = arith.cmpi eq, %11, %269 : vector<8x1xi32>
    %271 = vector.shape_cast %270 : vector<8x1xi1> to vector<8x1xi1>
    %272 = vector.broadcast %271 : vector<8x1xi1> to vector<8x32xi1>
    %273 = arith.select %272, %268, %247 : vector<8x32xi1>, vector<8x32xf32>
    %c2_i32_85 = arith.constant 2 : i32
    %274 = arith.index_cast %c2_i32_85 : i32 to index
    %c0_86 = arith.constant 0 : index
    %c0_87 = arith.constant 0 : index
    %275 = vector.load %arg16[%274, %c0_86, %c0_87] : memref<8x8x128xf32, #tpu.memory_space<vmem>>, vector<1x8x128xf32>
    %276 = vector.shape_cast %275 : vector<1x8x128xf32> to vector<8x128xf32>
    %cst_88 = arith.constant dense<0.000000e+00> : vector<8x128xf32>
    %277 = tpu.matmul %268, %10, %cst_88 {dimension_numbers = #tpu.dot_dimension_numbers<[1], [0], [0], [1], [0, 0, 1, 1], [], []>} : vector<8x32xf32>, vector<32x128xf32>, vector<8x128xf32> -> vector<8x128xf32>
    %278 = arith.addf %276, %277 : vector<8x128xf32>
    %279 = vector.extract_strided_slice %278 {offsets = [0, 0], sizes = [8, 96], strides = [1, 1]} : vector<8x128xf32> to vector<8x96xf32>
    %280 = arith.negf %279 : vector<8x96xf32>
    %281 = math.exp %280 : vector<8x96xf32>
    %cst_89 = arith.constant 1.000000e+00 : f32
    %282 = vector.broadcast %cst_89 : f32 to vector<8x96xf32>
    %283 = arith.addf %282, %281 : vector<8x96xf32>
    %284 = arith.divf %282, %283 : vector<8x96xf32>
    %285 = vector.extract_strided_slice %278 {offsets = [0, 96], sizes = [8, 32], strides = [1, 1]} : vector<8x128xf32> to vector<8x32xf32>
    %286 = math.tanh %285 : vector<8x32xf32>
    %287 = vector.extract_strided_slice %284 {offsets = [0, 32], sizes = [8, 32], strides = [1, 1]} : vector<8x96xf32> to vector<8x32xf32>
    %288 = arith.mulf %287, %265 : vector<8x32xf32>
    %289 = vector.extract_strided_slice %284 {offsets = [0, 0], sizes = [8, 32], strides = [1, 1]} : vector<8x96xf32> to vector<8x32xf32>
    %290 = arith.mulf %289, %286 : vector<8x32xf32>
    %291 = arith.addf %288, %290 : vector<8x32xf32>
    %292 = vector.extract_strided_slice %284 {offsets = [0, 64], sizes = [8, 32], strides = [1, 1]} : vector<8x96xf32> to vector<8x32xf32>
    %293 = math.tanh %291 : vector<8x32xf32>
    %294 = arith.mulf %292, %293 : vector<8x32xf32>
    %295 = vector.broadcast %c2_i32_85 : i32 to vector<8x1xi32>
    %296 = arith.cmpi eq, %11, %295 : vector<8x1xi32>
    %297 = vector.shape_cast %296 : vector<8x1xi1> to vector<8x1xi1>
    %298 = vector.broadcast %297 : vector<8x1xi1> to vector<8x32xi1>
    %299 = arith.select %298, %294, %273 : vector<8x32xi1>, vector<8x32xf32>
    %c3_i32_90 = arith.constant 3 : i32
    %300 = arith.index_cast %c3_i32_90 : i32 to index
    %c0_91 = arith.constant 0 : index
    %c0_92 = arith.constant 0 : index
    %301 = vector.load %arg16[%300, %c0_91, %c0_92] : memref<8x8x128xf32, #tpu.memory_space<vmem>>, vector<1x8x128xf32>
    %302 = vector.shape_cast %301 : vector<1x8x128xf32> to vector<8x128xf32>
    %cst_93 = arith.constant dense<0.000000e+00> : vector<8x128xf32>
    %303 = tpu.matmul %294, %10, %cst_93 {dimension_numbers = #tpu.dot_dimension_numbers<[1], [0], [0], [1], [0, 0, 1, 1], [], []>} : vector<8x32xf32>, vector<32x128xf32>, vector<8x128xf32> -> vector<8x128xf32>
    %304 = arith.addf %302, %303 : vector<8x128xf32>
    %305 = vector.extract_strided_slice %304 {offsets = [0, 0], sizes = [8, 96], strides = [1, 1]} : vector<8x128xf32> to vector<8x96xf32>
    %306 = arith.negf %305 : vector<8x96xf32>
    %307 = math.exp %306 : vector<8x96xf32>
    %cst_94 = arith.constant 1.000000e+00 : f32
    %308 = vector.broadcast %cst_94 : f32 to vector<8x96xf32>
    %309 = arith.addf %308, %307 : vector<8x96xf32>
    %310 = arith.divf %308, %309 : vector<8x96xf32>
    %311 = vector.extract_strided_slice %304 {offsets = [0, 96], sizes = [8, 32], strides = [1, 1]} : vector<8x128xf32> to vector<8x32xf32>
    %312 = math.tanh %311 : vector<8x32xf32>
    %313 = vector.extract_strided_slice %310 {offsets = [0, 32], sizes = [8, 32], strides = [1, 1]} : vector<8x96xf32> to vector<8x32xf32>
    %314 = arith.mulf %313, %291 : vector<8x32xf32>
    %315 = vector.extract_strided_slice %310 {offsets = [0, 0], sizes = [8, 32], strides = [1, 1]} : vector<8x96xf32> to vector<8x32xf32>
    %316 = arith.mulf %315, %312 : vector<8x32xf32>
    %317 = arith.addf %314, %316 : vector<8x32xf32>
    %318 = vector.extract_strided_slice %310 {offsets = [0, 64], sizes = [8, 32], strides = [1, 1]} : vector<8x96xf32> to vector<8x32xf32>
    %319 = math.tanh %317 : vector<8x32xf32>
    %320 = arith.mulf %318, %319 : vector<8x32xf32>
    %321 = vector.broadcast %c3_i32_90 : i32 to vector<8x1xi32>
    %322 = arith.cmpi eq, %11, %321 : vector<8x1xi32>
    %323 = vector.shape_cast %322 : vector<8x1xi1> to vector<8x1xi1>
    %324 = vector.broadcast %323 : vector<8x1xi1> to vector<8x32xi1>
    %325 = arith.select %324, %320, %299 : vector<8x32xi1>, vector<8x32xf32>
    %c4_i32_95 = arith.constant 4 : i32
    %326 = arith.index_cast %c4_i32_95 : i32 to index
    %c0_96 = arith.constant 0 : index
    %c0_97 = arith.constant 0 : index
    %327 = vector.load %arg16[%326, %c0_96, %c0_97] : memref<8x8x128xf32, #tpu.memory_space<vmem>>, vector<1x8x128xf32>
    %328 = vector.shape_cast %327 : vector<1x8x128xf32> to vector<8x128xf32>
    %cst_98 = arith.constant dense<0.000000e+00> : vector<8x128xf32>
    %329 = tpu.matmul %320, %10, %cst_98 {dimension_numbers = #tpu.dot_dimension_numbers<[1], [0], [0], [1], [0, 0, 1, 1], [], []>} : vector<8x32xf32>, vector<32x128xf32>, vector<8x128xf32> -> vector<8x128xf32>
    %330 = arith.addf %328, %329 : vector<8x128xf32>
    %331 = vector.extract_strided_slice %330 {offsets = [0, 0], sizes = [8, 96], strides = [1, 1]} : vector<8x128xf32> to vector<8x96xf32>
    %332 = arith.negf %331 : vector<8x96xf32>
    %333 = math.exp %332 : vector<8x96xf32>
    %cst_99 = arith.constant 1.000000e+00 : f32
    %334 = vector.broadcast %cst_99 : f32 to vector<8x96xf32>
    %335 = arith.addf %334, %333 : vector<8x96xf32>
    %336 = arith.divf %334, %335 : vector<8x96xf32>
    %337 = vector.extract_strided_slice %330 {offsets = [0, 96], sizes = [8, 32], strides = [1, 1]} : vector<8x128xf32> to vector<8x32xf32>
    %338 = math.tanh %337 : vector<8x32xf32>
    %339 = vector.extract_strided_slice %336 {offsets = [0, 32], sizes = [8, 32], strides = [1, 1]} : vector<8x96xf32> to vector<8x32xf32>
    %340 = arith.mulf %339, %317 : vector<8x32xf32>
    %341 = vector.extract_strided_slice %336 {offsets = [0, 0], sizes = [8, 32], strides = [1, 1]} : vector<8x96xf32> to vector<8x32xf32>
    %342 = arith.mulf %341, %338 : vector<8x32xf32>
    %343 = arith.addf %340, %342 : vector<8x32xf32>
    %344 = vector.extract_strided_slice %336 {offsets = [0, 64], sizes = [8, 32], strides = [1, 1]} : vector<8x96xf32> to vector<8x32xf32>
    %345 = math.tanh %343 : vector<8x32xf32>
    %346 = arith.mulf %344, %345 : vector<8x32xf32>
    %347 = vector.broadcast %c4_i32_95 : i32 to vector<8x1xi32>
    %348 = arith.cmpi eq, %11, %347 : vector<8x1xi32>
    %349 = vector.shape_cast %348 : vector<8x1xi1> to vector<8x1xi1>
    %350 = vector.broadcast %349 : vector<8x1xi1> to vector<8x32xi1>
    %351 = arith.select %350, %346, %325 : vector<8x32xi1>, vector<8x32xf32>
    %c5_i32_100 = arith.constant 5 : i32
    %352 = arith.index_cast %c5_i32_100 : i32 to index
    %c0_101 = arith.constant 0 : index
    %c0_102 = arith.constant 0 : index
    %353 = vector.load %arg16[%352, %c0_101, %c0_102] : memref<8x8x128xf32, #tpu.memory_space<vmem>>, vector<1x8x128xf32>
    %354 = vector.shape_cast %353 : vector<1x8x128xf32> to vector<8x128xf32>
    %cst_103 = arith.constant dense<0.000000e+00> : vector<8x128xf32>
    %355 = tpu.matmul %346, %10, %cst_103 {dimension_numbers = #tpu.dot_dimension_numbers<[1], [0], [0], [1], [0, 0, 1, 1], [], []>} : vector<8x32xf32>, vector<32x128xf32>, vector<8x128xf32> -> vector<8x128xf32>
    %356 = arith.addf %354, %355 : vector<8x128xf32>
    %357 = vector.extract_strided_slice %356 {offsets = [0, 0], sizes = [8, 96], strides = [1, 1]} : vector<8x128xf32> to vector<8x96xf32>
    %358 = arith.negf %357 : vector<8x96xf32>
    %359 = math.exp %358 : vector<8x96xf32>
    %cst_104 = arith.constant 1.000000e+00 : f32
    %360 = vector.broadcast %cst_104 : f32 to vector<8x96xf32>
    %361 = arith.addf %360, %359 : vector<8x96xf32>
    %362 = arith.divf %360, %361 : vector<8x96xf32>
    %363 = vector.extract_strided_slice %356 {offsets = [0, 96], sizes = [8, 32], strides = [1, 1]} : vector<8x128xf32> to vector<8x32xf32>
    %364 = math.tanh %363 : vector<8x32xf32>
    %365 = vector.extract_strided_slice %362 {offsets = [0, 32], sizes = [8, 32], strides = [1, 1]} : vector<8x96xf32> to vector<8x32xf32>
    %366 = arith.mulf %365, %343 : vector<8x32xf32>
    %367 = vector.extract_strided_slice %362 {offsets = [0, 0], sizes = [8, 32], strides = [1, 1]} : vector<8x96xf32> to vector<8x32xf32>
    %368 = arith.mulf %367, %364 : vector<8x32xf32>
    %369 = arith.addf %366, %368 : vector<8x32xf32>
    %370 = vector.extract_strided_slice %362 {offsets = [0, 64], sizes = [8, 32], strides = [1, 1]} : vector<8x96xf32> to vector<8x32xf32>
    %371 = math.tanh %369 : vector<8x32xf32>
    %372 = arith.mulf %370, %371 : vector<8x32xf32>
    %373 = vector.broadcast %c5_i32_100 : i32 to vector<8x1xi32>
    %374 = arith.cmpi eq, %11, %373 : vector<8x1xi32>
    %375 = vector.shape_cast %374 : vector<8x1xi1> to vector<8x1xi1>
    %376 = vector.broadcast %375 : vector<8x1xi1> to vector<8x32xi1>
    %377 = arith.select %376, %372, %351 : vector<8x32xi1>, vector<8x32xf32>
    %c6_i32_105 = arith.constant 6 : i32
    %378 = arith.index_cast %c6_i32_105 : i32 to index
    %c0_106 = arith.constant 0 : index
    %c0_107 = arith.constant 0 : index
    %379 = vector.load %arg16[%378, %c0_106, %c0_107] : memref<8x8x128xf32, #tpu.memory_space<vmem>>, vector<1x8x128xf32>
    %380 = vector.shape_cast %379 : vector<1x8x128xf32> to vector<8x128xf32>
    %cst_108 = arith.constant dense<0.000000e+00> : vector<8x128xf32>
    %381 = tpu.matmul %372, %10, %cst_108 {dimension_numbers = #tpu.dot_dimension_numbers<[1], [0], [0], [1], [0, 0, 1, 1], [], []>} : vector<8x32xf32>, vector<32x128xf32>, vector<8x128xf32> -> vector<8x128xf32>
    %382 = arith.addf %380, %381 : vector<8x128xf32>
    %383 = vector.extract_strided_slice %382 {offsets = [0, 0], sizes = [8, 96], strides = [1, 1]} : vector<8x128xf32> to vector<8x96xf32>
    %384 = arith.negf %383 : vector<8x96xf32>
    %385 = math.exp %384 : vector<8x96xf32>
    %cst_109 = arith.constant 1.000000e+00 : f32
    %386 = vector.broadcast %cst_109 : f32 to vector<8x96xf32>
    %387 = arith.addf %386, %385 : vector<8x96xf32>
    %388 = arith.divf %386, %387 : vector<8x96xf32>
    %389 = vector.extract_strided_slice %382 {offsets = [0, 96], sizes = [8, 32], strides = [1, 1]} : vector<8x128xf32> to vector<8x32xf32>
    %390 = math.tanh %389 : vector<8x32xf32>
    %391 = vector.extract_strided_slice %388 {offsets = [0, 32], sizes = [8, 32], strides = [1, 1]} : vector<8x96xf32> to vector<8x32xf32>
    %392 = arith.mulf %391, %369 : vector<8x32xf32>
    %393 = vector.extract_strided_slice %388 {offsets = [0, 0], sizes = [8, 32], strides = [1, 1]} : vector<8x96xf32> to vector<8x32xf32>
    %394 = arith.mulf %393, %390 : vector<8x32xf32>
    %395 = arith.addf %392, %394 : vector<8x32xf32>
    %396 = vector.extract_strided_slice %388 {offsets = [0, 64], sizes = [8, 32], strides = [1, 1]} : vector<8x96xf32> to vector<8x32xf32>
    %397 = math.tanh %395 : vector<8x32xf32>
    %398 = arith.mulf %396, %397 : vector<8x32xf32>
    %399 = vector.broadcast %c6_i32_105 : i32 to vector<8x1xi32>
    %400 = arith.cmpi eq, %11, %399 : vector<8x1xi32>
    %401 = vector.shape_cast %400 : vector<8x1xi1> to vector<8x1xi1>
    %402 = vector.broadcast %401 : vector<8x1xi1> to vector<8x32xi1>
    %403 = arith.select %402, %398, %377 : vector<8x32xi1>, vector<8x32xf32>
    %c7_i32_110 = arith.constant 7 : i32
    %404 = arith.index_cast %c7_i32_110 : i32 to index
    %c0_111 = arith.constant 0 : index
    %c0_112 = arith.constant 0 : index
    %405 = vector.load %arg16[%404, %c0_111, %c0_112] : memref<8x8x128xf32, #tpu.memory_space<vmem>>, vector<1x8x128xf32>
    %406 = vector.shape_cast %405 : vector<1x8x128xf32> to vector<8x128xf32>
    %cst_113 = arith.constant dense<0.000000e+00> : vector<8x128xf32>
    %407 = tpu.matmul %398, %10, %cst_113 {dimension_numbers = #tpu.dot_dimension_numbers<[1], [0], [0], [1], [0, 0, 1, 1], [], []>} : vector<8x32xf32>, vector<32x128xf32>, vector<8x128xf32> -> vector<8x128xf32>
    %408 = arith.addf %406, %407 : vector<8x128xf32>
    %409 = vector.extract_strided_slice %408 {offsets = [0, 0], sizes = [8, 96], strides = [1, 1]} : vector<8x128xf32> to vector<8x96xf32>
    %410 = arith.negf %409 : vector<8x96xf32>
    %411 = math.exp %410 : vector<8x96xf32>
    %cst_114 = arith.constant 1.000000e+00 : f32
    %412 = vector.broadcast %cst_114 : f32 to vector<8x96xf32>
    %413 = arith.addf %412, %411 : vector<8x96xf32>
    %414 = arith.divf %412, %413 : vector<8x96xf32>
    %415 = vector.extract_strided_slice %408 {offsets = [0, 96], sizes = [8, 32], strides = [1, 1]} : vector<8x128xf32> to vector<8x32xf32>
    %416 = math.tanh %415 : vector<8x32xf32>
    %417 = vector.extract_strided_slice %414 {offsets = [0, 32], sizes = [8, 32], strides = [1, 1]} : vector<8x96xf32> to vector<8x32xf32>
    %418 = arith.mulf %417, %395 : vector<8x32xf32>
    %419 = vector.extract_strided_slice %414 {offsets = [0, 0], sizes = [8, 32], strides = [1, 1]} : vector<8x96xf32> to vector<8x32xf32>
    %420 = arith.mulf %419, %416 : vector<8x32xf32>
    %421 = arith.addf %418, %420 : vector<8x32xf32>
    %422 = vector.extract_strided_slice %414 {offsets = [0, 64], sizes = [8, 32], strides = [1, 1]} : vector<8x96xf32> to vector<8x32xf32>
    %423 = math.tanh %421 : vector<8x32xf32>
    %424 = arith.mulf %422, %423 : vector<8x32xf32>
    %425 = vector.broadcast %c7_i32_110 : i32 to vector<8x1xi32>
    %426 = arith.cmpi eq, %11, %425 : vector<8x1xi32>
    %427 = vector.shape_cast %426 : vector<8x1xi1> to vector<8x1xi1>
    %428 = vector.broadcast %427 : vector<8x1xi1> to vector<8x32xi1>
    %429 = arith.select %428, %424, %403 : vector<8x32xi1>, vector<8x32xf32>
    %c8_i32_115 = arith.constant 8 : i32
    %c0_116 = arith.constant 0 : index
    %c0_117 = arith.constant 0 : index
    %430 = vector.load %arg9[%c0_116, %c0_117] : memref<32x64xf32, #tpu.memory_space<vmem>>, vector<32x64xf32>
    %cst_118 = arith.constant dense<0.000000e+00> : vector<8x64xf32>
    %431 = tpu.matmul %429, %430, %cst_118 {dimension_numbers = #tpu.dot_dimension_numbers<[1], [0], [0], [1], [0, 0, 1, 1], [], []>} : vector<8x32xf32>, vector<32x64xf32>, vector<8x64xf32> -> vector<8x64xf32>
    %c0_119 = arith.constant 0 : index
    %c0_120 = arith.constant 0 : index
    %432 = vector.load %arg10[%c0_119, %c0_120] : memref<1x64xf32, #tpu.memory_space<vmem>>, vector<1x64xf32>
    %433 = vector.broadcast %432 : vector<1x64xf32> to vector<8x64xf32>
    %434 = arith.addf %431, %433 : vector<8x64xf32>
    %cst_121 = arith.constant 0.000000e+00 : f32
    %435 = vector.broadcast %cst_121 : f32 to vector<8x64xf32>
    %436 = arith.maximumf %434, %435 : vector<8x64xf32>
    %c0_122 = arith.constant 0 : index
    %c0_123 = arith.constant 0 : index
    %437 = vector.load %arg11[%c0_122, %c0_123] : memref<64x32xf32, #tpu.memory_space<vmem>>, vector<64x32xf32>
    %cst_124 = arith.constant dense<0.000000e+00> : vector<8x32xf32>
    %438 = tpu.matmul %436, %437, %cst_124 {dimension_numbers = #tpu.dot_dimension_numbers<[1], [0], [0], [1], [0, 0, 1, 1], [], []>} : vector<8x64xf32>, vector<64x32xf32>, vector<8x32xf32> -> vector<8x32xf32>
    %c0_125 = arith.constant 0 : index
    %c0_126 = arith.constant 0 : index
    %439 = vector.load %arg12[%c0_125, %c0_126] : memref<1x32xf32, #tpu.memory_space<vmem>>, vector<1x32xf32>
    %440 = vector.broadcast %439 : vector<1x32xf32> to vector<8x32xf32>
    %441 = arith.addf %438, %440 : vector<8x32xf32>
    %cst_127 = arith.constant 0.000000e+00 : f32
    %442 = vector.broadcast %cst_127 : f32 to vector<8x32xf32>
    %443 = arith.maximumf %441, %442 : vector<8x32xf32>
    %c0_128 = arith.constant 0 : index
    %c0_129 = arith.constant 0 : index
    %444 = vector.load %arg13[%c0_128, %c0_129] : memref<1x32xf32, #tpu.memory_space<vmem>>, vector<1x32xf32>
    %445 = vector.broadcast %444 : vector<1x32xf32> to vector<8x32xf32>
    %446 = arith.mulf %443, %445 : vector<8x32xf32>
    %cst_130 = arith.constant dense<0.000000e+00> : vector<8xf32>
    %447 = vector.multi_reduction <add>, %446, %cst_130 [1] : vector<8x32xf32> to vector<8xf32>
    %448 = vector.shape_cast %447 : vector<8xf32> to vector<8x1xf32>
    %c0_131 = arith.constant 0 : index
    %c0_132 = arith.constant 0 : index
    %449 = vector.load %arg14[%c0_131, %c0_132] : memref<1x1xf32, #tpu.memory_space<vmem>>, vector<1x1xf32>
    %450 = vector.broadcast %449 : vector<1x1xf32> to vector<8x1xf32>
    %451 = arith.addf %448, %450 : vector<8x1xf32>
    %c0_133 = arith.constant 0 : index
    %c0_134 = arith.constant 0 : index
    %452 = vector.load %arg15[%c0_133, %c0_134] : memref<8x1xf32, #tpu.memory_space<vmem>>, vector<8x1xf32>
    tpu.vector_store %arg15[%c0_133, %c0_134], %451 {strides = array<i32>} : memref<8x1xf32, #tpu.memory_space<vmem>>, vector<8x1xf32>,
    return
  }
  func.func @transform_0(%arg0: i32) -> (i32, i32, i32) {
    %c0_i32 = arith.constant 0 : i32
    %c0_i32_0 = arith.constant 0 : i32
    %c0_i32_1 = arith.constant 0 : i32
    return %c0_i32, %arg0, %c0_i32_0 : i32, i32, i32
  }
  func.func @transform_1(%arg0: i32) -> (i32, i32) {
    %c0_i32 = arith.constant 0 : i32
    %c0_i32_0 = arith.constant 0 : i32
    return %arg0, %c0_i32 : i32, i32
  }
  func.func @transform_2(%arg0: i32) -> (i32, i32) {
    %c0_i32 = arith.constant 0 : i32
    %c0_i32_0 = arith.constant 0 : i32
    %c0_i32_1 = arith.constant 0 : i32
    return %c0_i32, %c0_i32_0 : i32, i32
  }
  func.func @transform_3(%arg0: i32) -> (i32, i32) {
    %c0_i32 = arith.constant 0 : i32
    %c0_i32_0 = arith.constant 0 : i32
    %c0_i32_1 = arith.constant 0 : i32
    return %c0_i32, %c0_i32_0 : i32, i32
  }
  func.func @transform_4(%arg0: i32) -> (i32, i32) {
    %c0_i32 = arith.constant 0 : i32
    %c0_i32_0 = arith.constant 0 : i32
    %c0_i32_1 = arith.constant 0 : i32
    return %c0_i32, %c0_i32_0 : i32, i32
  }
  func.func @transform_5(%arg0: i32) -> (i32, i32) {
    %c0_i32 = arith.constant 0 : i32
    %c0_i32_0 = arith.constant 0 : i32
    %c0_i32_1 = arith.constant 0 : i32
    return %c0_i32, %c0_i32_0 : i32, i32
  }
  func.func @transform_6(%arg0: i32) -> (i32, i32) {
    %c0_i32 = arith.constant 0 : i32
    %c0_i32_0 = arith.constant 0 : i32
    %c0_i32_1 = arith.constant 0 : i32
    return %c0_i32, %c0_i32_0 : i32, i32
  }
  func.func @transform_7(%arg0: i32) -> (i32, i32) {
    %c0_i32 = arith.constant 0 : i32
    %c0_i32_0 = arith.constant 0 : i32
    %c0_i32_1 = arith.constant 0 : i32
    return %c0_i32, %c0_i32_0 : i32, i32
  }
  func.func @transform_8(%arg0: i32) -> (i32, i32) {
    %c0_i32 = arith.constant 0 : i32
    %c0_i32_0 = arith.constant 0 : i32
    %c0_i32_1 = arith.constant 0 : i32
    return %c0_i32, %c0_i32_0 : i32, i32
  }
  func.func @transform_9(%arg0: i32) -> (i32, i32) {
    %c0_i32 = arith.constant 0 : i32
    %c0_i32_0 = arith.constant 0 : i32
    %c0_i32_1 = arith.constant 0 : i32
    return %c0_i32, %c0_i32_0 : i32, i32
  }
  func.func @transform_10(%arg0: i32) -> (i32, i32) {
    %c0_i32 = arith.constant 0 : i32
    %c0_i32_0 = arith.constant 0 : i32
    %c0_i32_1 = arith.constant 0 : i32
    return %c0_i32, %c0_i32_0 : i32, i32
  }
  func.func @transform_11(%arg0: i32) -> (i32, i32) {
    %c0_i32 = arith.constant 0 : i32
    %c0_i32_0 = arith.constant 0 : i32
    %c0_i32_1 = arith.constant 0 : i32
    return %c0_i32, %c0_i32_0 : i32, i32
  }
  func.func @transform_12(%arg0: i32) -> (i32, i32) {
    %c0_i32 = arith.constant 0 : i32
    %c0_i32_0 = arith.constant 0 : i32
    %c0_i32_1 = arith.constant 0 : i32
    return %c0_i32, %c0_i32_0 : i32, i32
  }
  func.func @transform_13(%arg0: i32) -> (i32, i32) {
    %c0_i32 = arith.constant 0 : i32
    %c0_i32_0 = arith.constant 0 : i32
    %c0_i32_1 = arith.constant 0 : i32
    return %c0_i32, %c0_i32_0 : i32, i32
  }
  func.func @transform_14(%arg0: i32) -> (i32, i32) {
    %c0_i32 = arith.constant 0 : i32
    %c0_i32_0 = arith.constant 0 : i32
    return %arg0, %c0_i32 : i32, i32
  }
}

</mosaic_0001>

<llo_original>
// kernel: tpu_custom_call.1
$region0: #{tpu_custom_call.1}
  #allocation0 [shape = 'u32[]', space=smem, size = 0x4, offset = 0x4, fixed_abs, tag = 'smem constant byte address 0x4 - core index']
  #allocation1 [shape = 'u32[144,128]{1,0:T(1,128)}', space=vmem, size = 0x12000, scoped, tag = 'internal scratch']
  #allocation2 [shape = 'f32[8,8,128]{2,1,0:T(8,128)}', space=vmem, size = 0x8000, scoped, tag = 'scratch operand']
  #allocation3 [shape = 'f32[8,8,32]{2,1,0:T(8,128)}', space=vmem, size = 0x8000, scoped, tag = 'scratch operand']
  #allocation4 [shape = 'f32[1,1]{1,0:T(1,128)S(1)}', space=vmem, size = 0x200, scoped, tag = 'scoped memory for tpu_custom_call.1']
  %s0 = inlined_call_operand.vmem [shape: f32[8,8,32], index: 0, kind: input, shape index: {}]
  %s1 = inlined_call_operand.vmem [shape: s32[8,1], index: 1, kind: input, shape index: {}]
  %s2 = inlined_call_operand.vmem [shape: f32[32,128], index: 2, kind: input, shape index: {}]
  %s3 = inlined_call_operand.hbm [shape: f32[32,128], index: 3, kind: input, shape index: {}]
  %s4 = inlined_call_operand.vmem [shape: f32[1,128], index: 4, kind: input, shape index: {}]
  %s5 = inlined_call_operand.hbm [shape: f32[32,128], index: 5, kind: input, shape index: {}]
  %s6 = inlined_call_operand.hbm [shape: f32[32,128], index: 6, kind: input, shape index: {}]
  %s7 = inlined_call_operand.vmem [shape: f32[1,128], index: 7, kind: input, shape index: {}]
  %s8 = inlined_call_operand.hbm [shape: f32[32,64], index: 8, kind: input, shape index: {}]
  %s9 = inlined_call_operand.vmem [shape: f32[1,64], index: 9, kind: input, shape index: {}]
  %s10 = inlined_call_operand.vmem [shape: f32[64,32], index: 10, kind: input, shape index: {}]
  %s11 = inlined_call_operand.vmem [shape: f32[1,32], index: 11, kind: input, shape index: {}]
  %s12 = inlined_call_operand.vmem [shape: f32[1,32], index: 12, kind: input, shape index: {}]
  %s13 = inlined_call_operand.<no memory space> [shape: f32[1,1], index: 13, kind: input, shape index: {}]
  %s14 = inlined_call_operand.vmem [shape: f32[8,1], index: 14, kind: output, shape index: {}]
  %s15 = sld [smem:[#allocation0]]
  $region82: #{tpu_custom_call.1} parent=0
    _
  %s17 = ssub.s32 1, %s15
  %s18 = scalar_select 0, %s17, %s15
  %v19 = vstv %s13
  %20 = vst [vmem:[#allocation4] sm:$0x1] %v19
  $region1: #{tpu_custom_call.1} parent=0
    #allocation5 [shape = 'u8[16384]{0}', space=vmem, size = 0x4000, scoped, tag = 'input window, operand 3, single buffered']
    #allocation6 [shape = 's32[1]{0}', space=sflag, size = 0x4, scoped, tag = 'scoped memory for tpu_custom_call.1']
    #allocation7 [shape = 'u8[16384]{0}', space=vmem, size = 0x4000, scoped, tag = 'input window, operand 5, single buffered']
    #allocation8 [shape = 's32[1]{0}', space=sflag, size = 0x4, scoped, tag = 'scoped memory for tpu_custom_call.1']
    #allocation9 [shape = 'u8[16384]{0}', space=vmem, size = 0x4000, scoped, tag = 'input window, operand 6, single buffered']
    #allocation10 [shape = 'u8[16384]{0}', space=vmem, size = 0x4000, scoped, tag = 'input window, operand 8, single buffered']
    #allocation11 [shape = 's32[1]{0}', space=sflag, size = 0x4, scoped, tag = 'scoped memory for tpu_custom_call.1']
    %21 = vsyncpa [#allocation6], 0
    %22 = vsyncpa [#allocation8], 0
    %23 = vsyncpa [#allocation11], 0
    // Predicated region
    $region2: #{tpu_custom_call.1} parent=1 // pred_check
      _
    $region3: #{tpu_custom_call.1} parent=1 // pred_check_branch
      %25 = sbr.rel (0) target = $region5
    $region4: #{tpu_custom_call.1} parent=1 // pred_region
      _
    $region5: #{tpu_custom_call.1} parent=1 // pred_fallthru
      _
    // Predicated region
    $region6: #{tpu_custom_call.1} parent=1 // pred_check
      _
    $region7: #{tpu_custom_call.1} parent=1 // pred_check_branch
      %27 = sbr.rel (0) target = $region9
    $region8: #{tpu_custom_call.1} parent=1 // pred_region
      _
    $region9: #{tpu_custom_call.1} parent=1 // pred_fallthru
      _
    // Predicated region
    $region10: #{tpu_custom_call.1} parent=1 // pred_check
      _
    $region11: #{tpu_custom_call.1} parent=1 // pred_check_branch
      %29 = sbr.rel (0) target = $region13
    $region12: #{tpu_custom_call.1} parent=1 // pred_region
      _
    $region13: #{tpu_custom_call.1} parent=1 // pred_fallthru
      _
    // Predicated region
    $region14: #{tpu_custom_call.1} parent=1 // pred_check
      _
    $region15: #{tpu_custom_call.1} parent=1 // pred_check_branch
      %31 = sbr.rel (0) target = $region17
    $region16: #{tpu_custom_call.1} parent=1 // pred_region
      %s33 = ssub.s32 512, 512
      %34 = vsyncadd [#allocation6], %s33
      %s35 = sshll.u32 [#allocation5], 4
      %s36 = int_to_ptr.vmem [resolvable:$true] %s35
      %41 = dma.hbm_to_vmem [thread:$0]  %s3, 512, %s36, [#allocation6], 128, 128, 8
    $region17: #{tpu_custom_call.1} parent=1 // pred_fallthru
      _
    // Predicated region
    $region18: #{tpu_custom_call.1} parent=1 // pred_check
      _
    $region19: #{tpu_custom_call.1} parent=1 // pred_check_branch
      %43 = sbr.rel (0) target = $region21
    $region20: #{tpu_custom_call.1} parent=1 // pred_region
      _
    $region21: #{tpu_custom_call.1} parent=1 // pred_fallthru
      _
    // Predicated region
    $region22: #{tpu_custom_call.1} parent=1 // pred_check
      _
    $region23: #{tpu_custom_call.1} parent=1 // pred_check_branch
      %45 = sbr.rel (0) target = $region25
    $region24: #{tpu_custom_call.1} parent=1 // pred_region
      %s47 = ssub.s32 512, 512
      %48 = vsyncadd [#allocation8], %s47
      %s49 = sshll.u32 [#allocation7], 4
      %s50 = int_to_ptr.vmem [resolvable:$true] %s49
      %55 = dma.hbm_to_vmem [thread:$0]  %s5, 512, %s50, [#allocation8], 128, 128, 8
    $region25: #{tpu_custom_call.1} parent=1 // pred_fallthru
      _
    // Predicated region
    $region26: #{tpu_custom_call.1} parent=1 // pred_check
      _
    $region27: #{tpu_custom_call.1} parent=1 // pred_check_branch
      %57 = sbr.rel (0) target = $region29
    $region28: #{tpu_custom_call.1} parent=1 // pred_region
      %s59 = ssub.s32 512, 512
      %60 = vsyncadd [#allocation8], %s59
      %s61 = sshll.u32 [#allocation9], 4
      %s62 = int_to_ptr.vmem [resolvable:$true] %s61
      %67 = dma.hbm_to_vmem [thread:$0]  %s6, 512, %s62, [#allocation8], 128, 128, 8
    $region29: #{tpu_custom_call.1} parent=1 // pred_fallthru
      _
    // Predicated region
    $region30: #{tpu_custom_call.1} parent=1 // pred_check
      _
    $region31: #{tpu_custom_call.1} parent=1 // pred_check_branch
      %69 = sbr.rel (0) target = $region33
    $region32: #{tpu_custom_call.1} parent=1 // pred_region
      _
    $region33: #{tpu_custom_call.1} parent=1 // pred_fallthru
      _
    // Predicated region
    $region34: #{tpu_custom_call.1} parent=1 // pred_check
      _
    $region35: #{tpu_custom_call.1} parent=1 // pred_check_branch
      %71 = sbr.rel (0) target = $region37
    $region36: #{tpu_custom_call.1} parent=1 // pred_region
      %s73 = ssub.s32 512, 512
      %74 = vsyncadd [#allocation11], %s73
      %s75 = sshll.u32 [#allocation10], 4
      %s76 = int_to_ptr.vmem [resolvable:$true] %s75
      %81 = dma.hbm_to_vmem [thread:$0]  %s8, 512, %s76, [#allocation11], 128, 128, 8
    $region37: #{tpu_custom_call.1} parent=1 // pred_fallthru
      _
    // Predicated region
    $region38: #{tpu_custom_call.1} parent=1 // pred_check
      _
    $region39: #{tpu_custom_call.1} parent=1 // pred_check_branch
      %83 = sbr.rel (0) target = $region41
    $region40: #{tpu_custom_call.1} parent=1 // pred_region
      _
    $region41: #{tpu_custom_call.1} parent=1 // pred_fallthru
      _
    // Predicated region
    $region42: #{tpu_custom_call.1} parent=1 // pred_check
      _
    $region43: #{tpu_custom_call.1} parent=1 // pred_check_branch
      %85 = sbr.rel (0) target = $region45
    $region44: #{tpu_custom_call.1} parent=1 // pred_region
      _
    $region45: #{tpu_custom_call.1} parent=1 // pred_fallthru
      _
    // Predicated region
    $region46: #{tpu_custom_call.1} parent=1 // pred_check
      _
    $region47: #{tpu_custom_call.1} parent=1 // pred_check_branch
      %87 = sbr.rel (0) target = $region49
    $region48: #{tpu_custom_call.1} parent=1 // pred_region
      _
    $region49: #{tpu_custom_call.1} parent=1 // pred_fallthru
      _
    // Predicated region
    $region50: #{tpu_custom_call.1} parent=1 // pred_check
      _
    $region51: #{tpu_custom_call.1} parent=1 // pred_check_branch
      %89 = sbr.rel (0) target = $region53
    $region52: #{tpu_custom_call.1} parent=1 // pred_region
      _
    $region53: #{tpu_custom_call.1} parent=1 // pred_fallthru
      _
    // Predicated region
    $region54: #{tpu_custom_call.1} parent=1 // pred_check
      _
    $region55: #{tpu_custom_call.1} parent=1 // pred_check_branch
      %91 = sbr.rel (0) target = $region57
    $region56: #{tpu_custom_call.1} parent=1 // pred_region
      _
    $region57: #{tpu_custom_call.1} parent=1 // pred_fallthru
      _
    // Predicated region
    $region58: #{tpu_custom_call.1} parent=1 // pred_check
      _
    $region59: #{tpu_custom_call.1} parent=1 // pred_check_branch
      %93 = sbr.rel (0) target = $region61
    $region60: #{tpu_custom_call.1} parent=1 // pred_region
      %94 = dma.done [#allocation6], 512
    $region61: #{tpu_custom_call.1} parent=1 // pred_fallthru
      _
    // Predicated region
    $region62: #{tpu_custom_call.1} parent=1 // pred_check
      _
    $region63: #{tpu_custom_call.1} parent=1 // pred_check_branch
      %96 = sbr.rel (0) target = $region65
    $region64: #{tpu_custom_call.1} parent=1 // pred_region
      %97 = dma.done [#allocation8], 512
    $region65: #{tpu_custom_call.1} parent=1 // pred_fallthru
      _
    // Predicated region
    $region66: #{tpu_custom_call.1} parent=1 // pred_check
      _
    $region67: #{tpu_custom_call.1} parent=1 // pred_check_branch
      %99 = sbr.rel (0) target = $region69
    $region68: #{tpu_custom_call.1} parent=1 // pred_region
      %100 = dma.done [#allocation8], 512
    $region69: #{tpu_custom_call.1} parent=1 // pred_fallthru
      _
    // Predicated region
    $region70: #{tpu_custom_call.1} parent=1 // pred_check
      _
    $region71: #{tpu_custom_call.1} parent=1 // pred_check_branch
      %102 = sbr.rel (0) target = $region73
    $region72: #{tpu_custom_call.1} parent=1 // pred_region
      %103 = dma.done [#allocation11], 512
    $region73: #{tpu_custom_call.1} parent=1 // pred_fallthru
      _
    %v104 = vld [vmem:[%s0] sm:$0xff]
    %v105 = vld [vmem:[%s0 + $0x8] sm:$0xff]
    %v106 = vld [vmem:[%s0 + $0x10] sm:$0xff]
    %v107 = vld [vmem:[%s0 + $0x18] sm:$0xff]
    %v108 = vld [vmem:[%s0 + $0x20] sm:$0xff]
    %v109 = vld [vmem:[%s0 + $0x28] sm:$0xff]
    %v110 = vld [vmem:[%s0 + $0x30] sm:$0xff]
    %v111 = vld [vmem:[%s0 + $0x38] sm:$0xff]
    %v112 = vld [vmem:[%s2] sm:$0xff]
    %v113 = vld [vmem:[%s2 + $0x8] sm:$0xff]
    %v114 = vld [vmem:[%s2 + $0x10] sm:$0xff]
    %v115 = vld [vmem:[%s2 + $0x18] sm:$0xff]
    %v116 = vld [vmem:[%s4] sm:$0x1]
    %v118 = vlaneseq
    %v119 = vshrl.u32 %v118, 7
    %v120 = vsub.s32 0, %v119
    %v121 = vrot.slane %v116, %v120
    %vm123 = vcmask 261120
    %v125 = vsel %vm123, %v104, 0
    %v128 = vsel %vm123, %v105, 0
    %v131 = vsel %vm123, %v106, 0
    %v134 = vsel %vm123, %v107, 0
    %v137 = vsel %vm123, %v108, 0
    %v140 = vsel %vm123, %v109, 0
    %v143 = vsel %vm123, %v110, 0
    %v146 = vsel %vm123, %v111, 0
    %148 = vmatprep.subr.mxu0 0.0
    %149 = vmatpush1.msra.mxu0 %v112
    %150 = vmatprep.subr.mxu0 0.0
    %151 = vmatpush1.msra.mxu0 %v113
    %152 = vmatprep.subr.mxu0 0.0
    %153 = vmatpush1.msra.mxu0 %v114
    %154 = vmatprep.subr.mxu0 0.0
    %155 = vmatpush1.msra.mxu0 %v115
    %156 = vmatprep.subr.mxu0 0.0
    %157 = vmatpush1.msra.mxu0 0.0
    %158 = vmatprep.subr.mxu0 0.0
    %159 = vmatpush1.msra.mxu0 0.0
    %160 = vmatprep.subr.mxu0 0.0
    %161 = vmatpush1.msra.mxu0 0.0
    %162 = vmatprep.subr.mxu0 0.0
    %163 = vmatpush1.msra.mxu0 0.0
    %164 = vmatprep.subr.mxu0 0.0
    %165 = vmatpush1.msra.mxu0 0.0
    %166 = vmatprep.subr.mxu0 0.0
    %167 = vmatpush1.msra.mxu0 0.0
    %168 = vmatprep.subr.mxu0 0.0
    %169 = vmatpush1.msra.mxu0 0.0
    %170 = vmatprep.subr.mxu0 0.0
    %171 = vmatpush1.msra.mxu0 0.0
    %172 = vmatprep.subr.mxu0 0.0
    %173 = vmatpush1.msra.mxu0 0.0
    %174 = vmatprep.subr.mxu0 0.0
    %175 = vmatpush1.msra.mxu0 0.0
    %176 = vmatprep.subr.mxu0 0.0
    %177 = vmatpush1.msra.mxu0 0.0
    %178 = vmatprep.subr.mxu0 0.0
    %179 = vmatpush1.msra.mxu0 0.0
    %180 = vmatprep.subr.mxu0 0.0
    %181 = vmatpush1.msra.mxu0 0.0
    %182 = vmatprep.subr.mxu0 0.0
    %183 = vmatpush1.msra.mxu0 0.0
    %184 = vmatprep.subr.mxu0 0.0
    %185 = vmatpush1.msra.mxu0 0.0
    %186 = vmatprep.subr.mxu0 0.0
    %187 = vmatpush1.msra.mxu0 0.0
    %188 = vmatprep.subr.mxu0 0.0
    %189 = vmatpush1.msra.mxu0 0.0
    %190 = vmatprep.subr.mxu0 0.0
    %191 = vmatpush1.msra.mxu0 0.0
    %192 = vmatprep.subr.mxu0 0.0
    %193 = vmatpush1.msra.mxu0 0.0
    %194 = vmatprep.subr.mxu0 0.0
    %195 = vmatpush1.msra.mxu0 0.0
    %196 = vmatprep.subr.mxu0 0.0
    %197 = vmatpush1.msra.mxu0 0.0
    %198 = vmatprep.subr.mxu0 0.0
    %199 = vmatpush1.msra.mxu0 0.0
    %200 = vmatprep.subr.mxu0 0.0
    %201 = vmatpush1.msra.mxu0 0.0
    %202 = vmatprep.subr.mxu0 0.0
    %203 = vmatpush1.msra.mxu0 0.0
    %204 = vmatprep.subr.mxu0 0.0
    %205 = vmatpush1.msra.mxu0 0.0
    %206 = vmatprep.subr.mxu0 0.0
    %207 = vmatpush1.msra.mxu0 0.0
    %208 = vmatprep.subr.mxu0 0.0
    %209 = vmatpush1.msra.mxu0 0.0
    %210 = vmatprep.subr.mxu0 0.0
    %211 = vmatpush1.msra.mxu0 0.0
    %212 = vmatprep.mubr.f32.mxu0 0.0
    %213 = vmatmul.mubr.f32.gmra.mrb[0].mxu0 %v125
    %v214 = vpop.f32.mrb[0].mxu0
    %v215 = vadd.f32 %v121, %v214
    %v216 = vpop.f32.mrb[0].mxu0
    %217 = vmatprep.mubr.f32.mxu0 0.0
    %218 = vmatmul.mubr.f32.gmra.mrb[0].mxu0 %v128
    %v219 = vpop.f32.mrb[0].mxu0
    %v220 = vadd.f32 %v121, %v219
    %v221 = vpop.f32.mrb[0].mxu0
    %222 = vmatprep.mubr.f32.mxu0 0.0
    %223 = vmatmul.mubr.f32.gmra.mrb[0].mxu0 %v131
    %v224 = vpop.f32.mrb[0].mxu0
    %v225 = vadd.f32 %v121, %v224
    %v226 = vpop.f32.mrb[0].mxu0
    %227 = vmatprep.mubr.f32.mxu0 0.0
    %228 = vmatmul.mubr.f32.gmra.mrb[0].mxu0 %v134
    %v229 = vpop.f32.mrb[0].mxu0
    %v230 = vadd.f32 %v121, %v229
    %v231 = vpop.f32.mrb[0].mxu0
    %232 = vmatprep.mubr.f32.mxu0 0.0
    %233 = vmatmul.mubr.f32.gmra.mrb[0].mxu0 %v137
    %v234 = vpop.f32.mrb[0].mxu0
    %v235 = vadd.f32 %v121, %v234
    %v236 = vpop.f32.mrb[0].mxu0
    %237 = vmatprep.mubr.f32.mxu0 0.0
    %238 = vmatmul.mubr.f32.gmra.mrb[0].mxu0 %v140
    %v239 = vpop.f32.mrb[0].mxu0
    %v240 = vadd.f32 %v121, %v239
    %v241 = vpop.f32.mrb[0].mxu0
    %242 = vmatprep.mubr.f32.mxu0 0.0
    %243 = vmatmul.mubr.f32.gmra.mrb[0].mxu0 %v143
    %v244 = vpop.f32.mrb[0].mxu0
    %v245 = vadd.f32 %v121, %v244
    %v246 = vpop.f32.mrb[0].mxu0
    %247 = vmatprep.mubr.f32.mxu0 0.0
    %248 = vmatmul.mubr.f32.gmra.mrb[0].mxu0 %v146
    %v249 = vpop.f32.mrb[0].mxu0
    %v250 = vadd.f32 %v121, %v249
    %v251 = vpop.f32.mrb[0].mxu0
    %252 = vdwg.mxu0
    %253 = vst [vmem:[#allocation2] sm:$0xff] %v215
    %254 = vst [vmem:[#allocation2 + $0x8] sm:$0xff] %v220
    %255 = vst [vmem:[#allocation2 + $0x10] sm:$0xff] %v225
    %256 = vst [vmem:[#allocation2 + $0x18] sm:$0xff] %v230
    %257 = vst [vmem:[#allocation2 + $0x20] sm:$0xff] %v235
    %258 = vst [vmem:[#allocation2 + $0x28] sm:$0xff] %v240
    %259 = vst [vmem:[#allocation2 + $0x30] sm:$0xff] %v245
    %260 = vst [vmem:[#allocation2 + $0x38] sm:$0xff] %v250
    %v261 = vld [vmem:[#allocation5] sm:$0xff]
    %v262 = vld [vmem:[#allocation5 + $0x8] sm:$0xff]
    %v263 = vld [vmem:[#allocation5 + $0x10] sm:$0xff]
    %v264 = vld [vmem:[#allocation5 + $0x18] sm:$0xff]
    %v265 = vld [vmem:[#allocation9] sm:$0xff]
    %v266 = vld [vmem:[#allocation9 + $0x8] sm:$0xff]
    %v267 = vld [vmem:[#allocation9 + $0x10] sm:$0xff]
    %v268 = vld [vmem:[#allocation9 + $0x18] sm:$0xff]
    %v269 = vld [vmem:[%s1] sm:$0xff]
    %v270 = vld [vmem:[#allocation2] sm:$0xff]
    %v272 = vsel %vm123, 0.0, 0
    %274 = vmatprep.subr.mxu0 0.0
    %275 = vmatpush1.msra.mxu0 %v261
    %276 = vmatprep.subr.mxu0 0.0
    %277 = vmatpush1.msra.mxu0 %v262
    %278 = vmatprep.subr.mxu0 0.0
    %279 = vmatpush1.msra.mxu0 %v263
    %280 = vmatprep.subr.mxu0 0.0
    %281 = vmatpush1.msra.mxu0 %v264
    %282 = vmatprep.subr.mxu0 0.0
    %283 = vmatpush1.msra.mxu0 0.0
    %284 = vmatprep.subr.mxu0 0.0
    %285 = vmatpush1.msra.mxu0 0.0
    %286 = vmatprep.subr.mxu0 0.0
    %287 = vmatpush1.msra.mxu0 0.0
    %288 = vmatprep.subr.mxu0 0.0
    %289 = vmatpush1.msra.mxu0 0.0
    %290 = vmatprep.subr.mxu0 0.0
    %291 = vmatpush1.msra.mxu0 0.0
    %292 = vmatprep.subr.mxu0 0.0
    %293 = vmatpush1.msra.mxu0 0.0
    %294 = vmatprep.subr.mxu0 0.0
    %295 = vmatpush1.msra.mxu0 0.0
    %296 = vmatprep.subr.mxu0 0.0
    %297 = vmatpush1.msra.mxu0 0.0
    %298 = vmatprep.subr.mxu0 0.0
    %299 = vmatpush1.msra.mxu0 0.0
    %300 = vmatprep.subr.mxu0 0.0
    %301 = vmatpush1.msra.mxu0 0.0
    %302 = vmatprep.subr.mxu0 0.0
    %303 = vmatpush1.msra.mxu0 0.0
    %304 = vmatprep.subr.mxu0 0.0
    %305 = vmatpush1.msra.mxu0 0.0
    %306 = vmatprep.subr.mxu0 0.0
    %307 = vmatpush1.msra.mxu0 0.0
    %308 = vmatprep.subr.mxu0 0.0
    %309 = vmatpush1.msra.mxu0 0.0
    %310 = vmatprep.subr.mxu0 0.0
    %311 = vmatpush1.msra.mxu0 0.0
    %312 = vmatprep.subr.mxu0 0.0
    %313 = vmatpush1.msra.mxu0 0.0
    %314 = vmatprep.subr.mxu0 0.0
    %315 = vmatpush1.msra.mxu0 0.0
    %316 = vmatprep.subr.mxu0 0.0
    %317 = vmatpush1.msra.mxu0 0.0
    %318 = vmatprep.subr.mxu0 0.0
    %319 = vmatpush1.msra.mxu0 0.0
    %320 = vmatprep.subr.mxu0 0.0
    %321 = vmatpush1.msra.mxu0 0.0
    %322 = vmatprep.subr.mxu0 0.0
    %323 = vmatpush1.msra.mxu0 0.0
    %324 = vmatprep.subr.mxu0 0.0
    %325 = vmatpush1.msra.mxu0 0.0
    %326 = vmatprep.subr.mxu0 0.0
    %327 = vmatpush1.msra.mxu0 0.0
    %328 = vmatprep.subr.mxu0 0.0
    %329 = vmatpush1.msra.mxu0 0.0
    %330 = vmatprep.subr.mxu0 0.0
    %331 = vmatpush1.msra.mxu0 0.0
    %332 = vmatprep.subr.mxu0 0.0
    %333 = vmatpush1.msra.mxu0 0.0
    %334 = vmatprep.subr.mxu0 0.0
    %335 = vmatpush1.msra.mxu0 0.0
    %336 = vmatprep.subr.mxu0 0.0
    %337 = vmatpush1.msra.mxu0 0.0
    %338 = vmatprep.mubr.f32.mxu0 0.0
    %339 = vmatmul.mubr.f32.gmra.mrb[0].mxu0 %v272
    %v340 = vpop.f32.mrb[0].mxu0
    %v341 = vadd.f32 0.0, %v340
    %v342 = vpop.f32.mrb[0].mxu0
    %343 = vdwg.mxu0
    %v344 = vadd.f32 %v270, %v341
    %v345 = vxor.u32 %v344, 2147483648
    %v346 = vmul.f32 %v345, 1.442695
    %v347 = vpow.pop %v346
    %v348 = vadd.f32 %v347, 1.0
    %v349 = vrcp.pop %v348
    %v350 = vmul.f32 1.0, %v349
    %v351 = vtanh.pop %v344
    %v352 = vmul.f32 %v350, 0.0
    %354 = vrot.lane.b32.xlu0 %v351, 32
    %v355 = vpop.permute.xlu0 %354
    %v357 = vmul.f32 %v350, %v355
    %359 = vrot.lane.b32.xlu0 %v357, 32
    %v360 = vpop.permute.xlu0 %359
    %v362 = vadd.f32 %v352, %v360
    %v363 = vtanh.pop %v362
    %365 = vrot.lane.b32.xlu0 %v363, 32
    %v366 = vpop.permute.xlu0 %365
    %v368 = vmul.f32 %v350, %v366
    %370 = vrot.lane.b32.xlu0 %v368, 64
    %v371 = vpop.permute.xlu0 %370
    %373 = vst.msk [vmem:[#allocation3] sm:$0xff] %vm123, %v371
    %s374 = scalar_lea.vmem [#allocation2], 8
    %v375 = vld [vmem:[%s374] sm:$0xff]
    %v376 = vsel %vm123, %v371, 0
    %378 = vmatprep.subr.mxu0 0.0
    %379 = vmatpush1.msra.mxu0 %v261
    %380 = vmatprep.subr.mxu0 0.0
    %381 = vmatpush1.msra.mxu0 %v262
    %382 = vmatprep.subr.mxu0 0.0
    %383 = vmatpush1.msra.mxu0 %v263
    %384 = vmatprep.subr.mxu0 0.0
    %385 = vmatpush1.msra.mxu0 %v264
    %386 = vmatprep.subr.mxu0 0.0
    %387 = vmatpush1.msra.mxu0 0.0
    %388 = vmatprep.subr.mxu0 0.0
    %389 = vmatpush1.msra.mxu0 0.0
    %390 = vmatprep.subr.mxu0 0.0
    %391 = vmatpush1.msra.mxu0 0.0
    %392 = vmatprep.subr.mxu0 0.0
    %393 = vmatpush1.msra.mxu0 0.0
    %394 = vmatprep.subr.mxu0 0.0
    %395 = vmatpush1.msra.mxu0 0.0
    %396 = vmatprep.subr.mxu0 0.0
    %397 = vmatpush1.msra.mxu0 0.0
    %398 = vmatprep.subr.mxu0 0.0
    %399 = vmatpush1.msra.mxu0 0.0
    %400 = vmatprep.subr.mxu0 0.0
    %401 = vmatpush1.msra.mxu0 0.0
    %402 = vmatprep.subr.mxu0 0.0
    %403 = vmatpush1.msra.mxu0 0.0
    %404 = vmatprep.subr.mxu0 0.0
    %405 = vmatpush1.msra.mxu0 0.0
    %406 = vmatprep.subr.mxu0 0.0
    %407 = vmatpush1.msra.mxu0 0.0
    %408 = vmatprep.subr.mxu0 0.0
    %409 = vmatpush1.msra.mxu0 0.0
    %410 = vmatprep.subr.mxu0 0.0
    %411 = vmatpush1.msra.mxu0 0.0
    %412 = vmatprep.subr.mxu0 0.0
    %413 = vmatpush1.msra.mxu0 0.0
    %414 = vmatprep.subr.mxu0 0.0
    %415 = vmatpush1.msra.mxu0 0.0
    %416 = vmatprep.subr.mxu0 0.0
    %417 = vmatpush1.msra.mxu0 0.0
    %418 = vmatprep.subr.mxu0 0.0
    %419 = vmatpush1.msra.mxu0 0.0
    %420 = vmatprep.subr.mxu0 0.0
    %421 = vmatpush1.msra.mxu0 0.0
    %422 = vmatprep.subr.mxu0 0.0
    %423 = vmatpush1.msra.mxu0 0.0
    %424 = vmatprep.subr.mxu0 0.0
    %425 = vmatpush1.msra.mxu0 0.0
    %426 = vmatprep.subr.mxu0 0.0
    %427 = vmatpush1.msra.mxu0 0.0
    %428 = vmatprep.subr.mxu0 0.0
    %429 = vmatpush1.msra.mxu0 0.0
    %430 = vmatprep.subr.mxu0 0.0
    %431 = vmatpush1.msra.mxu0 0.0
    %432 = vmatprep.subr.mxu0 0.0
    %433 = vmatpush1.msra.mxu0 0.0
    %434 = vmatprep.subr.mxu0 0.0
    %435 = vmatpush1.msra.mxu0 0.0
    %436 = vmatprep.subr.mxu0 0.0
    %437 = vmatpush1.msra.mxu0 0.0
    %438 = vmatprep.subr.mxu0 0.0
    %439 = vmatpush1.msra.mxu0 0.0
    %440 = vmatprep.subr.mxu0 0.0
    %441 = vmatpush1.msra.mxu0 0.0
    %442 = vmatprep.mubr.f32.mxu0 0.0
    %443 = vmatmul.mubr.f32.gmra.mrb[0].mxu0 %v376
    %v444 = vpop.f32.mrb[0].mxu0
    %v445 = vadd.f32 0.0, %v444
    %v446 = vpop.f32.mrb[0].mxu0
    %447 = vdwg.mxu0
    %v448 = vadd.f32 %v375, %v445
    %v449 = vxor.u32 %v448, 2147483648
    %v450 = vmul.f32 %v449, 1.442695
    %v451 = vpow.pop %v450
    %v452 = vadd.f32 %v451, 1.0
    %v453 = vrcp.pop %v452
    %v454 = vmul.f32 1.0, %v453
    %v455 = vtanh.pop %v448
    %v456 = vmul.f32 %v454, %v362
    %458 = vrot.lane.b32.xlu0 %v455, 32
    %v459 = vpop.permute.xlu0 %458
    %v461 = vmul.f32 %v454, %v459
    %463 = vrot.lane.b32.xlu0 %v461, 32
    %v464 = vpop.permute.xlu0 %463
    %v466 = vadd.f32 %v456, %v464
    %v467 = vtanh.pop %v466
    %469 = vrot.lane.b32.xlu0 %v467, 32
    %v470 = vpop.permute.xlu0 %469
    %v472 = vmul.f32 %v454, %v470
    %474 = vrot.lane.b32.xlu0 %v472, 64
    %v475 = vpop.permute.xlu0 %474
    %s477 = scalar_lea.vmem [#allocation3], 8
    %478 = vst.msk [vmem:[%s477] sm:$0xff] %vm123, %v475
    %s479 = scalar_lea.vmem [#allocation2], 16
    %v480 = vld [vmem:[%s479] sm:$0xff]
    %v481 = vsel %vm123, %v475, 0
    %483 = vmatprep.subr.mxu0 0.0
    %484 = vmatpush1.msra.mxu0 %v261
    %485 = vmatprep.subr.mxu0 0.0
    %486 = vmatpush1.msra.mxu0 %v262
    %487 = vmatprep.subr.mxu0 0.0
    %488 = vmatpush1.msra.mxu0 %v263
    %489 = vmatprep.subr.mxu0 0.0
    %490 = vmatpush1.msra.mxu0 %v264
    %491 = vmatprep.subr.mxu0 0.0
    %492 = vmatpush1.msra.mxu0 0.0
    %493 = vmatprep.subr.mxu0 0.0
    %494 = vmatpush1.msra.mxu0 0.0
    %495 = vmatprep.subr.mxu0 0.0
    %496 = vmatpush1.msra.mxu0 0.0
    %497 = vmatprep.subr.mxu0 0.0
    %498 = vmatpush1.msra.mxu0 0.0
    %499 = vmatprep.subr.mxu0 0.0
    %500 = vmatpush1.msra.mxu0 0.0
    %501 = vmatprep.subr.mxu0 0.0
    %502 = vmatpush1.msra.mxu0 0.0
    %503 = vmatprep.subr.mxu0 0.0
    %504 = vmatpush1.msra.mxu0 0.0
    %505 = vmatprep.subr.mxu0 0.0
    %506 = vmatpush1.msra.mxu0 0.0
    %507 = vmatprep.subr.mxu0 0.0
    %508 = vmatpush1.msra.mxu0 0.0
    %509 = vmatprep.subr.mxu0 0.0
    %510 = vmatpush1.msra.mxu0 0.0
    %511 = vmatprep.subr.mxu0 0.0
    %512 = vmatpush1.msra.mxu0 0.0
    %513 = vmatprep.subr.mxu0 0.0
    %514 = vmatpush1.msra.mxu0 0.0
    %515 = vmatprep.subr.mxu0 0.0
    %516 = vmatpush1.msra.mxu0 0.0
    %517 = vmatprep.subr.mxu0 0.0
    %518 = vmatpush1.msra.mxu0 0.0
    %519 = vmatprep.subr.mxu0 0.0
    %520 = vmatpush1.msra.mxu0 0.0
    %521 = vmatprep.subr.mxu0 0.0
    %522 = vmatpush1.msra.mxu0 0.0
    %523 = vmatprep.subr.mxu0 0.0
    %524 = vmatpush1.msra.mxu0 0.0
    %525 = vmatprep.subr.mxu0 0.0
    %526 = vmatpush1.msra.mxu0 0.0
    %527 = vmatprep.subr.mxu0 0.0
    %528 = vmatpush1.msra.mxu0 0.0
    %529 = vmatprep.subr.mxu0 0.0
    %530 = vmatpush1.msra.mxu0 0.0
    %531 = vmatprep.subr.mxu0 0.0
    %532 = vmatpush1.msra.mxu0 0.0
    %533 = vmatprep.subr.mxu0 0.0
    %534 = vmatpush1.msra.mxu0 0.0
    %535 = vmatprep.subr.mxu0 0.0
    %536 = vmatpush1.msra.mxu0 0.0
    %537 = vmatprep.subr.mxu0 0.0
    %538 = vmatpush1.msra.mxu0 0.0
    %539 = vmatprep.subr.mxu0 0.0
    %540 = vmatpush1.msra.mxu0 0.0
    %541 = vmatprep.subr.mxu0 0.0
    %542 = vmatpush1.msra.mxu0 0.0
    %543 = vmatprep.subr.mxu0 0.0
    %544 = vmatpush1.msra.mxu0 0.0
    %545 = vmatprep.subr.mxu0 0.0
    %546 = vmatpush1.msra.mxu0 0.0
    %547 = vmatprep.mubr.f32.mxu0 0.0
    %548 = vmatmul.mubr.f32.gmra.mrb[0].mxu0 %v481
    %v549 = vpop.f32.mrb[0].mxu0
    %v550 = vadd.f32 0.0, %v549
    %v551 = vpop.f32.mrb[0].mxu0
    %552 = vdwg.mxu0
    %v553 = vadd.f32 %v480, %v550
    %v554 = vxor.u32 %v553, 2147483648
    %v555 = vmul.f32 %v554, 1.442695
    %v556 = vpow.pop %v555
    %v557 = vadd.f32 %v556, 1.0
    %v558 = vrcp.pop %v557
    %v559 = vmul.f32 1.0, %v558
    %v560 = vtanh.pop %v553
    %v561 = vmul.f32 %v559, %v466
    %563 = vrot.lane.b32.xlu0 %v560, 32
    %v564 = vpop.permute.xlu0 %563
    %v566 = vmul.f32 %v559, %v564
    %568 = vrot.lane.b32.xlu0 %v566, 32
    %v569 = vpop.permute.xlu0 %568
    %v571 = vadd.f32 %v561, %v569
    %v572 = vtanh.pop %v571
    %574 = vrot.lane.b32.xlu0 %v572, 32
    %v575 = vpop.permute.xlu0 %574
    %v577 = vmul.f32 %v559, %v575
    %579 = vrot.lane.b32.xlu0 %v577, 64
    %v580 = vpop.permute.xlu0 %579
    %s582 = scalar_lea.vmem [#allocation3], 16
    %583 = vst.msk [vmem:[%s582] sm:$0xff] %vm123, %v580
    %s584 = scalar_lea.vmem [#allocation2], 24
    %v585 = vld [vmem:[%s584] sm:$0xff]
    %v586 = vsel %vm123, %v580, 0
    %588 = vmatprep.subr.mxu0 0.0
    %589 = vmatpush1.msra.mxu0 %v261
    %590 = vmatprep.subr.mxu0 0.0
    %591 = vmatpush1.msra.mxu0 %v262
    %592 = vmatprep.subr.mxu0 0.0
    %593 = vmatpush1.msra.mxu0 %v263
    %594 = vmatprep.subr.mxu0 0.0
    %595 = vmatpush1.msra.mxu0 %v264
    %596 = vmatprep.subr.mxu0 0.0
    %597 = vmatpush1.msra.mxu0 0.0
    %598 = vmatprep.subr.mxu0 0.0
    %599 = vmatpush1.msra.mxu0 0.0
    %600 = vmatprep.subr.mxu0 0.0
    %601 = vmatpush1.msra.mxu0 0.0
    %602 = vmatprep.subr.mxu0 0.0
    %603 = vmatpush1.msra.mxu0 0.0
    %604 = vmatprep.subr.mxu0 0.0
    %605 = vmatpush1.msra.mxu0 0.0
    %606 = vmatprep.subr.mxu0 0.0
    %607 = vmatpush1.msra.mxu0 0.0
    %608 = vmatprep.subr.mxu0 0.0
    %609 = vmatpush1.msra.mxu0 0.0
    %610 = vmatprep.subr.mxu0 0.0
    %611 = vmatpush1.msra.mxu0 0.0
    %612 = vmatprep.subr.mxu0 0.0
    %613 = vmatpush1.msra.mxu0 0.0
    %614 = vmatprep.subr.mxu0 0.0
    %615 = vmatpush1.msra.mxu0 0.0
    %616 = vmatprep.subr.mxu0 0.0
    %617 = vmatpush1.msra.mxu0 0.0
    %618 = vmatprep.subr.mxu0 0.0
    %619 = vmatpush1.msra.mxu0 0.0
    %620 = vmatprep.subr.mxu0 0.0
    %621 = vmatpush1.msra.mxu0 0.0
    %622 = vmatprep.subr.mxu0 0.0
    %623 = vmatpush1.msra.mxu0 0.0
    %624 = vmatprep.subr.mxu0 0.0
    %625 = vmatpush1.msra.mxu0 0.0
    %626 = vmatprep.subr.mxu0 0.0
    %627 = vmatpush1.msra.mxu0 0.0
    %628 = vmatprep.subr.mxu0 0.0
    %629 = vmatpush1.msra.mxu0 0.0
    %630 = vmatprep.subr.mxu0 0.0
    %631 = vmatpush1.msra.mxu0 0.0
    %632 = vmatprep.subr.mxu0 0.0
    %633 = vmatpush1.msra.mxu0 0.0
    %634 = vmatprep.subr.mxu0 0.0
    %635 = vmatpush1.msra.mxu0 0.0
    %636 = vmatprep.subr.mxu0 0.0
    %637 = vmatpush1.msra.mxu0 0.0
    %638 = vmatprep.subr.mxu0 0.0
    %639 = vmatpush1.msra.mxu0 0.0
    %640 = vmatprep.subr.mxu0 0.0
    %641 = vmatpush1.msra.mxu0 0.0
    %642 = vmatprep.subr.mxu0 0.0
    %643 = vmatpush1.msra.mxu0 0.0
    %644 = vmatprep.subr.mxu0 0.0
    %645 = vmatpush1.msra.mxu0 0.0
    %646 = vmatprep.subr.mxu0 0.0
    %647 = vmatpush1.msra.mxu0 0.0
    %648 = vmatprep.subr.mxu0 0.0
    %649 = vmatpush1.msra.mxu0 0.0
    %650 = vmatprep.subr.mxu0 0.0
    %651 = vmatpush1.msra.mxu0 0.0
    %652 = vmatprep.mubr.f32.mxu0 0.0
    %653 = vmatmul.mubr.f32.gmra.mrb[0].mxu0 %v586
    %v654 = vpop.f32.mrb[0].mxu0
    %v655 = vadd.f32 0.0, %v654
    %v656 = vpop.f32.mrb[0].mxu0
    %657 = vdwg.mxu0
    %v658 = vadd.f32 %v585, %v655
    %v659 = vxor.u32 %v658, 2147483648
    %v660 = vmul.f32 %v659, 1.442695
    %v661 = vpow.pop %v660
    %v662 = vadd.f32 %v661, 1.0
    %v663 = vrcp.pop %v662
    %v664 = vmul.f32 1.0, %v663
    %v665 = vtanh.pop %v658
    %v666 = vmul.f32 %v664, %v571
    %668 = vrot.lane.b32.xlu0 %v665, 32
    %v669 = vpop.permute.xlu0 %668
    %v671 = vmul.f32 %v664, %v669
    %673 = vrot.lane.b32.xlu0 %v671, 32
    %v674 = vpop.permute.xlu0 %673
    %v676 = vadd.f32 %v666, %v674
    %v677 = vtanh.pop %v676
    %679 = vrot.lane.b32.xlu0 %v677, 32
    %v680 = vpop.permute.xlu0 %679
    %v682 = vmul.f32 %v664, %v680
    %684 = vrot.lane.b32.xlu0 %v682, 64
    %v685 = vpop.permute.xlu0 %684
    %s687 = scalar_lea.vmem [#allocation3], 24
    %688 = vst.msk [vmem:[%s687] sm:$0xff] %vm123, %v685
    %s689 = scalar_lea.vmem [#allocation2], 32
    %v690 = vld [vmem:[%s689] sm:$0xff]
    %v691 = vsel %vm123, %v685, 0
    %693 = vmatprep.subr.mxu0 0.0
    %694 = vmatpush1.msra.mxu0 %v261
    %695 = vmatprep.subr.mxu0 0.0
    %696 = vmatpush1.msra.mxu0 %v262
    %697 = vmatprep.subr.mxu0 0.0
    %698 = vmatpush1.msra.mxu0 %v263
    %699 = vmatprep.subr.mxu0 0.0
    %700 = vmatpush1.msra.mxu0 %v264
    %701 = vmatprep.subr.mxu0 0.0
    %702 = vmatpush1.msra.mxu0 0.0
    %703 = vmatprep.subr.mxu0 0.0
    %704 = vmatpush1.msra.mxu0 0.0
    %705 = vmatprep.subr.mxu0 0.0
    %706 = vmatpush1.msra.mxu0 0.0
    %707 = vmatprep.subr.mxu0 0.0
    %708 = vmatpush1.msra.mxu0 0.0
    %709 = vmatprep.subr.mxu0 0.0
    %710 = vmatpush1.msra.mxu0 0.0
    %711 = vmatprep.subr.mxu0 0.0
    %712 = vmatpush1.msra.mxu0 0.0
    %713 = vmatprep.subr.mxu0 0.0
    %714 = vmatpush1.msra.mxu0 0.0
    %715 = vmatprep.subr.mxu0 0.0
    %716 = vmatpush1.msra.mxu0 0.0
    %717 = vmatprep.subr.mxu0 0.0
    %718 = vmatpush1.msra.mxu0 0.0
    %719 = vmatprep.subr.mxu0 0.0
    %720 = vmatpush1.msra.mxu0 0.0
    %721 = vmatprep.subr.mxu0 0.0
    %722 = vmatpush1.msra.mxu0 0.0
    %723 = vmatprep.subr.mxu0 0.0
    %724 = vmatpush1.msra.mxu0 0.0
    %725 = vmatprep.subr.mxu0 0.0
    %726 = vmatpush1.msra.mxu0 0.0
    %727 = vmatprep.subr.mxu0 0.0
    %728 = vmatpush1.msra.mxu0 0.0
    %729 = vmatprep.subr.mxu0 0.0
    %730 = vmatpush1.msra.mxu0 0.0
    %731 = vmatprep.subr.mxu0 0.0
    %732 = vmatpush1.msra.mxu0 0.0
    %733 = vmatprep.subr.mxu0 0.0
    %734 = vmatpush1.msra.mxu0 0.0
    %735 = vmatprep.subr.mxu0 0.0
    %736 = vmatpush1.msra.mxu0 0.0
    %737 = vmatprep.subr.mxu0 0.0
    %738 = vmatpush1.msra.mxu0 0.0
    %739 = vmatprep.subr.mxu0 0.0
    %740 = vmatpush1.msra.mxu0 0.0
    %741 = vmatprep.subr.mxu0 0.0
    %742 = vmatpush1.msra.mxu0 0.0
    %743 = vmatprep.subr.mxu0 0.0
    %744 = vmatpush1.msra.mxu0 0.0
    %745 = vmatprep.subr.mxu0 0.0
    %746 = vmatpush1.msra.mxu0 0.0
    %747 = vmatprep.subr.mxu0 0.0
    %748 = vmatpush1.msra.mxu0 0.0
    %749 = vmatprep.subr.mxu0 0.0
    %750 = vmatpush1.msra.mxu0 0.0
    %751 = vmatprep.subr.mxu0 0.0
    %752 = vmatpush1.msra.mxu0 0.0
    %753 = vmatprep.subr.mxu0 0.0
    %754 = vmatpush1.msra.mxu0 0.0
    %755 = vmatprep.subr.mxu0 0.0
    %756 = vmatpush1.msra.mxu0 0.0
    %757 = vmatprep.mubr.f32.mxu0 0.0
    %758 = vmatmul.mubr.f32.gmra.mrb[0].mxu0 %v691
    %v759 = vpop.f32.mrb[0].mxu0
    %v760 = vadd.f32 0.0, %v759
    %v761 = vpop.f32.mrb[0].mxu0
    %762 = vdwg.mxu0
    %v763 = vadd.f32 %v690, %v760
    %v764 = vxor.u32 %v763, 2147483648
    %v765 = vmul.f32 %v764, 1.442695
    %v766 = vpow.pop %v765
    %v767 = vadd.f32 %v766, 1.0
    %v768 = vrcp.pop %v767
    %v769 = vmul.f32 1.0, %v768
    %v770 = vtanh.pop %v763
    %v771 = vmul.f32 %v769, %v676
    %773 = vrot.lane.b32.xlu0 %v770, 32
    %v774 = vpop.permute.xlu0 %773
    %v776 = vmul.f32 %v769, %v774
    %778 = vrot.lane.b32.xlu0 %v776, 32
    %v779 = vpop.permute.xlu0 %778
    %v781 = vadd.f32 %v771, %v779
    %v782 = vtanh.pop %v781
    %784 = vrot.lane.b32.xlu0 %v782, 32
    %v785 = vpop.permute.xlu0 %784
    %v787 = vmul.f32 %v769, %v785
    %789 = vrot.lane.b32.xlu0 %v787, 64
    %v790 = vpop.permute.xlu0 %789
    %s792 = scalar_lea.vmem [#allocation3], 32
    %793 = vst.msk [vmem:[%s792] sm:$0xff] %vm123, %v790
    %s794 = scalar_lea.vmem [#allocation2], 40
    %v795 = vld [vmem:[%s794] sm:$0xff]
    %v796 = vsel %vm123, %v790, 0
    %798 = vmatprep.subr.mxu0 0.0
    %799 = vmatpush1.msra.mxu0 %v261
    %800 = vmatprep.subr.mxu0 0.0
    %801 = vmatpush1.msra.mxu0 %v262
    %802 = vmatprep.subr.mxu0 0.0
    %803 = vmatpush1.msra.mxu0 %v263
    %804 = vmatprep.subr.mxu0 0.0
    %805 = vmatpush1.msra.mxu0 %v264
    %806 = vmatprep.subr.mxu0 0.0
    %807 = vmatpush1.msra.mxu0 0.0
    %808 = vmatprep.subr.mxu0 0.0
    %809 = vmatpush1.msra.mxu0 0.0
    %810 = vmatprep.subr.mxu0 0.0
    %811 = vmatpush1.msra.mxu0 0.0
    %812 = vmatprep.subr.mxu0 0.0
    %813 = vmatpush1.msra.mxu0 0.0
    %814 = vmatprep.subr.mxu0 0.0
    %815 = vmatpush1.msra.mxu0 0.0
    %816 = vmatprep.subr.mxu0 0.0
    %817 = vmatpush1.msra.mxu0 0.0
    %818 = vmatprep.subr.mxu0 0.0
    %819 = vmatpush1.msra.mxu0 0.0
    %820 = vmatprep.subr.mxu0 0.0
    %821 = vmatpush1.msra.mxu0 0.0
    %822 = vmatprep.subr.mxu0 0.0
    %823 = vmatpush1.msra.mxu0 0.0
    %824 = vmatprep.subr.mxu0 0.0
    %825 = vmatpush1.msra.mxu0 0.0
    %826 = vmatprep.subr.mxu0 0.0
    %827 = vmatpush1.msra.mxu0 0.0
    %828 = vmatprep.subr.mxu0 0.0
    %829 = vmatpush1.msra.mxu0 0.0
    %830 = vmatprep.subr.mxu0 0.0
    %831 = vmatpush1.msra.mxu0 0.0
    %832 = vmatprep.subr.mxu0 0.0
    %833 = vmatpush1.msra.mxu0 0.0
    %834 = vmatprep.subr.mxu0 0.0
    %835 = vmatpush1.msra.mxu0 0.0
    %836 = vmatprep.subr.mxu0 0.0
    %837 = vmatpush1.msra.mxu0 0.0
    %838 = vmatprep.subr.mxu0 0.0
    %839 = vmatpush1.msra.mxu0 0.0
    %840 = vmatprep.subr.mxu0 0.0
    %841 = vmatpush1.msra.mxu0 0.0
    %842 = vmatprep.subr.mxu0 0.0
    %843 = vmatpush1.msra.mxu0 0.0
    %844 = vmatprep.subr.mxu0 0.0
    %845 = vmatpush1.msra.mxu0 0.0
    %846 = vmatprep.subr.mxu0 0.0
    %847 = vmatpush1.msra.mxu0 0.0
    %848 = vmatprep.subr.mxu0 0.0
    %849 = vmatpush1.msra.mxu0 0.0
    %850 = vmatprep.subr.mxu0 0.0
    %851 = vmatpush1.msra.mxu0 0.0
    %852 = vmatprep.subr.mxu0 0.0
    %853 = vmatpush1.msra.mxu0 0.0
    %854 = vmatprep.subr.mxu0 0.0
    %855 = vmatpush1.msra.mxu0 0.0
    %856 = vmatprep.subr.mxu0 0.0
    %857 = vmatpush1.msra.mxu0 0.0
    %858 = vmatprep.subr.mxu0 0.0
    %859 = vmatpush1.msra.mxu0 0.0
    %860 = vmatprep.subr.mxu0 0.0
    %861 = vmatpush1.msra.mxu0 0.0
    %862 = vmatprep.mubr.f32.mxu0 0.0
    %863 = vmatmul.mubr.f32.gmra.mrb[0].mxu0 %v796
    %v864 = vpop.f32.mrb[0].mxu0
    %v865 = vadd.f32 0.0, %v864
    %v866 = vpop.f32.mrb[0].mxu0
    %867 = vdwg.mxu0
    %v868 = vadd.f32 %v795, %v865
    %v869 = vxor.u32 %v868, 2147483648
    %v870 = vmul.f32 %v869, 1.442695
    %v871 = vpow.pop %v870
    %v872 = vadd.f32 %v871, 1.0
    %v873 = vrcp.pop %v872
    %v874 = vmul.f32 1.0, %v873
    %v875 = vtanh.pop %v868
    %v876 = vmul.f32 %v874, %v781
    %878 = vrot.lane.b32.xlu0 %v875, 32
    %v879 = vpop.permute.xlu0 %878
    %v881 = vmul.f32 %v874, %v879
    %883 = vrot.lane.b32.xlu0 %v881, 32
    %v884 = vpop.permute.xlu0 %883
    %v886 = vadd.f32 %v876, %v884
    %v887 = vtanh.pop %v886
    %889 = vrot.lane.b32.xlu0 %v887, 32
    %v890 = vpop.permute.xlu0 %889
    %v892 = vmul.f32 %v874, %v890
    %894 = vrot.lane.b32.xlu0 %v892, 64
    %v895 = vpop.permute.xlu0 %894
    %s897 = scalar_lea.vmem [#allocation3], 40
    %898 = vst.msk [vmem:[%s897] sm:$0xff] %vm123, %v895
    %s899 = scalar_lea.vmem [#allocation2], 48
    %v900 = vld [vmem:[%s899] sm:$0xff]
    %v901 = vsel %vm123, %v895, 0
    %903 = vmatprep.subr.mxu0 0.0
    %904 = vmatpush1.msra.mxu0 %v261
    %905 = vmatprep.subr.mxu0 0.0
    %906 = vmatpush1.msra.mxu0 %v262
    %907 = vmatprep.subr.mxu0 0.0
    %908 = vmatpush1.msra.mxu0 %v263
    %909 = vmatprep.subr.mxu0 0.0
    %910 = vmatpush1.msra.mxu0 %v264
    %911 = vmatprep.subr.mxu0 0.0
    %912 = vmatpush1.msra.mxu0 0.0
    %913 = vmatprep.subr.mxu0 0.0
    %914 = vmatpush1.msra.mxu0 0.0
    %915 = vmatprep.subr.mxu0 0.0
    %916 = vmatpush1.msra.mxu0 0.0
    %917 = vmatprep.subr.mxu0 0.0
    %918 = vmatpush1.msra.mxu0 0.0
    %919 = vmatprep.subr.mxu0 0.0
    %920 = vmatpush1.msra.mxu0 0.0
    %921 = vmatprep.subr.mxu0 0.0
    %922 = vmatpush1.msra.mxu0 0.0
    %923 = vmatprep.subr.mxu0 0.0
    %924 = vmatpush1.msra.mxu0 0.0
    %925 = vmatprep.subr.mxu0 0.0
    %926 = vmatpush1.msra.mxu0 0.0
    %927 = vmatprep.subr.mxu0 0.0
    %928 = vmatpush1.msra.mxu0 0.0
    %929 = vmatprep.subr.mxu0 0.0
    %930 = vmatpush1.msra.mxu0 0.0
    %931 = vmatprep.subr.mxu0 0.0
    %932 = vmatpush1.msra.mxu0 0.0
    %933 = vmatprep.subr.mxu0 0.0
    %934 = vmatpush1.msra.mxu0 0.0
    %935 = vmatprep.subr.mxu0 0.0
    %936 = vmatpush1.msra.mxu0 0.0
    %937 = vmatprep.subr.mxu0 0.0
    %938 = vmatpush1.msra.mxu0 0.0
    %939 = vmatprep.subr.mxu0 0.0
    %940 = vmatpush1.msra.mxu0 0.0
    %941 = vmatprep.subr.mxu0 0.0
    %942 = vmatpush1.msra.mxu0 0.0
    %943 = vmatprep.subr.mxu0 0.0
    %944 = vmatpush1.msra.mxu0 0.0
    %945 = vmatprep.subr.mxu0 0.0
    %946 = vmatpush1.msra.mxu0 0.0
    %947 = vmatprep.subr.mxu0 0.0
    %948 = vmatpush1.msra.mxu0 0.0
    %949 = vmatprep.subr.mxu0 0.0
    %950 = vmatpush1.msra.mxu0 0.0
    %951 = vmatprep.subr.mxu0 0.0
    %952 = vmatpush1.msra.mxu0 0.0
    %953 = vmatprep.subr.mxu0 0.0
    %954 = vmatpush1.msra.mxu0 0.0
    %955 = vmatprep.subr.mxu0 0.0
    %956 = vmatpush1.msra.mxu0 0.0
    %957 = vmatprep.subr.mxu0 0.0
    %958 = vmatpush1.msra.mxu0 0.0
    %959 = vmatprep.subr.mxu0 0.0
    %960 = vmatpush1.msra.mxu0 0.0
    %961 = vmatprep.subr.mxu0 0.0
    %962 = vmatpush1.msra.mxu0 0.0
    %963 = vmatprep.subr.mxu0 0.0
    %964 = vmatpush1.msra.mxu0 0.0
    %965 = vmatprep.subr.mxu0 0.0
    %966 = vmatpush1.msra.mxu0 0.0
    %967 = vmatprep.mubr.f32.mxu0 0.0
    %968 = vmatmul.mubr.f32.gmra.mrb[0].mxu0 %v901
    %v969 = vpop.f32.mrb[0].mxu0
    %v970 = vadd.f32 0.0, %v969
    %v971 = vpop.f32.mrb[0].mxu0
    %972 = vdwg.mxu0
    %v973 = vadd.f32 %v900, %v970
    %v974 = vxor.u32 %v973, 2147483648
    %v975 = vmul.f32 %v974, 1.442695
    %v976 = vpow.pop %v975
    %v977 = vadd.f32 %v976, 1.0
    %v978 = vrcp.pop %v977
    %v979 = vmul.f32 1.0, %v978
    %v980 = vtanh.pop %v973
    %v981 = vmul.f32 %v979, %v886
    %983 = vrot.lane.b32.xlu0 %v980, 32
    %v984 = vpop.permute.xlu0 %983
    %v986 = vmul.f32 %v979, %v984
    %988 = vrot.lane.b32.xlu0 %v986, 32
    %v989 = vpop.permute.xlu0 %988
    %v991 = vadd.f32 %v981, %v989
    %v992 = vtanh.pop %v991
    %994 = vrot.lane.b32.xlu0 %v992, 32
    %v995 = vpop.permute.xlu0 %994
    %v997 = vmul.f32 %v979, %v995
    %999 = vrot.lane.b32.xlu0 %v997, 64
    %v1000 = vpop.permute.xlu0 %999
    %s1002 = scalar_lea.vmem [#allocation3], 48
    %1003 = vst.msk [vmem:[%s1002] sm:$0xff] %vm123, %v1000
    %s1004 = scalar_lea.vmem [#allocation2], 56
    %v1005 = vld [vmem:[%s1004] sm:$0xff]
    %v1006 = vsel %vm123, %v1000, 0
    %1008 = vmatprep.subr.mxu0 0.0
    %1009 = vmatpush1.msra.mxu0 %v261
    %1010 = vmatprep.subr.mxu0 0.0
    %1011 = vmatpush1.msra.mxu0 %v262
    %1012 = vmatprep.subr.mxu0 0.0
    %1013 = vmatpush1.msra.mxu0 %v263
    %1014 = vmatprep.subr.mxu0 0.0
    %1015 = vmatpush1.msra.mxu0 %v264
    %1016 = vmatprep.subr.mxu0 0.0
    %1017 = vmatpush1.msra.mxu0 0.0
    %1018 = vmatprep.subr.mxu0 0.0
    %1019 = vmatpush1.msra.mxu0 0.0
    %1020 = vmatprep.subr.mxu0 0.0
    %1021 = vmatpush1.msra.mxu0 0.0
    %1022 = vmatprep.subr.mxu0 0.0
    %1023 = vmatpush1.msra.mxu0 0.0
    %1024 = vmatprep.subr.mxu0 0.0
    %1025 = vmatpush1.msra.mxu0 0.0
    %1026 = vmatprep.subr.mxu0 0.0
    %1027 = vmatpush1.msra.mxu0 0.0
    %1028 = vmatprep.subr.mxu0 0.0
    %1029 = vmatpush1.msra.mxu0 0.0
    %1030 = vmatprep.subr.mxu0 0.0
    %1031 = vmatpush1.msra.mxu0 0.0
    %1032 = vmatprep.subr.mxu0 0.0
    %1033 = vmatpush1.msra.mxu0 0.0
    %1034 = vmatprep.subr.mxu0 0.0
    %1035 = vmatpush1.msra.mxu0 0.0
    %1036 = vmatprep.subr.mxu0 0.0
    %1037 = vmatpush1.msra.mxu0 0.0
    %1038 = vmatprep.subr.mxu0 0.0
    %1039 = vmatpush1.msra.mxu0 0.0
    %1040 = vmatprep.subr.mxu0 0.0
    %1041 = vmatpush1.msra.mxu0 0.0
    %1042 = vmatprep.subr.mxu0 0.0
    %1043 = vmatpush1.msra.mxu0 0.0
    %1044 = vmatprep.subr.mxu0 0.0
    %1045 = vmatpush1.msra.mxu0 0.0
    %1046 = vmatprep.subr.mxu0 0.0
    %1047 = vmatpush1.msra.mxu0 0.0
    %1048 = vmatprep.subr.mxu0 0.0
    %1049 = vmatpush1.msra.mxu0 0.0
    %1050 = vmatprep.subr.mxu0 0.0
    %1051 = vmatpush1.msra.mxu0 0.0
    %1052 = vmatprep.subr.mxu0 0.0
    %1053 = vmatpush1.msra.mxu0 0.0
    %1054 = vmatprep.subr.mxu0 0.0
    %1055 = vmatpush1.msra.mxu0 0.0
    %1056 = vmatprep.subr.mxu0 0.0
    %1057 = vmatpush1.msra.mxu0 0.0
    %1058 = vmatprep.subr.mxu0 0.0
    %1059 = vmatpush1.msra.mxu0 0.0
    %1060 = vmatprep.subr.mxu0 0.0
    %1061 = vmatpush1.msra.mxu0 0.0
    %1062 = vmatprep.subr.mxu0 0.0
    %1063 = vmatpush1.msra.mxu0 0.0
    %1064 = vmatprep.subr.mxu0 0.0
    %1065 = vmatpush1.msra.mxu0 0.0
    %1066 = vmatprep.subr.mxu0 0.0
    %1067 = vmatpush1.msra.mxu0 0.0
    %1068 = vmatprep.subr.mxu0 0.0
    %1069 = vmatpush1.msra.mxu0 0.0
    %1070 = vmatprep.subr.mxu0 0.0
    %1071 = vmatpush1.msra.mxu0 0.0
    %1072 = vmatprep.mubr.f32.mxu0 0.0
    %1073 = vmatmul.mubr.f32.gmra.mrb[0].mxu0 %v1006
    %v1074 = vpop.f32.mrb[0].mxu0
    %v1075 = vadd.f32 0.0, %v1074
    %v1076 = vpop.f32.mrb[0].mxu0
    %1077 = vdwg.mxu0
    %v1078 = vadd.f32 %v1005, %v1075
    %v1079 = vxor.u32 %v1078, 2147483648
    %v1080 = vmul.f32 %v1079, 1.442695
    %v1081 = vpow.pop %v1080
    %v1082 = vadd.f32 %v1081, 1.0
    %v1083 = vrcp.pop %v1082
    %v1084 = vmul.f32 1.0, %v1083
    %v1085 = vtanh.pop %v1078
    %v1086 = vmul.f32 %v1084, %v991
    %1088 = vrot.lane.b32.xlu0 %v1085, 32
    %v1089 = vpop.permute.xlu0 %1088
    %v1091 = vmul.f32 %v1084, %v1089
    %1093 = vrot.lane.b32.xlu0 %v1091, 32
    %v1094 = vpop.permute.xlu0 %1093
    %v1096 = vadd.f32 %v1086, %v1094
    %v1097 = vtanh.pop %v1096
    %1099 = vrot.lane.b32.xlu0 %v1097, 32
    %v1100 = vpop.permute.xlu0 %1099
    %v1102 = vmul.f32 %v1084, %v1100
    %1104 = vrot.lane.b32.xlu0 %v1102, 64
    %v1105 = vpop.permute.xlu0 %1104
    %s1107 = scalar_lea.vmem [#allocation3], 56
    %1108 = vst.msk [vmem:[%s1107] sm:$0xff] %vm123, %v1105
    %v1109 = vld [vmem:[#allocation3] sm:$0xff]
    %v1110 = vld [vmem:[#allocation3 + $0x8] sm:$0xff]
    %v1111 = vld [vmem:[#allocation3 + $0x10] sm:$0xff]
    %v1112 = vld [vmem:[#allocation3 + $0x18] sm:$0xff]
    %v1113 = vld [vmem:[#allocation3 + $0x20] sm:$0xff]
    %v1114 = vld [vmem:[#allocation3 + $0x28] sm:$0xff]
    %v1115 = vld [vmem:[#allocation3 + $0x30] sm:$0xff]
    %v1116 = vld [vmem:[#allocation3 + $0x38] sm:$0xff]
    %v1117 = vld [vmem:[#allocation7] sm:$0xff]
    %v1118 = vld [vmem:[#allocation7 + $0x8] sm:$0xff]
    %v1119 = vld [vmem:[#allocation7 + $0x10] sm:$0xff]
    %v1120 = vld [vmem:[#allocation7 + $0x18] sm:$0xff]
    %v1121 = vld [vmem:[%s7] sm:$0x1]
    %v1123 = vlaneseq
    %v1124 = vshrl.u32 %v1123, 7
    %v1125 = vsub.s32 0, %v1124
    %v1126 = vrot.slane %v1121, %v1125
    %v1129 = vsel %vm123, %v1109, 0
    %v1132 = vsel %vm123, %v1110, 0
    %v1135 = vsel %vm123, %v1111, 0
    %v1138 = vsel %vm123, %v1112, 0
    %v1141 = vsel %vm123, %v1113, 0
    %v1144 = vsel %vm123, %v1114, 0
    %v1147 = vsel %vm123, %v1115, 0
    %v1150 = vsel %vm123, %v1116, 0
    %1152 = vmatprep.subr.mxu0 0.0
    %1153 = vmatpush1.msra.mxu0 %v1117
    %1154 = vmatprep.subr.mxu0 0.0
    %1155 = vmatpush1.msra.mxu0 %v1118
    %1156 = vmatprep.subr.mxu0 0.0
    %1157 = vmatpush1.msra.mxu0 %v1119
    %1158 = vmatprep.subr.mxu0 0.0
    %1159 = vmatpush1.msra.mxu0 %v1120
    %1160 = vmatprep.subr.mxu0 0.0
    %1161 = vmatpush1.msra.mxu0 0.0
    %1162 = vmatprep.subr.mxu0 0.0
    %1163 = vmatpush1.msra.mxu0 0.0
    %1164 = vmatprep.subr.mxu0 0.0
    %1165 = vmatpush1.msra.mxu0 0.0
    %1166 = vmatprep.subr.mxu0 0.0
    %1167 = vmatpush1.msra.mxu0 0.0
    %1168 = vmatprep.subr.mxu0 0.0
    %1169 = vmatpush1.msra.mxu0 0.0
    %1170 = vmatprep.subr.mxu0 0.0
    %1171 = vmatpush1.msra.mxu0 0.0
    %1172 = vmatprep.subr.mxu0 0.0
    %1173 = vmatpush1.msra.mxu0 0.0
    %1174 = vmatprep.subr.mxu0 0.0
    %1175 = vmatpush1.msra.mxu0 0.0
    %1176 = vmatprep.subr.mxu0 0.0
    %1177 = vmatpush1.msra.mxu0 0.0
    %1178 = vmatprep.subr.mxu0 0.0
    %1179 = vmatpush1.msra.mxu0 0.0
    %1180 = vmatprep.subr.mxu0 0.0
    %1181 = vmatpush1.msra.mxu0 0.0
    %1182 = vmatprep.subr.mxu0 0.0
    %1183 = vmatpush1.msra.mxu0 0.0
    %1184 = vmatprep.subr.mxu0 0.0
    %1185 = vmatpush1.msra.mxu0 0.0
    %1186 = vmatprep.subr.mxu0 0.0
    %1187 = vmatpush1.msra.mxu0 0.0
    %1188 = vmatprep.subr.mxu0 0.0
    %1189 = vmatpush1.msra.mxu0 0.0
    %1190 = vmatprep.subr.mxu0 0.0
    %1191 = vmatpush1.msra.mxu0 0.0
    %1192 = vmatprep.subr.mxu0 0.0
    %1193 = vmatpush1.msra.mxu0 0.0
    %1194 = vmatprep.subr.mxu0 0.0
    %1195 = vmatpush1.msra.mxu0 0.0
    %1196 = vmatprep.subr.mxu0 0.0
    %1197 = vmatpush1.msra.mxu0 0.0
    %1198 = vmatprep.subr.mxu0 0.0
    %1199 = vmatpush1.msra.mxu0 0.0
    %1200 = vmatprep.subr.mxu0 0.0
    %1201 = vmatpush1.msra.mxu0 0.0
    %1202 = vmatprep.subr.mxu0 0.0
    %1203 = vmatpush1.msra.mxu0 0.0
    %1204 = vmatprep.subr.mxu0 0.0
    %1205 = vmatpush1.msra.mxu0 0.0
    %1206 = vmatprep.subr.mxu0 0.0
    %1207 = vmatpush1.msra.mxu0 0.0
    %1208 = vmatprep.subr.mxu0 0.0
    %1209 = vmatpush1.msra.mxu0 0.0
    %1210 = vmatprep.subr.mxu0 0.0
    %1211 = vmatpush1.msra.mxu0 0.0
    %1212 = vmatprep.subr.mxu0 0.0
    %1213 = vmatpush1.msra.mxu0 0.0
    %1214 = vmatprep.subr.mxu0 0.0
    %1215 = vmatpush1.msra.mxu0 0.0
    %1216 = vmatprep.mubr.f32.mxu0 0.0
    %1217 = vmatmul.mubr.f32.gmra.mrb[0].mxu0 %v1129
    %v1218 = vpop.f32.mrb[0].mxu0
    %v1219 = vadd.f32 %v1126, %v1218
    %v1220 = vpop.f32.mrb[0].mxu0
    %1221 = vmatprep.mubr.f32.mxu0 0.0
    %1222 = vmatmul.mubr.f32.gmra.mrb[0].mxu0 %v1132
    %v1223 = vpop.f32.mrb[0].mxu0
    %v1224 = vadd.f32 %v1126, %v1223
    %v1225 = vpop.f32.mrb[0].mxu0
    %1226 = vmatprep.mubr.f32.mxu0 0.0
    %1227 = vmatmul.mubr.f32.gmra.mrb[0].mxu0 %v1135
    %v1228 = vpop.f32.mrb[0].mxu0
    %v1229 = vadd.f32 %v1126, %v1228
    %v1230 = vpop.f32.mrb[0].mxu0
    %1231 = vmatprep.mubr.f32.mxu0 0.0
    %1232 = vmatmul.mubr.f32.gmra.mrb[0].mxu0 %v1138
    %v1233 = vpop.f32.mrb[0].mxu0
    %v1234 = vadd.f32 %v1126, %v1233
    %v1235 = vpop.f32.mrb[0].mxu0
    %1236 = vmatprep.mubr.f32.mxu0 0.0
    %1237 = vmatmul.mubr.f32.gmra.mrb[0].mxu0 %v1141
    %v1238 = vpop.f32.mrb[0].mxu0
    %v1239 = vadd.f32 %v1126, %v1238
    %v1240 = vpop.f32.mrb[0].mxu0
    %1241 = vmatprep.mubr.f32.mxu0 0.0
    %1242 = vmatmul.mubr.f32.gmra.mrb[0].mxu0 %v1144
    %v1243 = vpop.f32.mrb[0].mxu0
    %v1244 = vadd.f32 %v1126, %v1243
    %v1245 = vpop.f32.mrb[0].mxu0
    %1246 = vmatprep.mubr.f32.mxu0 0.0
    %1247 = vmatmul.mubr.f32.gmra.mrb[0].mxu0 %v1147
    %v1248 = vpop.f32.mrb[0].mxu0
    %v1249 = vadd.f32 %v1126, %v1248
    %v1250 = vpop.f32.mrb[0].mxu0
    %1251 = vmatprep.mubr.f32.mxu0 0.0
    %1252 = vmatmul.mubr.f32.gmra.mrb[0].mxu0 %v1150
    %v1253 = vpop.f32.mrb[0].mxu0
    %v1254 = vadd.f32 %v1126, %v1253
    %v1255 = vpop.f32.mrb[0].mxu0
    %1256 = vdwg.mxu0
    %1257 = vst [vmem:[#allocation2] sm:$0xff] %v1219
    %1258 = vst [vmem:[#allocation2 + $0x8] sm:$0xff] %v1224
    %1259 = vst [vmem:[#allocation2 + $0x10] sm:$0xff] %v1229
    %1260 = vst [vmem:[#allocation2 + $0x18] sm:$0xff] %v1234
    %1261 = vst [vmem:[#allocation2 + $0x20] sm:$0xff] %v1239
    %1262 = vst [vmem:[#allocation2 + $0x28] sm:$0xff] %v1244
    %1263 = vst [vmem:[#allocation2 + $0x30] sm:$0xff] %v1249
    %1264 = vst [vmem:[#allocation2 + $0x38] sm:$0xff] %v1254
    %v1265 = vld [vmem:[#allocation2] sm:$0xff]
    %1266 = vmatprep.subr.mxu0 0.0
    %1267 = vmatpush1.msra.mxu0 %v265
    %1268 = vmatprep.subr.mxu0 0.0
    %1269 = vmatpush1.msra.mxu0 %v266
    %1270 = vmatprep.subr.mxu0 0.0
    %1271 = vmatpush1.msra.mxu0 %v267
    %1272 = vmatprep.subr.mxu0 0.0
    %1273 = vmatpush1.msra.mxu0 %v268
    %1274 = vmatprep.subr.mxu0 0.0
    %1275 = vmatpush1.msra.mxu0 0.0
    %1276 = vmatprep.subr.mxu0 0.0
    %1277 = vmatpush1.msra.mxu0 0.0
    %1278 = vmatprep.subr.mxu0 0.0
    %1279 = vmatpush1.msra.mxu0 0.0
    %1280 = vmatprep.subr.mxu0 0.0
    %1281 = vmatpush1.msra.mxu0 0.0
    %1282 = vmatprep.subr.mxu0 0.0
    %1283 = vmatpush1.msra.mxu0 0.0
    %1284 = vmatprep.subr.mxu0 0.0
    %1285 = vmatpush1.msra.mxu0 0.0
    %1286 = vmatprep.subr.mxu0 0.0
    %1287 = vmatpush1.msra.mxu0 0.0
    %1288 = vmatprep.subr.mxu0 0.0
    %1289 = vmatpush1.msra.mxu0 0.0
    %1290 = vmatprep.subr.mxu0 0.0
    %1291 = vmatpush1.msra.mxu0 0.0
    %1292 = vmatprep.subr.mxu0 0.0
    %1293 = vmatpush1.msra.mxu0 0.0
    %1294 = vmatprep.subr.mxu0 0.0
    %1295 = vmatpush1.msra.mxu0 0.0
    %1296 = vmatprep.subr.mxu0 0.0
    %1297 = vmatpush1.msra.mxu0 0.0
    %1298 = vmatprep.subr.mxu0 0.0
    %1299 = vmatpush1.msra.mxu0 0.0
    %1300 = vmatprep.subr.mxu0 0.0
    %1301 = vmatpush1.msra.mxu0 0.0
    %1302 = vmatprep.subr.mxu0 0.0
    %1303 = vmatpush1.msra.mxu0 0.0
    %1304 = vmatprep.subr.mxu0 0.0
    %1305 = vmatpush1.msra.mxu0 0.0
    %1306 = vmatprep.subr.mxu0 0.0
    %1307 = vmatpush1.msra.mxu0 0.0
    %1308 = vmatprep.subr.mxu0 0.0
    %1309 = vmatpush1.msra.mxu0 0.0
    %1310 = vmatprep.subr.mxu0 0.0
    %1311 = vmatpush1.msra.mxu0 0.0
    %1312 = vmatprep.subr.mxu0 0.0
    %1313 = vmatpush1.msra.mxu0 0.0
    %1314 = vmatprep.subr.mxu0 0.0
    %1315 = vmatpush1.msra.mxu0 0.0
    %1316 = vmatprep.subr.mxu0 0.0
    %1317 = vmatpush1.msra.mxu0 0.0
    %1318 = vmatprep.subr.mxu0 0.0
    %1319 = vmatpush1.msra.mxu0 0.0
    %1320 = vmatprep.subr.mxu0 0.0
    %1321 = vmatpush1.msra.mxu0 0.0
    %1322 = vmatprep.subr.mxu0 0.0
    %1323 = vmatpush1.msra.mxu0 0.0
    %1324 = vmatprep.subr.mxu0 0.0
    %1325 = vmatpush1.msra.mxu0 0.0
    %1326 = vmatprep.subr.mxu0 0.0
    %1327 = vmatpush1.msra.mxu0 0.0
    %1328 = vmatprep.subr.mxu0 0.0
    %1329 = vmatpush1.msra.mxu0 0.0
    %1330 = vmatprep.mubr.f32.mxu0 0.0
    %1331 = vmatmul.mubr.f32.gmra.mrb[0].mxu0 %v272
    %v1332 = vpop.f32.mrb[0].mxu0
    %v1333 = vadd.f32 0.0, %v1332
    %v1334 = vpop.f32.mrb[0].mxu0
    %1335 = vdwg.mxu0
    %v1336 = vadd.f32 %v1265, %v1333
    %v1337 = vxor.u32 %v1336, 2147483648
    %v1338 = vmul.f32 %v1337, 1.442695
    %v1339 = vpow.pop %v1338
    %v1340 = vadd.f32 %v1339, 1.0
    %v1341 = vrcp.pop %v1340
    %v1342 = vmul.f32 1.0, %v1341
    %v1343 = vtanh.pop %v1336
    %v1344 = vmul.f32 %v1342, 0.0
    %1346 = vrot.lane.b32.xlu0 %v1343, 32
    %v1347 = vpop.permute.xlu0 %1346
    %v1349 = vmul.f32 %v1342, %v1347
    %1351 = vrot.lane.b32.xlu0 %v1349, 32
    %v1352 = vpop.permute.xlu0 %1351
    %v1354 = vadd.f32 %v1344, %v1352
    %v1355 = vtanh.pop %v1354
    %1357 = vrot.lane.b32.xlu0 %v1355, 32
    %v1358 = vpop.permute.xlu0 %1357
    %v1360 = vmul.f32 %v1342, %v1358
    %vm1361 = vcmp.eq.s32.totalorder %v269, 0
    %v1362 = vsel %vm1361, 1, 0
    %1363 = vset.pattern.permute.xlu0 0
    %1364 = vperm.xlu0 %1363, %v1362
    %v1365 = vpop.permute.xlu0 %1364
    %vm1366 = vcmp.eq.s32.totalorder %v1365, 1
    %v1367 = vsel %vm1366, %v1360, 0.0
    %v1368 = vld [vmem:[%s374] sm:$0xff]
    %1370 = vrot.lane.b32.xlu0 %v1360, 64
    %v1371 = vpop.permute.xlu0 %1370
    %v1372 = vsel %vm123, %v1371, 0
    %1374 = vmatprep.subr.mxu0 0.0
    %1375 = vmatpush1.msra.mxu0 %v265
    %1376 = vmatprep.subr.mxu0 0.0
    %1377 = vmatpush1.msra.mxu0 %v266
    %1378 = vmatprep.subr.mxu0 0.0
    %1379 = vmatpush1.msra.mxu0 %v267
    %1380 = vmatprep.subr.mxu0 0.0
    %1381 = vmatpush1.msra.mxu0 %v268
    %1382 = vmatprep.subr.mxu0 0.0
    %1383 = vmatpush1.msra.mxu0 0.0
    %1384 = vmatprep.subr.mxu0 0.0
    %1385 = vmatpush1.msra.mxu0 0.0
    %1386 = vmatprep.subr.mxu0 0.0
    %1387 = vmatpush1.msra.mxu0 0.0
    %1388 = vmatprep.subr.mxu0 0.0
    %1389 = vmatpush1.msra.mxu0 0.0
    %1390 = vmatprep.subr.mxu0 0.0
    %1391 = vmatpush1.msra.mxu0 0.0
    %1392 = vmatprep.subr.mxu0 0.0
    %1393 = vmatpush1.msra.mxu0 0.0
    %1394 = vmatprep.subr.mxu0 0.0
    %1395 = vmatpush1.msra.mxu0 0.0
    %1396 = vmatprep.subr.mxu0 0.0
    %1397 = vmatpush1.msra.mxu0 0.0
    %1398 = vmatprep.subr.mxu0 0.0
    %1399 = vmatpush1.msra.mxu0 0.0
    %1400 = vmatprep.subr.mxu0 0.0
    %1401 = vmatpush1.msra.mxu0 0.0
    %1402 = vmatprep.subr.mxu0 0.0
    %1403 = vmatpush1.msra.mxu0 0.0
    %1404 = vmatprep.subr.mxu0 0.0
    %1405 = vmatpush1.msra.mxu0 0.0
    %1406 = vmatprep.subr.mxu0 0.0
    %1407 = vmatpush1.msra.mxu0 0.0
    %1408 = vmatprep.subr.mxu0 0.0
    %1409 = vmatpush1.msra.mxu0 0.0
    %1410 = vmatprep.subr.mxu0 0.0
    %1411 = vmatpush1.msra.mxu0 0.0
    %1412 = vmatprep.subr.mxu0 0.0
    %1413 = vmatpush1.msra.mxu0 0.0
    %1414 = vmatprep.subr.mxu0 0.0
    %1415 = vmatpush1.msra.mxu0 0.0
    %1416 = vmatprep.subr.mxu0 0.0
    %1417 = vmatpush1.msra.mxu0 0.0
    %1418 = vmatprep.subr.mxu0 0.0
    %1419 = vmatpush1.msra.mxu0 0.0
    %1420 = vmatprep.subr.mxu0 0.0
    %1421 = vmatpush1.msra.mxu0 0.0
    %1422 = vmatprep.subr.mxu0 0.0
    %1423 = vmatpush1.msra.mxu0 0.0
    %1424 = vmatprep.subr.mxu0 0.0
    %1425 = vmatpush1.msra.mxu0 0.0
    %1426 = vmatprep.subr.mxu0 0.0
    %1427 = vmatpush1.msra.mxu0 0.0
    %1428 = vmatprep.subr.mxu0 0.0
    %1429 = vmatpush1.msra.mxu0 0.0
    %1430 = vmatprep.subr.mxu0 0.0
    %1431 = vmatpush1.msra.mxu0 0.0
    %1432 = vmatprep.subr.mxu0 0.0
    %1433 = vmatpush1.msra.mxu0 0.0
    %1434 = vmatprep.subr.mxu0 0.0
    %1435 = vmatpush1.msra.mxu0 0.0
    %1436 = vmatprep.subr.mxu0 0.0
    %1437 = vmatpush1.msra.mxu0 0.0
    %1438 = vmatprep.mubr.f32.mxu0 0.0
    %1439 = vmatmul.mubr.f32.gmra.mrb[0].mxu0 %v1372
    %v1440 = vpop.f32.mrb[0].mxu0
    %v1441 = vadd.f32 0.0, %v1440
    %v1442 = vpop.f32.mrb[0].mxu0
    %1443 = vdwg.mxu0
    %v1444 = vadd.f32 %v1368, %v1441
    %v1445 = vxor.u32 %v1444, 2147483648
    %v1446 = vmul.f32 %v1445, 1.442695
    %v1447 = vpow.pop %v1446
    %v1448 = vadd.f32 %v1447, 1.0
    %v1449 = vrcp.pop %v1448
    %v1450 = vmul.f32 1.0, %v1449
    %v1451 = vtanh.pop %v1444
    %v1452 = vmul.f32 %v1450, %v1354
    %1454 = vrot.lane.b32.xlu0 %v1451, 32
    %v1455 = vpop.permute.xlu0 %1454
    %v1457 = vmul.f32 %v1450, %v1455
    %1459 = vrot.lane.b32.xlu0 %v1457, 32
    %v1460 = vpop.permute.xlu0 %1459
    %v1462 = vadd.f32 %v1452, %v1460
    %v1463 = vtanh.pop %v1462
    %1465 = vrot.lane.b32.xlu0 %v1463, 32
    %v1466 = vpop.permute.xlu0 %1465
    %v1468 = vmul.f32 %v1450, %v1466
    %vm1469 = vcmp.eq.s32.totalorder %v269, 1
    %v1470 = vsel %vm1469, 1, 0
    %1471 = vset.pattern.permute.xlu0 0
    %1472 = vperm.xlu0 %1471, %v1470
    %v1473 = vpop.permute.xlu0 %1472
    %vm1474 = vcmp.eq.s32.totalorder %v1473, 1
    %v1475 = vsel %vm1474, %v1468, %v1367
    %v1476 = vld [vmem:[%s479] sm:$0xff]
    %1478 = vrot.lane.b32.xlu0 %v1468, 64
    %v1479 = vpop.permute.xlu0 %1478
    %v1480 = vsel %vm123, %v1479, 0
    %1482 = vmatprep.subr.mxu0 0.0
    %1483 = vmatpush1.msra.mxu0 %v265
    %1484 = vmatprep.subr.mxu0 0.0
    %1485 = vmatpush1.msra.mxu0 %v266
    %1486 = vmatprep.subr.mxu0 0.0
    %1487 = vmatpush1.msra.mxu0 %v267
    %1488 = vmatprep.subr.mxu0 0.0
    %1489 = vmatpush1.msra.mxu0 %v268
    %1490 = vmatprep.subr.mxu0 0.0
    %1491 = vmatpush1.msra.mxu0 0.0
    %1492 = vmatprep.subr.mxu0 0.0
    %1493 = vmatpush1.msra.mxu0 0.0
    %1494 = vmatprep.subr.mxu0 0.0
    %1495 = vmatpush1.msra.mxu0 0.0
    %1496 = vmatprep.subr.mxu0 0.0
    %1497 = vmatpush1.msra.mxu0 0.0
    %1498 = vmatprep.subr.mxu0 0.0
    %1499 = vmatpush1.msra.mxu0 0.0
    %1500 = vmatprep.subr.mxu0 0.0
    %1501 = vmatpush1.msra.mxu0 0.0
    %1502 = vmatprep.subr.mxu0 0.0
    %1503 = vmatpush1.msra.mxu0 0.0
    %1504 = vmatprep.subr.mxu0 0.0
    %1505 = vmatpush1.msra.mxu0 0.0
    %1506 = vmatprep.subr.mxu0 0.0
    %1507 = vmatpush1.msra.mxu0 0.0
    %1508 = vmatprep.subr.mxu0 0.0
    %1509 = vmatpush1.msra.mxu0 0.0
    %1510 = vmatprep.subr.mxu0 0.0
    %1511 = vmatpush1.msra.mxu0 0.0
    %1512 = vmatprep.subr.mxu0 0.0
    %1513 = vmatpush1.msra.mxu0 0.0
    %1514 = vmatprep.subr.mxu0 0.0
    %1515 = vmatpush1.msra.mxu0 0.0
    %1516 = vmatprep.subr.mxu0 0.0
    %1517 = vmatpush1.msra.mxu0 0.0
    %1518 = vmatprep.subr.mxu0 0.0
    %1519 = vmatpush1.msra.mxu0 0.0
    %1520 = vmatprep.subr.mxu0 0.0
    %1521 = vmatpush1.msra.mxu0 0.0
    %1522 = vmatprep.subr.mxu0 0.0
    %1523 = vmatpush1.msra.mxu0 0.0
    %1524 = vmatprep.subr.mxu0 0.0
    %1525 = vmatpush1.msra.mxu0 0.0
    %1526 = vmatprep.subr.mxu0 0.0
    %1527 = vmatpush1.msra.mxu0 0.0
    %1528 = vmatprep.subr.mxu0 0.0
    %1529 = vmatpush1.msra.mxu0 0.0
    %1530 = vmatprep.subr.mxu0 0.0
    %1531 = vmatpush1.msra.mxu0 0.0
    %1532 = vmatprep.subr.mxu0 0.0
    %1533 = vmatpush1.msra.mxu0 0.0
    %1534 = vmatprep.subr.mxu0 0.0
    %1535 = vmatpush1.msra.mxu0 0.0
    %1536 = vmatprep.subr.mxu0 0.0
    %1537 = vmatpush1.msra.mxu0 0.0
    %1538 = vmatprep.subr.mxu0 0.0
    %1539 = vmatpush1.msra.mxu0 0.0
    %1540 = vmatprep.subr.mxu0 0.0
    %1541 = vmatpush1.msra.mxu0 0.0
    %1542 = vmatprep.subr.mxu0 0.0
    %1543 = vmatpush1.msra.mxu0 0.0
    %1544 = vmatprep.subr.mxu0 0.0
    %1545 = vmatpush1.msra.mxu0 0.0
    %1546 = vmatprep.mubr.f32.mxu0 0.0
    %1547 = vmatmul.mubr.f32.gmra.mrb[0].mxu0 %v1480
    %v1548 = vpop.f32.mrb[0].mxu0
    %v1549 = vadd.f32 0.0, %v1548
    %v1550 = vpop.f32.mrb[0].mxu0
    %1551 = vdwg.mxu0
    %v1552 = vadd.f32 %v1476, %v1549
    %v1553 = vxor.u32 %v1552, 2147483648
    %v1554 = vmul.f32 %v1553, 1.442695
    %v1555 = vpow.pop %v1554
    %v1556 = vadd.f32 %v1555, 1.0
    %v1557 = vrcp.pop %v1556
    %v1558 = vmul.f32 1.0, %v1557
    %v1559 = vtanh.pop %v1552
    %v1560 = vmul.f32 %v1558, %v1462
    %1562 = vrot.lane.b32.xlu0 %v1559, 32
    %v1563 = vpop.permute.xlu0 %1562
    %v1565 = vmul.f32 %v1558, %v1563
    %1567 = vrot.lane.b32.xlu0 %v1565, 32
    %v1568 = vpop.permute.xlu0 %1567
    %v1570 = vadd.f32 %v1560, %v1568
    %v1571 = vtanh.pop %v1570
    %1573 = vrot.lane.b32.xlu0 %v1571, 32
    %v1574 = vpop.permute.xlu0 %1573
    %v1576 = vmul.f32 %v1558, %v1574
    %vm1577 = vcmp.eq.s32.totalorder %v269, 2
    %v1578 = vsel %vm1577, 1, 0
    %1579 = vset.pattern.permute.xlu0 0
    %1580 = vperm.xlu0 %1579, %v1578
    %v1581 = vpop.permute.xlu0 %1580
    %vm1582 = vcmp.eq.s32.totalorder %v1581, 1
    %v1583 = vsel %vm1582, %v1576, %v1475
    %v1584 = vld [vmem:[%s584] sm:$0xff]
    %1586 = vrot.lane.b32.xlu0 %v1576, 64
    %v1587 = vpop.permute.xlu0 %1586
    %v1588 = vsel %vm123, %v1587, 0
    %1590 = vmatprep.subr.mxu0 0.0
    %1591 = vmatpush1.msra.mxu0 %v265
    %1592 = vmatprep.subr.mxu0 0.0
    %1593 = vmatpush1.msra.mxu0 %v266
    %1594 = vmatprep.subr.mxu0 0.0
    %1595 = vmatpush1.msra.mxu0 %v267
    %1596 = vmatprep.subr.mxu0 0.0
    %1597 = vmatpush1.msra.mxu0 %v268
    %1598 = vmatprep.subr.mxu0 0.0
    %1599 = vmatpush1.msra.mxu0 0.0
    %1600 = vmatprep.subr.mxu0 0.0
    %1601 = vmatpush1.msra.mxu0 0.0
    %1602 = vmatprep.subr.mxu0 0.0
    %1603 = vmatpush1.msra.mxu0 0.0
    %1604 = vmatprep.subr.mxu0 0.0
    %1605 = vmatpush1.msra.mxu0 0.0
    %1606 = vmatprep.subr.mxu0 0.0
    %1607 = vmatpush1.msra.mxu0 0.0
    %1608 = vmatprep.subr.mxu0 0.0
    %1609 = vmatpush1.msra.mxu0 0.0
    %1610 = vmatprep.subr.mxu0 0.0
    %1611 = vmatpush1.msra.mxu0 0.0
    %1612 = vmatprep.subr.mxu0 0.0
    %1613 = vmatpush1.msra.mxu0 0.0
    %1614 = vmatprep.subr.mxu0 0.0
    %1615 = vmatpush1.msra.mxu0 0.0
    %1616 = vmatprep.subr.mxu0 0.0
    %1617 = vmatpush1.msra.mxu0 0.0
    %1618 = vmatprep.subr.mxu0 0.0
    %1619 = vmatpush1.msra.mxu0 0.0
    %1620 = vmatprep.subr.mxu0 0.0
    %1621 = vmatpush1.msra.mxu0 0.0
    %1622 = vmatprep.subr.mxu0 0.0
    %1623 = vmatpush1.msra.mxu0 0.0
    %1624 = vmatprep.subr.mxu0 0.0
    %1625 = vmatpush1.msra.mxu0 0.0
    %1626 = vmatprep.subr.mxu0 0.0
    %1627 = vmatpush1.msra.mxu0 0.0
    %1628 = vmatprep.subr.mxu0 0.0
    %1629 = vmatpush1.msra.mxu0 0.0
    %1630 = vmatprep.subr.mxu0 0.0
    %1631 = vmatpush1.msra.mxu0 0.0
    %1632 = vmatprep.subr.mxu0 0.0
    %1633 = vmatpush1.msra.mxu0 0.0
    %1634 = vmatprep.subr.mxu0 0.0
    %1635 = vmatpush1.msra.mxu0 0.0
    %1636 = vmatprep.subr.mxu0 0.0
    %1637 = vmatpush1.msra.mxu0 0.0
    %1638 = vmatprep.subr.mxu0 0.0
    %1639 = vmatpush1.msra.mxu0 0.0
    %1640 = vmatprep.subr.mxu0 0.0
    %1641 = vmatpush1.msra.mxu0 0.0
    %1642 = vmatprep.subr.mxu0 0.0
    %1643 = vmatpush1.msra.mxu0 0.0
    %1644 = vmatprep.subr.mxu0 0.0
    %1645 = vmatpush1.msra.mxu0 0.0
    %1646 = vmatprep.subr.mxu0 0.0
    %1647 = vmatpush1.msra.mxu0 0.0
    %1648 = vmatprep.subr.mxu0 0.0
    %1649 = vmatpush1.msra.mxu0 0.0
    %1650 = vmatprep.subr.mxu0 0.0
    %1651 = vmatpush1.msra.mxu0 0.0
    %1652 = vmatprep.subr.mxu0 0.0
    %1653 = vmatpush1.msra.mxu0 0.0
    %1654 = vmatprep.mubr.f32.mxu0 0.0
    %1655 = vmatmul.mubr.f32.gmra.mrb[0].mxu0 %v1588
    %v1656 = vpop.f32.mrb[0].mxu0
    %v1657 = vadd.f32 0.0, %v1656
    %v1658 = vpop.f32.mrb[0].mxu0
    %1659 = vdwg.mxu0
    %v1660 = vadd.f32 %v1584, %v1657
    %v1661 = vxor.u32 %v1660, 2147483648
    %v1662 = vmul.f32 %v1661, 1.442695
    %v1663 = vpow.pop %v1662
    %v1664 = vadd.f32 %v1663, 1.0
    %v1665 = vrcp.pop %v1664
    %v1666 = vmul.f32 1.0, %v1665
    %v1667 = vtanh.pop %v1660
    %v1668 = vmul.f32 %v1666, %v1570
    %1670 = vrot.lane.b32.xlu0 %v1667, 32
    %v1671 = vpop.permute.xlu0 %1670
    %v1673 = vmul.f32 %v1666, %v1671
    %1675 = vrot.lane.b32.xlu0 %v1673, 32
    %v1676 = vpop.permute.xlu0 %1675
    %v1678 = vadd.f32 %v1668, %v1676
    %v1679 = vtanh.pop %v1678
    %1681 = vrot.lane.b32.xlu0 %v1679, 32
    %v1682 = vpop.permute.xlu0 %1681
    %v1684 = vmul.f32 %v1666, %v1682
    %vm1685 = vcmp.eq.s32.totalorder %v269, 3
    %v1686 = vsel %vm1685, 1, 0
    %1687 = vset.pattern.permute.xlu0 0
    %1688 = vperm.xlu0 %1687, %v1686
    %v1689 = vpop.permute.xlu0 %1688
    %vm1690 = vcmp.eq.s32.totalorder %v1689, 1
    %v1691 = vsel %vm1690, %v1684, %v1583
    %v1692 = vld [vmem:[%s689] sm:$0xff]
    %1694 = vrot.lane.b32.xlu0 %v1684, 64
    %v1695 = vpop.permute.xlu0 %1694
    %v1696 = vsel %vm123, %v1695, 0
    %1698 = vmatprep.subr.mxu0 0.0
    %1699 = vmatpush1.msra.mxu0 %v265
    %1700 = vmatprep.subr.mxu0 0.0
    %1701 = vmatpush1.msra.mxu0 %v266
    %1702 = vmatprep.subr.mxu0 0.0
    %1703 = vmatpush1.msra.mxu0 %v267
    %1704 = vmatprep.subr.mxu0 0.0
    %1705 = vmatpush1.msra.mxu0 %v268
    %1706 = vmatprep.subr.mxu0 0.0
    %1707 = vmatpush1.msra.mxu0 0.0
    %1708 = vmatprep.subr.mxu0 0.0
    %1709 = vmatpush1.msra.mxu0 0.0
    %1710 = vmatprep.subr.mxu0 0.0
    %1711 = vmatpush1.msra.mxu0 0.0
    %1712 = vmatprep.subr.mxu0 0.0
    %1713 = vmatpush1.msra.mxu0 0.0
    %1714 = vmatprep.subr.mxu0 0.0
    %1715 = vmatpush1.msra.mxu0 0.0
    %1716 = vmatprep.subr.mxu0 0.0
    %1717 = vmatpush1.msra.mxu0 0.0
    %1718 = vmatprep.subr.mxu0 0.0
    %1719 = vmatpush1.msra.mxu0 0.0
    %1720 = vmatprep.subr.mxu0 0.0
    %1721 = vmatpush1.msra.mxu0 0.0
    %1722 = vmatprep.subr.mxu0 0.0
    %1723 = vmatpush1.msra.mxu0 0.0
    %1724 = vmatprep.subr.mxu0 0.0
    %1725 = vmatpush1.msra.mxu0 0.0
    %1726 = vmatprep.subr.mxu0 0.0
    %1727 = vmatpush1.msra.mxu0 0.0
    %1728 = vmatprep.subr.mxu0 0.0
    %1729 = vmatpush1.msra.mxu0 0.0
    %1730 = vmatprep.subr.mxu0 0.0
    %1731 = vmatpush1.msra.mxu0 0.0
    %1732 = vmatprep.subr.mxu0 0.0
    %1733 = vmatpush1.msra.mxu0 0.0
    %1734 = vmatprep.subr.mxu0 0.0
    %1735 = vmatpush1.msra.mxu0 0.0
    %1736 = vmatprep.subr.mxu0 0.0
    %1737 = vmatpush1.msra.mxu0 0.0
    %1738 = vmatprep.subr.mxu0 0.0
    %1739 = vmatpush1.msra.mxu0 0.0
    %1740 = vmatprep.subr.mxu0 0.0
    %1741 = vmatpush1.msra.mxu0 0.0
    %1742 = vmatprep.subr.mxu0 0.0
    %1743 = vmatpush1.msra.mxu0 0.0
    %1744 = vmatprep.subr.mxu0 0.0
    %1745 = vmatpush1.msra.mxu0 0.0
    %1746 = vmatprep.subr.mxu0 0.0
    %1747 = vmatpush1.msra.mxu0 0.0
    %1748 = vmatprep.subr.mxu0 0.0
    %1749 = vmatpush1.msra.mxu0 0.0
    %1750 = vmatprep.subr.mxu0 0.0
    %1751 = vmatpush1.msra.mxu0 0.0
    %1752 = vmatprep.subr.mxu0 0.0
    %1753 = vmatpush1.msra.mxu0 0.0
    %1754 = vmatprep.subr.mxu0 0.0
    %1755 = vmatpush1.msra.mxu0 0.0
    %1756 = vmatprep.subr.mxu0 0.0
    %1757 = vmatpush1.msra.mxu0 0.0
    %1758 = vmatprep.subr.mxu0 0.0
    %1759 = vmatpush1.msra.mxu0 0.0
    %1760 = vmatprep.subr.mxu0 0.0
    %1761 = vmatpush1.msra.mxu0 0.0
    %1762 = vmatprep.mubr.f32.mxu0 0.0
    %1763 = vmatmul.mubr.f32.gmra.mrb[0].mxu0 %v1696
    %v1764 = vpop.f32.mrb[0].mxu0
    %v1765 = vadd.f32 0.0, %v1764
    %v1766 = vpop.f32.mrb[0].mxu0
    %1767 = vdwg.mxu0
    %v1768 = vadd.f32 %v1692, %v1765
    %v1769 = vxor.u32 %v1768, 2147483648
    %v1770 = vmul.f32 %v1769, 1.442695
    %v1771 = vpow.pop %v1770
    %v1772 = vadd.f32 %v1771, 1.0
    %v1773 = vrcp.pop %v1772
    %v1774 = vmul.f32 1.0, %v1773
    %v1775 = vtanh.pop %v1768
    %v1776 = vmul.f32 %v1774, %v1678
    %1778 = vrot.lane.b32.xlu0 %v1775, 32
    %v1779 = vpop.permute.xlu0 %1778
    %v1781 = vmul.f32 %v1774, %v1779
    %1783 = vrot.lane.b32.xlu0 %v1781, 32
    %v1784 = vpop.permute.xlu0 %1783
    %v1786 = vadd.f32 %v1776, %v1784
    %v1787 = vtanh.pop %v1786
    %1789 = vrot.lane.b32.xlu0 %v1787, 32
    %v1790 = vpop.permute.xlu0 %1789
    %v1792 = vmul.f32 %v1774, %v1790
    %vm1793 = vcmp.eq.s32.totalorder %v269, 4
    %v1794 = vsel %vm1793, 1, 0
    %1795 = vset.pattern.permute.xlu0 0
    %1796 = vperm.xlu0 %1795, %v1794
    %v1797 = vpop.permute.xlu0 %1796
    %vm1798 = vcmp.eq.s32.totalorder %v1797, 1
    %v1799 = vsel %vm1798, %v1792, %v1691
    %v1800 = vld [vmem:[%s794] sm:$0xff]
    %1802 = vrot.lane.b32.xlu0 %v1792, 64
    %v1803 = vpop.permute.xlu0 %1802
    %v1804 = vsel %vm123, %v1803, 0
    %1806 = vmatprep.subr.mxu0 0.0
    %1807 = vmatpush1.msra.mxu0 %v265
    %1808 = vmatprep.subr.mxu0 0.0
    %1809 = vmatpush1.msra.mxu0 %v266
    %1810 = vmatprep.subr.mxu0 0.0
    %1811 = vmatpush1.msra.mxu0 %v267
    %1812 = vmatprep.subr.mxu0 0.0
    %1813 = vmatpush1.msra.mxu0 %v268
    %1814 = vmatprep.subr.mxu0 0.0
    %1815 = vmatpush1.msra.mxu0 0.0
    %1816 = vmatprep.subr.mxu0 0.0
    %1817 = vmatpush1.msra.mxu0 0.0
    %1818 = vmatprep.subr.mxu0 0.0
    %1819 = vmatpush1.msra.mxu0 0.0
    %1820 = vmatprep.subr.mxu0 0.0
    %1821 = vmatpush1.msra.mxu0 0.0
    %1822 = vmatprep.subr.mxu0 0.0
    %1823 = vmatpush1.msra.mxu0 0.0
    %1824 = vmatprep.subr.mxu0 0.0
    %1825 = vmatpush1.msra.mxu0 0.0
    %1826 = vmatprep.subr.mxu0 0.0
    %1827 = vmatpush1.msra.mxu0 0.0
    %1828 = vmatprep.subr.mxu0 0.0
    %1829 = vmatpush1.msra.mxu0 0.0
    %1830 = vmatprep.subr.mxu0 0.0
    %1831 = vmatpush1.msra.mxu0 0.0
    %1832 = vmatprep.subr.mxu0 0.0
    %1833 = vmatpush1.msra.mxu0 0.0
    %1834 = vmatprep.subr.mxu0 0.0
    %1835 = vmatpush1.msra.mxu0 0.0
    %1836 = vmatprep.subr.mxu0 0.0
    %1837 = vmatpush1.msra.mxu0 0.0
    %1838 = vmatprep.subr.mxu0 0.0
    %1839 = vmatpush1.msra.mxu0 0.0
    %1840 = vmatprep.subr.mxu0 0.0
    %1841 = vmatpush1.msra.mxu0 0.0
    %1842 = vmatprep.subr.mxu0 0.0
    %1843 = vmatpush1.msra.mxu0 0.0
    %1844 = vmatprep.subr.mxu0 0.0
    %1845 = vmatpush1.msra.mxu0 0.0
    %1846 = vmatprep.subr.mxu0 0.0
    %1847 = vmatpush1.msra.mxu0 0.0
    %1848 = vmatprep.subr.mxu0 0.0
    %1849 = vmatpush1.msra.mxu0 0.0
    %1850 = vmatprep.subr.mxu0 0.0
    %1851 = vmatpush1.msra.mxu0 0.0
    %1852 = vmatprep.subr.mxu0 0.0
    %1853 = vmatpush1.msra.mxu0 0.0
    %1854 = vmatprep.subr.mxu0 0.0
    %1855 = vmatpush1.msra.mxu0 0.0
    %1856 = vmatprep.subr.mxu0 0.0
    %1857 = vmatpush1.msra.mxu0 0.0
    %1858 = vmatprep.subr.mxu0 0.0
    %1859 = vmatpush1.msra.mxu0 0.0
    %1860 = vmatprep.subr.mxu0 0.0
    %1861 = vmatpush1.msra.mxu0 0.0
    %1862 = vmatprep.subr.mxu0 0.0
    %1863 = vmatpush1.msra.mxu0 0.0
    %1864 = vmatprep.subr.mxu0 0.0
    %1865 = vmatpush1.msra.mxu0 0.0
    %1866 = vmatprep.subr.mxu0 0.0
    %1867 = vmatpush1.msra.mxu0 0.0
    %1868 = vmatprep.subr.mxu0 0.0
    %1869 = vmatpush1.msra.mxu0 0.0
    %1870 = vmatprep.mubr.f32.mxu0 0.0
    %1871 = vmatmul.mubr.f32.gmra.mrb[0].mxu0 %v1804
    %v1872 = vpop.f32.mrb[0].mxu0
    %v1873 = vadd.f32 0.0, %v1872
    %v1874 = vpop.f32.mrb[0].mxu0
    %1875 = vdwg.mxu0
    %v1876 = vadd.f32 %v1800, %v1873
    %v1877 = vxor.u32 %v1876, 2147483648
    %v1878 = vmul.f32 %v1877, 1.442695
    %v1879 = vpow.pop %v1878
    %v1880 = vadd.f32 %v1879, 1.0
    %v1881 = vrcp.pop %v1880
    %v1882 = vmul.f32 1.0, %v1881
    %v1883 = vtanh.pop %v1876
    %v1884 = vmul.f32 %v1882, %v1786
    %1886 = vrot.lane.b32.xlu0 %v1883, 32
    %v1887 = vpop.permute.xlu0 %1886
    %v1889 = vmul.f32 %v1882, %v1887
    %1891 = vrot.lane.b32.xlu0 %v1889, 32
    %v1892 = vpop.permute.xlu0 %1891
    %v1894 = vadd.f32 %v1884, %v1892
    %v1895 = vtanh.pop %v1894
    %1897 = vrot.lane.b32.xlu0 %v1895, 32
    %v1898 = vpop.permute.xlu0 %1897
    %v1900 = vmul.f32 %v1882, %v1898
    %vm1901 = vcmp.eq.s32.totalorder %v269, 5
    %v1902 = vsel %vm1901, 1, 0
    %1903 = vset.pattern.permute.xlu0 0
    %1904 = vperm.xlu0 %1903, %v1902
    %v1905 = vpop.permute.xlu0 %1904
    %vm1906 = vcmp.eq.s32.totalorder %v1905, 1
    %v1907 = vsel %vm1906, %v1900, %v1799
    %v1908 = vld [vmem:[%s899] sm:$0xff]
    %1910 = vrot.lane.b32.xlu0 %v1900, 64
    %v1911 = vpop.permute.xlu0 %1910
    %v1912 = vsel %vm123, %v1911, 0
    %1914 = vmatprep.subr.mxu0 0.0
    %1915 = vmatpush1.msra.mxu0 %v265
    %1916 = vmatprep.subr.mxu0 0.0
    %1917 = vmatpush1.msra.mxu0 %v266
    %1918 = vmatprep.subr.mxu0 0.0
    %1919 = vmatpush1.msra.mxu0 %v267
    %1920 = vmatprep.subr.mxu0 0.0
    %1921 = vmatpush1.msra.mxu0 %v268
    %1922 = vmatprep.subr.mxu0 0.0
    %1923 = vmatpush1.msra.mxu0 0.0
    %1924 = vmatprep.subr.mxu0 0.0
    %1925 = vmatpush1.msra.mxu0 0.0
    %1926 = vmatprep.subr.mxu0 0.0
    %1927 = vmatpush1.msra.mxu0 0.0
    %1928 = vmatprep.subr.mxu0 0.0
    %1929 = vmatpush1.msra.mxu0 0.0
    %1930 = vmatprep.subr.mxu0 0.0
    %1931 = vmatpush1.msra.mxu0 0.0
    %1932 = vmatprep.subr.mxu0 0.0
    %1933 = vmatpush1.msra.mxu0 0.0
    %1934 = vmatprep.subr.mxu0 0.0
    %1935 = vmatpush1.msra.mxu0 0.0
    %1936 = vmatprep.subr.mxu0 0.0
    %1937 = vmatpush1.msra.mxu0 0.0
    %1938 = vmatprep.subr.mxu0 0.0
    %1939 = vmatpush1.msra.mxu0 0.0
    %1940 = vmatprep.subr.mxu0 0.0
    %1941 = vmatpush1.msra.mxu0 0.0
    %1942 = vmatprep.subr.mxu0 0.0
    %1943 = vmatpush1.msra.mxu0 0.0
    %1944 = vmatprep.subr.mxu0 0.0
    %1945 = vmatpush1.msra.mxu0 0.0
    %1946 = vmatprep.subr.mxu0 0.0
    %1947 = vmatpush1.msra.mxu0 0.0
    %1948 = vmatprep.subr.mxu0 0.0
    %1949 = vmatpush1.msra.mxu0 0.0
    %1950 = vmatprep.subr.mxu0 0.0
    %1951 = vmatpush1.msra.mxu0 0.0
    %1952 = vmatprep.subr.mxu0 0.0
    %1953 = vmatpush1.msra.mxu0 0.0
    %1954 = vmatprep.subr.mxu0 0.0
    %1955 = vmatpush1.msra.mxu0 0.0
    %1956 = vmatprep.subr.mxu0 0.0
    %1957 = vmatpush1.msra.mxu0 0.0
    %1958 = vmatprep.subr.mxu0 0.0
    %1959 = vmatpush1.msra.mxu0 0.0
    %1960 = vmatprep.subr.mxu0 0.0
    %1961 = vmatpush1.msra.mxu0 0.0
    %1962 = vmatprep.subr.mxu0 0.0
    %1963 = vmatpush1.msra.mxu0 0.0
    %1964 = vmatprep.subr.mxu0 0.0
    %1965 = vmatpush1.msra.mxu0 0.0
    %1966 = vmatprep.subr.mxu0 0.0
    %1967 = vmatpush1.msra.mxu0 0.0
    %1968 = vmatprep.subr.mxu0 0.0
    %1969 = vmatpush1.msra.mxu0 0.0
    %1970 = vmatprep.subr.mxu0 0.0
    %1971 = vmatpush1.msra.mxu0 0.0
    %1972 = vmatprep.subr.mxu0 0.0
    %1973 = vmatpush1.msra.mxu0 0.0
    %1974 = vmatprep.subr.mxu0 0.0
    %1975 = vmatpush1.msra.mxu0 0.0
    %1976 = vmatprep.subr.mxu0 0.0
    %1977 = vmatpush1.msra.mxu0 0.0
    %1978 = vmatprep.mubr.f32.mxu0 0.0
    %1979 = vmatmul.mubr.f32.gmra.mrb[0].mxu0 %v1912
    %v1980 = vpop.f32.mrb[0].mxu0
    %v1981 = vadd.f32 0.0, %v1980
    %v1982 = vpop.f32.mrb[0].mxu0
    %1983 = vdwg.mxu0
    %v1984 = vadd.f32 %v1908, %v1981
    %v1985 = vxor.u32 %v1984, 2147483648
    %v1986 = vmul.f32 %v1985, 1.442695
    %v1987 = vpow.pop %v1986
    %v1988 = vadd.f32 %v1987, 1.0
    %v1989 = vrcp.pop %v1988
    %v1990 = vmul.f32 1.0, %v1989
    %v1991 = vtanh.pop %v1984
    %v1992 = vmul.f32 %v1990, %v1894
    %1994 = vrot.lane.b32.xlu0 %v1991, 32
    %v1995 = vpop.permute.xlu0 %1994
    %v1997 = vmul.f32 %v1990, %v1995
    %1999 = vrot.lane.b32.xlu0 %v1997, 32
    %v2000 = vpop.permute.xlu0 %1999
    %v2002 = vadd.f32 %v1992, %v2000
    %v2003 = vtanh.pop %v2002
    %2005 = vrot.lane.b32.xlu0 %v2003, 32
    %v2006 = vpop.permute.xlu0 %2005
    %v2008 = vmul.f32 %v1990, %v2006
    %vm2009 = vcmp.eq.s32.totalorder %v269, 6
    %v2010 = vsel %vm2009, 1, 0
    %2011 = vset.pattern.permute.xlu0 0
    %2012 = vperm.xlu0 %2011, %v2010
    %v2013 = vpop.permute.xlu0 %2012
    %vm2014 = vcmp.eq.s32.totalorder %v2013, 1
    %v2015 = vsel %vm2014, %v2008, %v1907
    %v2016 = vld [vmem:[%s1004] sm:$0xff]
    %2018 = vrot.lane.b32.xlu0 %v2008, 64
    %v2019 = vpop.permute.xlu0 %2018
    %v2020 = vsel %vm123, %v2019, 0
    %2022 = vmatprep.subr.mxu0 0.0
    %2023 = vmatpush1.msra.mxu0 %v265
    %2024 = vmatprep.subr.mxu0 0.0
    %2025 = vmatpush1.msra.mxu0 %v266
    %2026 = vmatprep.subr.mxu0 0.0
    %2027 = vmatpush1.msra.mxu0 %v267
    %2028 = vmatprep.subr.mxu0 0.0
    %2029 = vmatpush1.msra.mxu0 %v268
    %2030 = vmatprep.subr.mxu0 0.0
    %2031 = vmatpush1.msra.mxu0 0.0
    %2032 = vmatprep.subr.mxu0 0.0
    %2033 = vmatpush1.msra.mxu0 0.0
    %2034 = vmatprep.subr.mxu0 0.0
    %2035 = vmatpush1.msra.mxu0 0.0
    %2036 = vmatprep.subr.mxu0 0.0
    %2037 = vmatpush1.msra.mxu0 0.0
    %2038 = vmatprep.subr.mxu0 0.0
    %2039 = vmatpush1.msra.mxu0 0.0
    %2040 = vmatprep.subr.mxu0 0.0
    %2041 = vmatpush1.msra.mxu0 0.0
    %2042 = vmatprep.subr.mxu0 0.0
    %2043 = vmatpush1.msra.mxu0 0.0
    %2044 = vmatprep.subr.mxu0 0.0
    %2045 = vmatpush1.msra.mxu0 0.0
    %2046 = vmatprep.subr.mxu0 0.0
    %2047 = vmatpush1.msra.mxu0 0.0
    %2048 = vmatprep.subr.mxu0 0.0
    %2049 = vmatpush1.msra.mxu0 0.0
    %2050 = vmatprep.subr.mxu0 0.0
    %2051 = vmatpush1.msra.mxu0 0.0
    %2052 = vmatprep.subr.mxu0 0.0
    %2053 = vmatpush1.msra.mxu0 0.0
    %2054 = vmatprep.subr.mxu0 0.0
    %2055 = vmatpush1.msra.mxu0 0.0
    %2056 = vmatprep.subr.mxu0 0.0
    %2057 = vmatpush1.msra.mxu0 0.0
    %2058 = vmatprep.subr.mxu0 0.0
    %2059 = vmatpush1.msra.mxu0 0.0
    %2060 = vmatprep.subr.mxu0 0.0
    %2061 = vmatpush1.msra.mxu0 0.0
    %2062 = vmatprep.subr.mxu0 0.0
    %2063 = vmatpush1.msra.mxu0 0.0
    %2064 = vmatprep.subr.mxu0 0.0
    %2065 = vmatpush1.msra.mxu0 0.0
    %2066 = vmatprep.subr.mxu0 0.0
    %2067 = vmatpush1.msra.mxu0 0.0
    %2068 = vmatprep.subr.mxu0 0.0
    %2069 = vmatpush1.msra.mxu0 0.0
    %2070 = vmatprep.subr.mxu0 0.0
    %2071 = vmatpush1.msra.mxu0 0.0
    %2072 = vmatprep.subr.mxu0 0.0
    %2073 = vmatpush1.msra.mxu0 0.0
    %2074 = vmatprep.subr.mxu0 0.0
    %2075 = vmatpush1.msra.mxu0 0.0
    %2076 = vmatprep.subr.mxu0 0.0
    %2077 = vmatpush1.msra.mxu0 0.0
    %2078 = vmatprep.subr.mxu0 0.0
    %2079 = vmatpush1.msra.mxu0 0.0
    %2080 = vmatprep.subr.mxu0 0.0
    %2081 = vmatpush1.msra.mxu0 0.0
    %2082 = vmatprep.subr.mxu0 0.0
    %2083 = vmatpush1.msra.mxu0 0.0
    %2084 = vmatprep.subr.mxu0 0.0
    %2085 = vmatpush1.msra.mxu0 0.0
    %2086 = vmatprep.mubr.f32.mxu0 0.0
    %2087 = vmatmul.mubr.f32.gmra.mrb[0].mxu0 %v2020
    %v2088 = vpop.f32.mrb[0].mxu0
    %v2089 = vadd.f32 0.0, %v2088
    %v2090 = vpop.f32.mrb[0].mxu0
    %2091 = vdwg.mxu0
    %v2092 = vadd.f32 %v2016, %v2089
    %v2093 = vxor.u32 %v2092, 2147483648
    %v2094 = vmul.f32 %v2093, 1.442695
    %v2095 = vpow.pop %v2094
    %v2096 = vadd.f32 %v2095, 1.0
    %v2097 = vrcp.pop %v2096
    %v2098 = vmul.f32 1.0, %v2097
    %v2099 = vtanh.pop %v2092
    %v2100 = vmul.f32 %v2098, %v2002
    %2102 = vrot.lane.b32.xlu0 %v2099, 32
    %v2103 = vpop.permute.xlu0 %2102
    %v2105 = vmul.f32 %v2098, %v2103
    %2107 = vrot.lane.b32.xlu0 %v2105, 32
    %v2108 = vpop.permute.xlu0 %2107
    %v2110 = vadd.f32 %v2100, %v2108
    %v2111 = vtanh.pop %v2110
    %2113 = vrot.lane.b32.xlu0 %v2111, 32
    %v2114 = vpop.permute.xlu0 %2113
    %v2116 = vmul.f32 %v2098, %v2114
    %vm2117 = vcmp.eq.s32.totalorder %v269, 7
    %v2118 = vsel %vm2117, 1, 0
    %2119 = vset.pattern.permute.xlu0 0
    %2120 = vperm.xlu0 %2119, %v2118
    %v2121 = vpop.permute.xlu0 %2120
    %vm2122 = vcmp.eq.s32.totalorder %v2121, 1
    %v2123 = vsel %vm2122, %v2116, %v2015
    %v2124 = vld [vmem:[#allocation10] sm:$0xff]
    %v2125 = vld [vmem:[#allocation10 + $0x8] sm:$0xff]
    %v2126 = vld [vmem:[#allocation10 + $0x10] sm:$0xff]
    %v2127 = vld [vmem:[#allocation10 + $0x18] sm:$0xff]
    %v2128 = vld [vmem:[%s9] sm:$0x1]
    %v2130 = vlaneseq
    %v2131 = vshrl.u32 %v2130, 7
    %v2132 = vsub.s32 0, %v2131
    %v2133 = vrot.slane %v2128, %v2132
    %2136 = vrot.lane.b32.xlu0 %v2123, 64
    %v2137 = vpop.permute.xlu0 %2136
    %v2138 = vsel %vm123, %v2137, 0
    %2140 = vmatprep.subr.mxu0 0.0
    %2141 = vmatpush1.msra.mxu0 %v2124
    %2142 = vmatprep.subr.mxu0 0.0
    %2143 = vmatpush1.msra.mxu0 %v2125
    %2144 = vmatprep.subr.mxu0 0.0
    %2145 = vmatpush1.msra.mxu0 %v2126
    %2146 = vmatprep.subr.mxu0 0.0
    %2147 = vmatpush1.msra.mxu0 %v2127
    %2148 = vmatprep.subr.mxu0 0.0
    %2149 = vmatpush1.msra.mxu0 0.0
    %2150 = vmatprep.subr.mxu0 0.0
    %2151 = vmatpush1.msra.mxu0 0.0
    %2152 = vmatprep.subr.mxu0 0.0
    %2153 = vmatpush1.msra.mxu0 0.0
    %2154 = vmatprep.subr.mxu0 0.0
    %2155 = vmatpush1.msra.mxu0 0.0
    %2156 = vmatprep.subr.mxu0 0.0
    %2157 = vmatpush1.msra.mxu0 0.0
    %2158 = vmatprep.subr.mxu0 0.0
    %2159 = vmatpush1.msra.mxu0 0.0
    %2160 = vmatprep.subr.mxu0 0.0
    %2161 = vmatpush1.msra.mxu0 0.0
    %2162 = vmatprep.subr.mxu0 0.0
    %2163 = vmatpush1.msra.mxu0 0.0
    %2164 = vmatprep.subr.mxu0 0.0
    %2165 = vmatpush1.msra.mxu0 0.0
    %2166 = vmatprep.subr.mxu0 0.0
    %2167 = vmatpush1.msra.mxu0 0.0
    %2168 = vmatprep.subr.mxu0 0.0
    %2169 = vmatpush1.msra.mxu0 0.0
    %2170 = vmatprep.subr.mxu0 0.0
    %2171 = vmatpush1.msra.mxu0 0.0
    %2172 = vmatprep.subr.mxu0 0.0
    %2173 = vmatpush1.msra.mxu0 0.0
    %2174 = vmatprep.subr.mxu0 0.0
    %2175 = vmatpush1.msra.mxu0 0.0
    %2176 = vmatprep.subr.mxu0 0.0
    %2177 = vmatpush1.msra.mxu0 0.0
    %2178 = vmatprep.subr.mxu0 0.0
    %2179 = vmatpush1.msra.mxu0 0.0
    %2180 = vmatprep.subr.mxu0 0.0
    %2181 = vmatpush1.msra.mxu0 0.0
    %2182 = vmatprep.subr.mxu0 0.0
    %2183 = vmatpush1.msra.mxu0 0.0
    %2184 = vmatprep.subr.mxu0 0.0
    %2185 = vmatpush1.msra.mxu0 0.0
    %2186 = vmatprep.subr.mxu0 0.0
    %2187 = vmatpush1.msra.mxu0 0.0
    %2188 = vmatprep.subr.mxu0 0.0
    %2189 = vmatpush1.msra.mxu0 0.0
    %2190 = vmatprep.subr.mxu0 0.0
    %2191 = vmatpush1.msra.mxu0 0.0
    %2192 = vmatprep.subr.mxu0 0.0
    %2193 = vmatpush1.msra.mxu0 0.0
    %2194 = vmatprep.subr.mxu0 0.0
    %2195 = vmatpush1.msra.mxu0 0.0
    %2196 = vmatprep.subr.mxu0 0.0
    %2197 = vmatpush1.msra.mxu0 0.0
    %2198 = vmatprep.subr.mxu0 0.0
    %2199 = vmatpush1.msra.mxu0 0.0
    %2200 = vmatprep.subr.mxu0 0.0
    %2201 = vmatpush1.msra.mxu0 0.0
    %2202 = vmatprep.subr.mxu0 0.0
    %2203 = vmatpush1.msra.mxu0 0.0
    %2204 = vmatprep.mubr.f32.mxu0 0.0
    %2205 = vmatmul.mubr.f32.gmra.mrb[0].mxu0 %v2138
    %v2206 = vpop.f32.mrb[0].mxu0
    %v2207 = vadd.f32 %v2133, %v2206
    %v2208 = vpop.f32.mrb[0].mxu0
    %2209 = vdwg.mxu0
    %v2210 = vmax.f32 %v2207, 0.0
    %v2211 = vld [vmem:[%s10] sm:$0xff]
    %v2212 = vld [vmem:[%s10 + $0x8] sm:$0xff]
    %v2213 = vld [vmem:[%s10 + $0x10] sm:$0xff]
    %v2214 = vld [vmem:[%s10 + $0x18] sm:$0xff]
    %v2215 = vld [vmem:[%s10 + $0x20] sm:$0xff]
    %v2216 = vld [vmem:[%s10 + $0x28] sm:$0xff]
    %v2217 = vld [vmem:[%s10 + $0x30] sm:$0xff]
    %v2218 = vld [vmem:[%s10 + $0x38] sm:$0xff]
    %v2219 = vld [vmem:[%s11] sm:$0x1]
    %v2221 = vlaneseq
    %v2222 = vshrl.u32 %v2221, 7
    %v2223 = vsub.s32 0, %v2222
    %v2224 = vrot.slane %v2219, %v2223
    %vm2226 = vcmask 523264
    %v2228 = vsel %vm2226, %v2210, 0
    %2230 = vmatprep.subr.mxu0 0.0
    %2231 = vmatpush1.msra.mxu0 %v2211
    %2232 = vmatprep.subr.mxu0 0.0
    %2233 = vmatpush1.msra.mxu0 %v2212
    %2234 = vmatprep.subr.mxu0 0.0
    %2235 = vmatpush1.msra.mxu0 %v2213
    %2236 = vmatprep.subr.mxu0 0.0
    %2237 = vmatpush1.msra.mxu0 %v2214
    %2238 = vmatprep.subr.mxu0 0.0
    %2239 = vmatpush1.msra.mxu0 %v2215
    %2240 = vmatprep.subr.mxu0 0.0
    %2241 = vmatpush1.msra.mxu0 %v2216
    %2242 = vmatprep.subr.mxu0 0.0
    %2243 = vmatpush1.msra.mxu0 %v2217
    %2244 = vmatprep.subr.mxu0 0.0
    %2245 = vmatpush1.msra.mxu0 %v2218
    %2246 = vmatprep.subr.mxu0 0.0
    %2247 = vmatpush1.msra.mxu0 0.0
    %2248 = vmatprep.subr.mxu0 0.0
    %2249 = vmatpush1.msra.mxu0 0.0
    %2250 = vmatprep.subr.mxu0 0.0
    %2251 = vmatpush1.msra.mxu0 0.0
    %2252 = vmatprep.subr.mxu0 0.0
    %2253 = vmatpush1.msra.mxu0 0.0
    %2254 = vmatprep.subr.mxu0 0.0
    %2255 = vmatpush1.msra.mxu0 0.0
    %2256 = vmatprep.subr.mxu0 0.0
    %2257 = vmatpush1.msra.mxu0 0.0
    %2258 = vmatprep.subr.mxu0 0.0
    %2259 = vmatpush1.msra.mxu0 0.0
    %2260 = vmatprep.subr.mxu0 0.0
    %2261 = vmatpush1.msra.mxu0 0.0
    %2262 = vmatprep.subr.mxu0 0.0
    %2263 = vmatpush1.msra.mxu0 0.0
    %2264 = vmatprep.subr.mxu0 0.0
    %2265 = vmatpush1.msra.mxu0 0.0
    %2266 = vmatprep.subr.mxu0 0.0
    %2267 = vmatpush1.msra.mxu0 0.0
    %2268 = vmatprep.subr.mxu0 0.0
    %2269 = vmatpush1.msra.mxu0 0.0
    %2270 = vmatprep.subr.mxu0 0.0
    %2271 = vmatpush1.msra.mxu0 0.0
    %2272 = vmatprep.subr.mxu0 0.0
    %2273 = vmatpush1.msra.mxu0 0.0
    %2274 = vmatprep.subr.mxu0 0.0
    %2275 = vmatpush1.msra.mxu0 0.0
    %2276 = vmatprep.subr.mxu0 0.0
    %2277 = vmatpush1.msra.mxu0 0.0
    %2278 = vmatprep.subr.mxu0 0.0
    %2279 = vmatpush1.msra.mxu0 0.0
    %2280 = vmatprep.subr.mxu0 0.0
    %2281 = vmatpush1.msra.mxu0 0.0
    %2282 = vmatprep.subr.mxu0 0.0
    %2283 = vmatpush1.msra.mxu0 0.0
    %2284 = vmatprep.subr.mxu0 0.0
    %2285 = vmatpush1.msra.mxu0 0.0
    %2286 = vmatprep.subr.mxu0 0.0
    %2287 = vmatpush1.msra.mxu0 0.0
    %2288 = vmatprep.subr.mxu0 0.0
    %2289 = vmatpush1.msra.mxu0 0.0
    %2290 = vmatprep.subr.mxu0 0.0
    %2291 = vmatpush1.msra.mxu0 0.0
    %2292 = vmatprep.subr.mxu0 0.0
    %2293 = vmatpush1.msra.mxu0 0.0
    %2294 = vmatprep.mubr.f32.mxu0 0.0
    %2295 = vmatmul.mubr.f32.gmra.mrb[0].mxu0 %v2228
    %v2296 = vpop.f32.mrb[0].mxu0
    %v2297 = vadd.f32 %v2224, %v2296
    %v2298 = vpop.f32.mrb[0].mxu0
    %2299 = vdwg.mxu0
    %v2300 = vmax.f32 %v2297, 0.0
    %v2301 = vld [vmem:[%s12] sm:$0x1]
    %v2303 = vlaneseq
    %v2304 = vshrl.u32 %v2303, 7
    %v2305 = vsub.s32 0, %v2304
    %v2306 = vrot.slane %v2301, %v2305
    %v2308 = vmul.f32 %v2300, %v2306
    %v2309 = vsel %vm123, %v2308, 0.0
    %2310 = vadd.xlane.f32.xlu0 %v2309
    %v2311 = vpop.xlane.xlu0 %2310
    %v2312 = vld [vmem:[#allocation4] sm:$0x1]
    %v2314 = vlaneseq
    %v2315 = vshrl.u32 %v2314, 7
    %v2316 = vsub.s32 0, %v2315
    %v2317 = vrot.slane %v2312, %v2316
    %v2319 = vadd.f32 %v2311, %v2317
    %vm2320 = vcmask 7168
    %2321 = vst.msk [vmem:[%s14] sm:$0xff] %vm2320, %v2319
    // Predicated region
    $region74: #{tpu_custom_call.1} parent=1 // pred_check
      _
    $region75: #{tpu_custom_call.1} parent=1 // pred_check_branch
      %2323 = sbr.rel (0) target = $region77
    $region76: #{tpu_custom_call.1} parent=1 // pred_region
      _
    $region77: #{tpu_custom_call.1} parent=1 // pred_fallthru
      _
    // Predicated region
    $region78: #{tpu_custom_call.1} parent=1 // pred_check
      _
    $region79: #{tpu_custom_call.1} parent=1 // pred_check_branch
      %2325 = sbr.rel (0) target = $region81
    $region80: #{tpu_custom_call.1} parent=1 // pred_region
      _
    $region81: #{tpu_custom_call.1} parent=1 // pred_fallthru
      _
    %2326 = vsyncpa [#allocation6], 1
    %2327 = vsyncpa [#allocation8], 1
    %2328 = vsyncpa [#allocation11], 1

</llo_original>
